<compile_context>
chip_gen: v6e
topology: v6e:2x2x1
jax: 0.10.0
libtpu: 0.0.40
codegen_flags: <defaults>
</compile_context>

<pallas_src>
import jax
import jax.numpy as jnp
from jax.experimental import pallas as pl
from jax.experimental.pallas import tpu as pltpu

KSIZE = 5  # conv kernel size for both layers


def _fused_convnet_kernel(x_ref, w1_ref, b1_ref, w2_ref, b2_ref, o_ref):
    """conv1(3->6,k5)+ReLU and conv2(6->16,k5)+ReLU fused, one image per call.

    x_ref : (W, Hpad, C1) = (16, 20, 3)   image in W-major layout, x_ref[w, h, c]
                                          (H zero-padded 16 -> 20 so reshapes are no-ops)
    w1_ref: (K*K*C1, C2)  = (75, 6)       conv1 weights, rows ordered (kh, kw, cin)
    b1_ref: (1, C2)
    w2_ref: (K*K*C2, C3)  = (150, 16)
    b2_ref: (1, C3)
    o_ref : (OH2, OW2*C3) = (8, 128)      o[i, j*C3 + c] = y[c, i, j]  (lane-dense)
    """
    Wdim, Hpad, c_in = x_ref.shape
    _, c_mid = w1_ref.shape
    _, c_out = w2_ref.shape
    OW1 = Wdim - KSIZE + 1          # 12
    H1 = Hpad - KSIZE + 1           # 16 (rows >= 12 are padding garbage, never used)
    OH2 = o_ref.shape[0]            # 8
    OW2 = o_ref.shape[1] // c_out   # 8

    x = x_ref[...]                                              # (16, 20, 3)

    # ---- layer 1: im2col -> single K=75 matmul ------------------------------
    taps1 = [x[kw:kw + OW1, kh:kh + H1, :]                      # 25 x (12, 16, 3)
             for kh in range(KSIZE) for kw in range(KSIZE)]
    p1 = jnp.concatenate(taps1, axis=-1)                        # (12, 16, 75)
    p1 = p1.reshape(OW1 * H1, KSIZE * KSIZE * c_in)             # (192, 75)  layout no-op
    z = jnp.dot(p1, w1_ref[...], preferred_element_type=jnp.float32)  # (192, 6)
    z = jnp.maximum(z + b1_ref[...], 0.0)
    z = z.reshape(OW1, H1, c_mid)                               # (12, 16, 6) layout no-op

    # ---- layer 2: im2col -> single K=150 matmul ------------------------------
    taps2 = [z[kw:kw + OW2, kh:kh + OH2, :]                     # 25 x (8, 8, 6)
             for kh in range(KSIZE) for kw in range(KSIZE)]
    p2 = jnp.concatenate(taps2, axis=-1)                        # (8, 8, 150)
    p2 = p2.reshape(OW2 * OH2, KSIZE * KSIZE * c_mid)           # (64, 150)  layout no-op
    y = jnp.dot(p2, w2_ref[...], preferred_element_type=jnp.float32)  # (64, 16)
    y = jnp.maximum(y + b2_ref[...], 0.0)

    # ---- lane-dense store: (8, 8*16) = one full, unmasked (8,128) block ------
    pieces = [y[a * OH2:(a + 1) * OH2, :] for a in range(OW2)]  # 8 x (8, 16)
    o_ref[...] = jnp.concatenate(pieces, axis=-1).astype(o_ref.dtype)   # (8, 128)


def _neuralnet_forward_impl(x_nchw, params):
    """Equivalent of NeuralNet.forward: relu(conv2(relu(conv1(x)))), NCHW -> NCHW."""
    w1, b1, w2, b2 = params                          # w1: (5,5,3,6) HWIO, w2: (5,5,6,16)
    N, c_in, H, W = x_nchw.shape
    c_mid, c_out = w1.shape[-1], w2.shape[-1]
    OH1, OW1 = H - KSIZE + 1, W - KSIZE + 1          # 12, 12
    OH2, OW2 = OH1 - KSIZE + 1, OW1 - KSIZE + 1      # 8, 8

    # Kernel-side layouts (all cheap XLA-level transposes/reshapes on tiny data):
    # image as (W, Hpad, Cin) with H zero-padded so in-kernel reshapes are no-ops;
    # weights flattened once to im2col form (K*K*Cin, Cout).
    H1 = ((OH1 + 7) // 8) * 8                        # 16
    Hpad = H1 + KSIZE - 1                            # 20
    x_whc = jnp.transpose(x_nchw, (0, 3, 2, 1))      # (N, W, H, Cin)
    x_whc = jnp.pad(x_whc, ((0, 0), (0, 0), (0, Hpad - H), (0, 0)))

    w1f = w1.reshape(KSIZE * KSIZE * c_in, c_mid)    # (75, 6)
    w2f = w2.reshape(KSIZE * KSIZE * c_mid, c_out)   # (150, 16)
    b1r = b1.reshape(1, c_mid)
    b2r = b2.reshape(1, c_out)

    out = pl.pallas_call(
        _fused_convnet_kernel,
        out_shape=jax.ShapeDtypeStruct((N, OH2, OW2 * c_out), jnp.float32),
        grid_spec=pltpu.PrefetchScalarGridSpec(
            num_scalar_prefetch=0,
            grid=(N,),                               # 1 image/step; "parallel" lets the
            in_specs=[                               # two v7x TensorCores split the batch
                pl.BlockSpec((None, W, Hpad, c_in), lambda n: (n, 0, 0, 0)),
                pl.BlockSpec((KSIZE * KSIZE * c_in, c_mid), lambda n: (0, 0)),
                pl.BlockSpec((1, c_mid), lambda n: (0, 0)),
                pl.BlockSpec((KSIZE * KSIZE * c_mid, c_out), lambda n: (0, 0)),
                pl.BlockSpec((1, c_out), lambda n: (0, 0)),
            ],
            out_specs=pl.BlockSpec((None, OH2, OW2 * c_out), lambda n: (n, 0, 0)),
        ),
        compiler_params=pltpu.CompilerParams(
            dimension_semantics=("parallel",)),
    )(x_whc, w1f, b1r, w2f, b2r)

    # (N, OH2, OW2*Cout) -> (N, OH2, OW2, Cout) -> NCHW
    y = out.reshape(N, OH2, OW2, c_out)
    return jnp.transpose(y, (0, 3, 1, 2))


neuralnet_forward = jax.jit(_neuralnet_forward_impl)


def init_params(key):
    """Deterministic init matching nn.Conv2d(3,6,5) / nn.Conv2d(6,16,5), stored HWIO."""
    k1, k2, k3, k4 = jax.random.split(key, 4)
    fan1 = 3 * 5 * 5
    fan2 = 6 * 5 * 5
    w1 = jax.random.uniform(k1, (5, 5, 3, 6), jnp.float32,
                            -1.0 / jnp.sqrt(fan1), 1.0 / jnp.sqrt(fan1))
    b1 = jax.random.uniform(k2, (6,), jnp.float32,
                            -1.0 / jnp.sqrt(fan1), 1.0 / jnp.sqrt(fan1))
    w2 = jax.random.uniform(k3, (5, 5, 6, 16), jnp.float32,
                            -1.0 / jnp.sqrt(fan2), 1.0 / jnp.sqrt(fan2))
    b2 = jax.random.uniform(k4, (16,), jnp.float32,
                            -1.0 / jnp.sqrt(fan2), 1.0 / jnp.sqrt(fan2))
    return (w1, b1, w2, b2)


def _reference_forward(x_nchw, params):
    """Pure-JAX reference (lax conv) for correctness checking."""
    w1, b1, w2, b2 = params
    dn1 = jax.lax.conv_dimension_numbers(x_nchw.shape, w1.shape,
                                         ("NCHW", "HWIO", "NCHW"))
    z = jax.lax.conv_general_dilated(x_nchw, w1, (1, 1), "VALID",
                                     dimension_numbers=dn1)
    z = jnp.maximum(z + b1.reshape(1, -1, 1, 1), 0.0)
    dn2 = jax.lax.conv_dimension_numbers(z.shape, w2.shape,
                                         ("NCHW", "HWIO", "NCHW"))
    y = jax.lax.conv_general_dilated(z, w2, (1, 1), "VALID",
                                     dimension_numbers=dn2)
    return jnp.maximum(y + b2.reshape(1, -1, 1, 1), 0.0)


if __name__ == "__main__":
    key = jax.random.PRNGKey(0)
    kx, kp = jax.random.split(key)

    # Small NCHW input consistent with conv1 expecting 3 input channels.
    x = jax.random.normal(kx, (2, 3, 16, 16), dtype=jnp.float32)
    params = init_params(kp)

    out = jax.block_until_ready(neuralnet_forward(x, params))
    assert out.shape == (2, 16, 8, 8), out.shape

    ref = _reference_forward(x, params)
    assert jnp.allclose(out, ref, atol=1e-4, rtol=1e-4), \
        float(jnp.max(jnp.abs(out - ref)))

    print("KERNEL_OK")
</pallas_src>

<mosaic_0001>
module attributes {stable_mosaic.version = 11 : i64} {
  func.func @_fused_convnet_kernel(%arg0: i32, %arg1: memref<1x16x20x3xf32, #tpu.memory_space<vmem>>, %arg2: memref<75x6xf32, #tpu.memory_space<vmem>>, %arg3: memref<1x6xf32, #tpu.memory_space<vmem>>, %arg4: memref<150x16xf32, #tpu.memory_space<vmem>>, %arg5: memref<1x16xf32, #tpu.memory_space<vmem>>, %arg6: memref<1x8x128xf32, #tpu.memory_space<vmem>>) attributes {dimension_semantics = [#tpu.dimension_semantics<parallel>], iteration_bounds = array<i64: 2>, scalar_prefetch = 0 : i64, scratch_operands = 0 : i64, tpu.core_type = #tpu.core_type<tc>, window_params = [{transform_indices = @transform_0, window_bounds = array<i64: 1, 16, 20, 3>}, {pipeline_mode = #tpu.pipeline_mode<synchronous>, transform_indices = @transform_1, window_bounds = array<i64: 75, 6>}, {pipeline_mode = #tpu.pipeline_mode<synchronous>, transform_indices = @transform_2, window_bounds = array<i64: 1, 6>}, {pipeline_mode = #tpu.pipeline_mode<synchronous>, transform_indices = @transform_3, window_bounds = array<i64: 150, 16>}, {pipeline_mode = #tpu.pipeline_mode<synchronous>, transform_indices = @transform_4, window_bounds = array<i64: 1, 16>}, {transform_indices = @transform_5, window_bounds = array<i64: 1, 8, 128>}]} {
    %c0 = arith.constant 0 : index
    %c0_0 = arith.constant 0 : index
    %c0_1 = arith.constant 0 : index
    %c0_2 = arith.constant 0 : index
    %0 = vector.load %arg1[%c0, %c0_0, %c0_1, %c0_2] : memref<1x16x20x3xf32, #tpu.memory_space<vmem>>, vector<1x16x20x3xf32>
    %1 = vector.shape_cast %0 : vector<1x16x20x3xf32> to vector<16x20x3xf32>
    %2 = vector.extract_strided_slice %1 {offsets = [0, 0, 0], sizes = [12, 16, 3], strides = [1, 1, 1]} : vector<16x20x3xf32> to vector<12x16x3xf32>
    %3 = vector.extract_strided_slice %1 {offsets = [1, 0, 0], sizes = [12, 16, 3], strides = [1, 1, 1]} : vector<16x20x3xf32> to vector<12x16x3xf32>
    %4 = vector.extract_strided_slice %1 {offsets = [2, 0, 0], sizes = [12, 16, 3], strides = [1, 1, 1]} : vector<16x20x3xf32> to vector<12x16x3xf32>
    %5 = vector.extract_strided_slice %1 {offsets = [3, 0, 0], sizes = [12, 16, 3], strides = [1, 1, 1]} : vector<16x20x3xf32> to vector<12x16x3xf32>
    %6 = vector.extract_strided_slice %1 {offsets = [4, 0, 0], sizes = [12, 16, 3], strides = [1, 1, 1]} : vector<16x20x3xf32> to vector<12x16x3xf32>
    %7 = vector.extract_strided_slice %1 {offsets = [0, 1, 0], sizes = [12, 16, 3], strides = [1, 1, 1]} : vector<16x20x3xf32> to vector<12x16x3xf32>
    %8 = vector.extract_strided_slice %1 {offsets = [1, 1, 0], sizes = [12, 16, 3], strides = [1, 1, 1]} : vector<16x20x3xf32> to vector<12x16x3xf32>
    %9 = vector.extract_strided_slice %1 {offsets = [2, 1, 0], sizes = [12, 16, 3], strides = [1, 1, 1]} : vector<16x20x3xf32> to vector<12x16x3xf32>
    %10 = vector.extract_strided_slice %1 {offsets = [3, 1, 0], sizes = [12, 16, 3], strides = [1, 1, 1]} : vector<16x20x3xf32> to vector<12x16x3xf32>
    %11 = vector.extract_strided_slice %1 {offsets = [4, 1, 0], sizes = [12, 16, 3], strides = [1, 1, 1]} : vector<16x20x3xf32> to vector<12x16x3xf32>
    %12 = vector.extract_strided_slice %1 {offsets = [0, 2, 0], sizes = [12, 16, 3], strides = [1, 1, 1]} : vector<16x20x3xf32> to vector<12x16x3xf32>
    %13 = vector.extract_strided_slice %1 {offsets = [1, 2, 0], sizes = [12, 16, 3], strides = [1, 1, 1]} : vector<16x20x3xf32> to vector<12x16x3xf32>
    %14 = vector.extract_strided_slice %1 {offsets = [2, 2, 0], sizes = [12, 16, 3], strides = [1, 1, 1]} : vector<16x20x3xf32> to vector<12x16x3xf32>
    %15 = vector.extract_strided_slice %1 {offsets = [3, 2, 0], sizes = [12, 16, 3], strides = [1, 1, 1]} : vector<16x20x3xf32> to vector<12x16x3xf32>
    %16 = vector.extract_strided_slice %1 {offsets = [4, 2, 0], sizes = [12, 16, 3], strides = [1, 1, 1]} : vector<16x20x3xf32> to vector<12x16x3xf32>
    %17 = vector.extract_strided_slice %1 {offsets = [0, 3, 0], sizes = [12, 16, 3], strides = [1, 1, 1]} : vector<16x20x3xf32> to vector<12x16x3xf32>
    %18 = vector.extract_strided_slice %1 {offsets = [1, 3, 0], sizes = [12, 16, 3], strides = [1, 1, 1]} : vector<16x20x3xf32> to vector<12x16x3xf32>
    %19 = vector.extract_strided_slice %1 {offsets = [2, 3, 0], sizes = [12, 16, 3], strides = [1, 1, 1]} : vector<16x20x3xf32> to vector<12x16x3xf32>
    %20 = vector.extract_strided_slice %1 {offsets = [3, 3, 0], sizes = [12, 16, 3], strides = [1, 1, 1]} : vector<16x20x3xf32> to vector<12x16x3xf32>
    %21 = vector.extract_strided_slice %1 {offsets = [4, 3, 0], sizes = [12, 16, 3], strides = [1, 1, 1]} : vector<16x20x3xf32> to vector<12x16x3xf32>
    %22 = vector.extract_strided_slice %1 {offsets = [0, 4, 0], sizes = [12, 16, 3], strides = [1, 1, 1]} : vector<16x20x3xf32> to vector<12x16x3xf32>
    %23 = vector.extract_strided_slice %1 {offsets = [1, 4, 0], sizes = [12, 16, 3], strides = [1, 1, 1]} : vector<16x20x3xf32> to vector<12x16x3xf32>
    %24 = vector.extract_strided_slice %1 {offsets = [2, 4, 0], sizes = [12, 16, 3], strides = [1, 1, 1]} : vector<16x20x3xf32> to vector<12x16x3xf32>
    %25 = vector.extract_strided_slice %1 {offsets = [3, 4, 0], sizes = [12, 16, 3], strides = [1, 1, 1]} : vector<16x20x3xf32> to vector<12x16x3xf32>
    %26 = vector.extract_strided_slice %1 {offsets = [4, 4, 0], sizes = [12, 16, 3], strides = [1, 1, 1]} : vector<16x20x3xf32> to vector<12x16x3xf32>
    %27 = tpu.concatenate %2, %3, %4, %5, %6, %7, %8, %9, %10, %11, %12, %13, %14, %15, %16, %17 in 2 : vector<12x16x3xf32>, vector<12x16x3xf32>, vector<12x16x3xf32>, vector<12x16x3xf32>, vector<12x16x3xf32>, vector<12x16x3xf32>, vector<12x16x3xf32>, vector<12x16x3xf32>, vector<12x16x3xf32>, vector<12x16x3xf32>, vector<12x16x3xf32>, vector<12x16x3xf32>, vector<12x16x3xf32>, vector<12x16x3xf32>, vector<12x16x3xf32>, vector<12x16x3xf32> -> vector<12x16x48xf32>
    %28 = tpu.concatenate %18, %19, %20, %21, %22, %23, %24, %25, %26 in 2 : vector<12x16x3xf32>, vector<12x16x3xf32>, vector<12x16x3xf32>, vector<12x16x3xf32>, vector<12x16x3xf32>, vector<12x16x3xf32>, vector<12x16x3xf32>, vector<12x16x3xf32>, vector<12x16x3xf32> -> vector<12x16x27xf32>
    %29 = tpu.concatenate %27, %28 in 2 : vector<12x16x48xf32>, vector<12x16x27xf32> -> vector<12x16x75xf32>
    %30 = vector.shape_cast %29 : vector<12x16x75xf32> to vector<192x75xf32>
    %c0_3 = arith.constant 0 : index
    %c0_4 = arith.constant 0 : index
    %31 = vector.load %arg2[%c0_3, %c0_4] : memref<75x6xf32, #tpu.memory_space<vmem>>, vector<75x6xf32>
    %cst = arith.constant dense<0.000000e+00> : vector<192x6xf32>
    %32 = tpu.matmul %30, %31, %cst {dimension_numbers = #tpu.dot_dimension_numbers<[1], [0], [0], [1], [0, 0, 1, 1], [], []>} : vector<192x75xf32>, vector<75x6xf32>, vector<192x6xf32> -> vector<192x6xf32>
    %c0_5 = arith.constant 0 : index
    %c0_6 = arith.constant 0 : index
    %33 = vector.load %arg3[%c0_5, %c0_6] : memref<1x6xf32, #tpu.memory_space<vmem>>, vector<1x6xf32>
    %34 = vector.broadcast %33 : vector<1x6xf32> to vector<192x6xf32>
    %35 = arith.addf %32, %34 : vector<192x6xf32>
    %cst_7 = arith.constant 0.000000e+00 : f32
    %36 = vector.broadcast %cst_7 : f32 to vector<192x6xf32>
    %37 = arith.maximumf %35, %36 : vector<192x6xf32>
    %38 = vector.shape_cast %37 : vector<192x6xf32> to vector<12x16x6xf32>
    %39 = vector.extract_strided_slice %38 {offsets = [0, 0, 0], sizes = [8, 8, 6], strides = [1, 1, 1]} : vector<12x16x6xf32> to vector<8x8x6xf32>
    %40 = vector.extract_strided_slice %38 {offsets = [1, 0, 0], sizes = [8, 8, 6], strides = [1, 1, 1]} : vector<12x16x6xf32> to vector<8x8x6xf32>
    %41 = vector.extract_strided_slice %38 {offsets = [2, 0, 0], sizes = [8, 8, 6], strides = [1, 1, 1]} : vector<12x16x6xf32> to vector<8x8x6xf32>
    %42 = vector.extract_strided_slice %38 {offsets = [3, 0, 0], sizes = [8, 8, 6], strides = [1, 1, 1]} : vector<12x16x6xf32> to vector<8x8x6xf32>
    %43 = vector.extract_strided_slice %38 {offsets = [4, 0, 0], sizes = [8, 8, 6], strides = [1, 1, 1]} : vector<12x16x6xf32> to vector<8x8x6xf32>
    %44 = vector.extract_strided_slice %38 {offsets = [0, 1, 0], sizes = [8, 8, 6], strides = [1, 1, 1]} : vector<12x16x6xf32> to vector<8x8x6xf32>
    %45 = vector.extract_strided_slice %38 {offsets = [1, 1, 0], sizes = [8, 8, 6], strides = [1, 1, 1]} : vector<12x16x6xf32> to vector<8x8x6xf32>
    %46 = vector.extract_strided_slice %38 {offsets = [2, 1, 0], sizes = [8, 8, 6], strides = [1, 1, 1]} : vector<12x16x6xf32> to vector<8x8x6xf32>
    %47 = vector.extract_strided_slice %38 {offsets = [3, 1, 0], sizes = [8, 8, 6], strides = [1, 1, 1]} : vector<12x16x6xf32> to vector<8x8x6xf32>
    %48 = vector.extract_strided_slice %38 {offsets = [4, 1, 0], sizes = [8, 8, 6], strides = [1, 1, 1]} : vector<12x16x6xf32> to vector<8x8x6xf32>
    %49 = vector.extract_strided_slice %38 {offsets = [0, 2, 0], sizes = [8, 8, 6], strides = [1, 1, 1]} : vector<12x16x6xf32> to vector<8x8x6xf32>
    %50 = vector.extract_strided_slice %38 {offsets = [1, 2, 0], sizes = [8, 8, 6], strides = [1, 1, 1]} : vector<12x16x6xf32> to vector<8x8x6xf32>
    %51 = vector.extract_strided_slice %38 {offsets = [2, 2, 0], sizes = [8, 8, 6], strides = [1, 1, 1]} : vector<12x16x6xf32> to vector<8x8x6xf32>
    %52 = vector.extract_strided_slice %38 {offsets = [3, 2, 0], sizes = [8, 8, 6], strides = [1, 1, 1]} : vector<12x16x6xf32> to vector<8x8x6xf32>
    %53 = vector.extract_strided_slice %38 {offsets = [4, 2, 0], sizes = [8, 8, 6], strides = [1, 1, 1]} : vector<12x16x6xf32> to vector<8x8x6xf32>
    %54 = vector.extract_strided_slice %38 {offsets = [0, 3, 0], sizes = [8, 8, 6], strides = [1, 1, 1]} : vector<12x16x6xf32> to vector<8x8x6xf32>
    %55 = vector.extract_strided_slice %38 {offsets = [1, 3, 0], sizes = [8, 8, 6], strides = [1, 1, 1]} : vector<12x16x6xf32> to vector<8x8x6xf32>
    %56 = vector.extract_strided_slice %38 {offsets = [2, 3, 0], sizes = [8, 8, 6], strides = [1, 1, 1]} : vector<12x16x6xf32> to vector<8x8x6xf32>
    %57 = vector.extract_strided_slice %38 {offsets = [3, 3, 0], sizes = [8, 8, 6], strides = [1, 1, 1]} : vector<12x16x6xf32> to vector<8x8x6xf32>
    %58 = vector.extract_strided_slice %38 {offsets = [4, 3, 0], sizes = [8, 8, 6], strides = [1, 1, 1]} : vector<12x16x6xf32> to vector<8x8x6xf32>
    %59 = vector.extract_strided_slice %38 {offsets = [0, 4, 0], sizes = [8, 8, 6], strides = [1, 1, 1]} : vector<12x16x6xf32> to vector<8x8x6xf32>
    %60 = vector.extract_strided_slice %38 {offsets = [1, 4, 0], sizes = [8, 8, 6], strides = [1, 1, 1]} : vector<12x16x6xf32> to vector<8x8x6xf32>
    %61 = vector.extract_strided_slice %38 {offsets = [2, 4, 0], sizes = [8, 8, 6], strides = [1, 1, 1]} : vector<12x16x6xf32> to vector<8x8x6xf32>
    %62 = vector.extract_strided_slice %38 {offsets = [3, 4, 0], sizes = [8, 8, 6], strides = [1, 1, 1]} : vector<12x16x6xf32> to vector<8x8x6xf32>
    %63 = vector.extract_strided_slice %38 {offsets = [4, 4, 0], sizes = [8, 8, 6], strides = [1, 1, 1]} : vector<12x16x6xf32> to vector<8x8x6xf32>
    %64 = tpu.concatenate %39, %40, %41, %42, %43, %44, %45, %46, %47, %48, %49, %50, %51, %52, %53, %54 in 2 : vector<8x8x6xf32>, vector<8x8x6xf32>, vector<8x8x6xf32>, vector<8x8x6xf32>, vector<8x8x6xf32>, vector<8x8x6xf32>, vector<8x8x6xf32>, vector<8x8x6xf32>, vector<8x8x6xf32>, vector<8x8x6xf32>, vector<8x8x6xf32>, vector<8x8x6xf32>, vector<8x8x6xf32>, vector<8x8x6xf32>, vector<8x8x6xf32>, vector<8x8x6xf32> -> vector<8x8x96xf32>
    %65 = tpu.concatenate %55, %56, %57, %58, %59, %60, %61, %62, %63 in 2 : vector<8x8x6xf32>, vector<8x8x6xf32>, vector<8x8x6xf32>, vector<8x8x6xf32>, vector<8x8x6xf32>, vector<8x8x6xf32>, vector<8x8x6xf32>, vector<8x8x6xf32>, vector<8x8x6xf32> -> vector<8x8x54xf32>
    %66 = tpu.concatenate %64, %65 in 2 : vector<8x8x96xf32>, vector<8x8x54xf32> -> vector<8x8x150xf32>
    %67 = vector.shape_cast %66 : vector<8x8x150xf32> to vector<64x150xf32>
    %c0_8 = arith.constant 0 : index
    %c0_9 = arith.constant 0 : index
    %68 = vector.load %arg4[%c0_8, %c0_9] : memref<150x16xf32, #tpu.memory_space<vmem>>, vector<150x16xf32>
    %cst_10 = arith.constant dense<0.000000e+00> : vector<64x16xf32>
    %69 = tpu.matmul %67, %68, %cst_10 {dimension_numbers = #tpu.dot_dimension_numbers<[1], [0], [0], [1], [0, 0, 1, 1], [], []>} : vector<64x150xf32>, vector<150x16xf32>, vector<64x16xf32> -> vector<64x16xf32>
    %c0_11 = arith.constant 0 : index
    %c0_12 = arith.constant 0 : index
    %70 = vector.load %arg5[%c0_11, %c0_12] : memref<1x16xf32, #tpu.memory_space<vmem>>, vector<1x16xf32>
    %71 = vector.broadcast %70 : vector<1x16xf32> to vector<64x16xf32>
    %72 = arith.addf %69, %71 : vector<64x16xf32>
    %cst_13 = arith.constant 0.000000e+00 : f32
    %73 = vector.broadcast %cst_13 : f32 to vector<64x16xf32>
    %74 = arith.maximumf %72, %73 : vector<64x16xf32>
    %75 = vector.extract_strided_slice %74 {offsets = [0, 0], sizes = [8, 16], strides = [1, 1]} : vector<64x16xf32> to vector<8x16xf32>
    %76 = vector.extract_strided_slice %74 {offsets = [8, 0], sizes = [8, 16], strides = [1, 1]} : vector<64x16xf32> to vector<8x16xf32>
    %77 = vector.extract_strided_slice %74 {offsets = [16, 0], sizes = [8, 16], strides = [1, 1]} : vector<64x16xf32> to vector<8x16xf32>
    %78 = vector.extract_strided_slice %74 {offsets = [24, 0], sizes = [8, 16], strides = [1, 1]} : vector<64x16xf32> to vector<8x16xf32>
    %79 = vector.extract_strided_slice %74 {offsets = [32, 0], sizes = [8, 16], strides = [1, 1]} : vector<64x16xf32> to vector<8x16xf32>
    %80 = vector.extract_strided_slice %74 {offsets = [40, 0], sizes = [8, 16], strides = [1, 1]} : vector<64x16xf32> to vector<8x16xf32>
    %81 = vector.extract_strided_slice %74 {offsets = [48, 0], sizes = [8, 16], strides = [1, 1]} : vector<64x16xf32> to vector<8x16xf32>
    %82 = vector.extract_strided_slice %74 {offsets = [56, 0], sizes = [8, 16], strides = [1, 1]} : vector<64x16xf32> to vector<8x16xf32>
    %83 = tpu.concatenate %75, %76, %77, %78, %79, %80, %81, %82 in 1 : vector<8x16xf32>, vector<8x16xf32>, vector<8x16xf32>, vector<8x16xf32>, vector<8x16xf32>, vector<8x16xf32>, vector<8x16xf32>, vector<8x16xf32> -> vector<8x128xf32>
    %c0_14 = arith.constant 0 : index
    %c0_15 = arith.constant 0 : index
    %c0_16 = arith.constant 0 : index
    %84 = vector.load %arg6[%c0_14, %c0_15, %c0_16] : memref<1x8x128xf32, #tpu.memory_space<vmem>>, vector<1x8x128xf32>
    %85 = vector.shape_cast %84 : vector<1x8x128xf32> to vector<8x128xf32>
    %86 = vector.shape_cast %83 : vector<8x128xf32> to vector<1x8x128xf32>
    tpu.vector_store %arg6[%c0_14, %c0_15, %c0_16], %86 {strides = array<i32>} : memref<1x8x128xf32, #tpu.memory_space<vmem>>, vector<1x8x128xf32>,
    return
  }
  func.func @transform_0(%arg0: i32) -> (i32, i32, i32, i32) {
    %c0_i32 = arith.constant 0 : i32
    %c0_i32_0 = arith.constant 0 : i32
    %c0_i32_1 = arith.constant 0 : i32
    %c0_i32_2 = arith.constant 0 : i32
    return %arg0, %c0_i32, %c0_i32_0, %c0_i32_1 : i32, i32, i32, i32
  }
  func.func @transform_1(%arg0: i32) -> (i32, i32) {
    %c0_i32 = arith.constant 0 : i32
    %c0_i32_0 = arith.constant 0 : i32
    %c0_i32_1 = arith.constant 0 : i32
    return %c0_i32, %c0_i32_0 : i32, i32
  }
  func.func @transform_2(%arg0: i32) -> (i32, i32) {
    %c0_i32 = arith.constant 0 : i32
    %c0_i32_0 = arith.constant 0 : i32
    %c0_i32_1 = arith.constant 0 : i32
    return %c0_i32, %c0_i32_0 : i32, i32
  }
  func.func @transform_3(%arg0: i32) -> (i32, i32) {
    %c0_i32 = arith.constant 0 : i32
    %c0_i32_0 = arith.constant 0 : i32
    %c0_i32_1 = arith.constant 0 : i32
    return %c0_i32, %c0_i32_0 : i32, i32
  }
  func.func @transform_4(%arg0: i32) -> (i32, i32) {
    %c0_i32 = arith.constant 0 : i32
    %c0_i32_0 = arith.constant 0 : i32
    %c0_i32_1 = arith.constant 0 : i32
    return %c0_i32, %c0_i32_0 : i32, i32
  }
  func.func @transform_5(%arg0: i32) -> (i32, i32, i32) {
    %c0_i32 = arith.constant 0 : i32
    %c0_i32_0 = arith.constant 0 : i32
    %c0_i32_1 = arith.constant 0 : i32
    return %arg0, %c0_i32, %c0_i32_0 : i32, i32, i32
  }
}

</mosaic_0001>

<llo_original>
// kernel: _neuralnet_forward_impl.1
$region0: #{_neuralnet_forward_impl.1}
  #allocation0 [shape = 'u32[]', space=smem, size = 0x4, offset = 0x4, fixed_abs, tag = 'smem constant byte address 0x4 - core index']
  #allocation1 [shape = 'u32[144,128]{1,0:T(1,128)}', space=vmem, size = 0x12000, scoped, tag = 'internal scratch']
  %s0 = inlined_call_operand.vmem [shape: f32[2,16,20,3], index: 0, kind: input, shape index: {}]
  %s1 = inlined_call_operand.vmem [shape: f32[75,6], index: 1, kind: input, shape index: {}]
  %s2 = inlined_call_operand.vmem [shape: f32[1,6], index: 2, kind: input, shape index: {}]
  %s3 = inlined_call_operand.vmem [shape: f32[150,16], index: 3, kind: input, shape index: {}]
  %s4 = inlined_call_operand.vmem [shape: f32[1,16], index: 4, kind: input, shape index: {}]
  %s5 = inlined_call_operand.vmem [shape: f32[2,8,128], index: 5, kind: output, shape index: {}]
  %s6 = sld [smem:[#allocation0]]
  $region53: #{_neuralnet_forward_impl.1} parent=0
    _
  %s8 = ssub.s32 1, %s6
  %s9 = scalar_select 0, %s8, %s6
  loop: start=0, step=1, limit=4
  $region2: #{_neuralnet_forward_impl.1} parent=0 // loop_pre_header
    _
  $region3: #{_neuralnet_forward_impl.1} parent=0 // loop_header
    %s11 = sphi 0, %s15
    %p12 = scmp.ge.s32.totalorder %s11, 4
    %s21 = sphi 0, %s23
    %s24 = sphi 0, %s21
    %s25 = sphi 0, %s24
    %s41 = sphi 0, %s25
    %s45 = sphi 0, %s45
    %s47 = sphi 0, %s45
    %s48 = sphi 0, %s47
    %s62 = sphi 0, %s48
    %s66 = sphi 0, %s66
    %s68 = sphi 0, %s66
    %s69 = sphi 0, %s68
    %s83 = sphi 0, %s69
    %s87 = sphi 0, %s87
    %s89 = sphi 0, %s87
    %s90 = sphi 0, %s89
    %s104 = sphi 0, %s90
    %s108 = sphi 0, %s108
    %s110 = sphi 0, %s108
    %s111 = sphi 0, %s110
    %s125 = sphi 0, %s111
    %s131 = sphi 0, %s133
    %s134 = sphi 0, %s131
    %s135 = sphi 0, %s134
    %s151 = sphi 0, %s135
  $region4: #{_neuralnet_forward_impl.1} parent=0 // loop_header_branch
    %14 = sbr.rel (%p12) target = $region8
  $region5: #{_neuralnet_forward_impl.1} parent=0 // loop_body
    %s16 = ssub.s32 %s11, 1
    %s17 = ssub.s32 %s11, 2
    %s18 = sadd.s32 %s11, 1
    %s19 = ssub.s32 %s11, %s18
    %p20 = scmp.eq.s32.totalorder %s19, 0
    %s22 = sadd.s32 %s21, 1
    %s23 = scalar_select %p20, %s21, %s22
    %p26 = pneg %p20
    %p27 = scmp.eq.s32.totalorder %s11, 1
    %p28 = por %p26, %p27
    %p29 = scmp.ne.s32.totalorder %s21, %s24
    %p30 = scmp.eq.s32.totalorder %s11, 0
    %p31 = por %p29, %p30
    %p32 = scmp.ne.s32.totalorder %s21, %s24
    %p33 = scmp.eq.s32.totalorder %s16, 1
    %p34 = por %p32, %p33
    %p35 = scmp.ne.s32.totalorder %s24, %s25
    %p36 = scmp.eq.s32.totalorder %s16, 0
    %p37 = por %p35, %p36
    %p38 = scmp.ne.s32.totalorder %s24, %s25
    %p39 = scmp.eq.s32.totalorder %s17, 1
    %p40 = por %p38, %p39
    %p42 = scmp.ne.s32.totalorder %s25, %s41
    %p43 = scmp.eq.s32.totalorder %s17, 0
    %p44 = por %p42, %p43
    %s46 = sadd.s32 %s45, 1
    %p49 = scmp.eq.s32.totalorder %s11, 1
    %p50 = scmp.ne.s32.totalorder %s45, %s47
    %p51 = scmp.eq.s32.totalorder %s11, 0
    %p52 = por %p50, %p51
    %p53 = scmp.ne.s32.totalorder %s45, %s47
    %p54 = scmp.eq.s32.totalorder %s16, 1
    %p55 = por %p53, %p54
    %p56 = scmp.ne.s32.totalorder %s47, %s48
    %p57 = scmp.eq.s32.totalorder %s16, 0
    %p58 = por %p56, %p57
    %p59 = scmp.ne.s32.totalorder %s47, %s48
    %p60 = scmp.eq.s32.totalorder %s17, 1
    %p61 = por %p59, %p60
    %p63 = scmp.ne.s32.totalorder %s48, %s62
    %p64 = scmp.eq.s32.totalorder %s17, 0
    %p65 = por %p63, %p64
    %s67 = sadd.s32 %s66, 1
    %p70 = scmp.eq.s32.totalorder %s11, 1
    %p71 = scmp.ne.s32.totalorder %s66, %s68
    %p72 = scmp.eq.s32.totalorder %s11, 0
    %p73 = por %p71, %p72
    %p74 = scmp.ne.s32.totalorder %s66, %s68
    %p75 = scmp.eq.s32.totalorder %s16, 1
    %p76 = por %p74, %p75
    %p77 = scmp.ne.s32.totalorder %s68, %s69
    %p78 = scmp.eq.s32.totalorder %s16, 0
    %p79 = por %p77, %p78
    %p80 = scmp.ne.s32.totalorder %s68, %s69
    %p81 = scmp.eq.s32.totalorder %s17, 1
    %p82 = por %p80, %p81
    %p84 = scmp.ne.s32.totalorder %s69, %s83
    %p85 = scmp.eq.s32.totalorder %s17, 0
    %p86 = por %p84, %p85
    %s88 = sadd.s32 %s87, 1
    %p91 = scmp.eq.s32.totalorder %s11, 1
    %p92 = scmp.ne.s32.totalorder %s87, %s89
    %p93 = scmp.eq.s32.totalorder %s11, 0
    %p94 = por %p92, %p93
    %p95 = scmp.ne.s32.totalorder %s87, %s89
    %p96 = scmp.eq.s32.totalorder %s16, 1
    %p97 = por %p95, %p96
    %p98 = scmp.ne.s32.totalorder %s89, %s90
    %p99 = scmp.eq.s32.totalorder %s16, 0
    %p100 = por %p98, %p99
    %p101 = scmp.ne.s32.totalorder %s89, %s90
    %p102 = scmp.eq.s32.totalorder %s17, 1
    %p103 = por %p101, %p102
    %p105 = scmp.ne.s32.totalorder %s90, %s104
    %p106 = scmp.eq.s32.totalorder %s17, 0
    %p107 = por %p105, %p106
    %s109 = sadd.s32 %s108, 1
    %p112 = scmp.eq.s32.totalorder %s11, 1
    %p113 = scmp.ne.s32.totalorder %s108, %s110
    %p114 = scmp.eq.s32.totalorder %s11, 0
    %p115 = por %p113, %p114
    %p116 = scmp.ne.s32.totalorder %s108, %s110
    %p117 = scmp.eq.s32.totalorder %s16, 1
    %p118 = por %p116, %p117
    %p119 = scmp.ne.s32.totalorder %s110, %s111
    %p120 = scmp.eq.s32.totalorder %s16, 0
    %p121 = por %p119, %p120
    %p122 = scmp.ne.s32.totalorder %s110, %s111
    %p123 = scmp.eq.s32.totalorder %s17, 1
    %p124 = por %p122, %p123
    %p126 = scmp.ne.s32.totalorder %s111, %s125
    %p127 = scmp.eq.s32.totalorder %s17, 0
    %p128 = por %p126, %p127
    %s129 = ssub.s32 %s11, %s18
    %p130 = scmp.eq.s32.totalorder %s129, 0
    %s132 = sadd.s32 %s131, 1
    %s133 = scalar_select %p130, %s131, %s132
    %p136 = pneg %p130
    %p137 = scmp.eq.s32.totalorder %s11, 1
    %p138 = por %p136, %p137
    %p139 = scmp.ne.s32.totalorder %s131, %s134
    %p140 = scmp.eq.s32.totalorder %s11, 0
    %p141 = por %p139, %p140
    %p142 = scmp.ne.s32.totalorder %s131, %s134
    %p143 = scmp.eq.s32.totalorder %s16, 1
    %p144 = por %p142, %p143
    %p145 = scmp.ne.s32.totalorder %s134, %s135
    %p146 = scmp.eq.s32.totalorder %s16, 0
    %p147 = por %p145, %p146
    %p148 = scmp.ne.s32.totalorder %s134, %s135
    %p149 = scmp.eq.s32.totalorder %s17, 1
    %p150 = por %p148, %p149
    %p152 = scmp.ne.s32.totalorder %s135, %s151
    %p153 = scmp.eq.s32.totalorder %s17, 0
    %p154 = por %p152, %p153
    %p155 = scmp.le.s32.totalorder 1, %s11
    %p156 = scmp.lt.s32.totalorder %s11, 3
    %p157 = pnand %p155, %p156
    %p158 = pneg %p157
    // Predicated region
    $region9: #{_neuralnet_forward_impl.1} parent=5 // pred_check
      _
    $region10: #{_neuralnet_forward_impl.1} parent=5 // pred_check_branch
      %160 = sbr.rel (%p157) target = $region12
    $region11: #{_neuralnet_forward_impl.1} parent=5 // pred_region
      %s161 = ssub.s32 %s11, 1
      // Predicated region
      $region13: #{_neuralnet_forward_impl.1} parent=11 // pred_check
        %p162 = pneg %p58
      $region14: #{_neuralnet_forward_impl.1} parent=11 // pred_check_branch
        %164 = sbr.rel (%p162) target = $region16
      $region15: #{_neuralnet_forward_impl.1} parent=11 // pred_region
        _
      $region16: #{_neuralnet_forward_impl.1} parent=11 // pred_fallthru
        _
      // Predicated region
      $region17: #{_neuralnet_forward_impl.1} parent=11 // pred_check
        %p165 = pneg %p79
      $region18: #{_neuralnet_forward_impl.1} parent=11 // pred_check_branch
        %167 = sbr.rel (%p165) target = $region20
      $region19: #{_neuralnet_forward_impl.1} parent=11 // pred_region
        _
      $region20: #{_neuralnet_forward_impl.1} parent=11 // pred_fallthru
        _
      // Predicated region
      $region21: #{_neuralnet_forward_impl.1} parent=11 // pred_check
        %p168 = pneg %p100
      $region22: #{_neuralnet_forward_impl.1} parent=11 // pred_check_branch
        %170 = sbr.rel (%p168) target = $region24
      $region23: #{_neuralnet_forward_impl.1} parent=11 // pred_region
        _
      $region24: #{_neuralnet_forward_impl.1} parent=11 // pred_fallthru
        _
      // Predicated region
      $region25: #{_neuralnet_forward_impl.1} parent=11 // pred_check
        %p171 = pneg %p121
      $region26: #{_neuralnet_forward_impl.1} parent=11 // pred_check_branch
        %173 = sbr.rel (%p171) target = $region28
      $region27: #{_neuralnet_forward_impl.1} parent=11 // pred_region
        _
      $region28: #{_neuralnet_forward_impl.1} parent=11 // pred_fallthru
        _
    $region12: #{_neuralnet_forward_impl.1} parent=5 // pred_fallthru
      _
    %p174 = scmp.lt.s32.totalorder %s11, 2
    // Predicated region
    $region29: #{_neuralnet_forward_impl.1} parent=5 // pred_check
      %p175 = pneg %p174
    $region30: #{_neuralnet_forward_impl.1} parent=5 // pred_check_branch
      %177 = sbr.rel (%p175) target = $region32
    $region31: #{_neuralnet_forward_impl.1} parent=5 // pred_region
      // Predicated region
      $region33: #{_neuralnet_forward_impl.1} parent=31 // pred_check
        %p178 = pneg %p31
      $region34: #{_neuralnet_forward_impl.1} parent=31 // pred_check_branch
        %180 = sbr.rel (%p178) target = $region36
      $region35: #{_neuralnet_forward_impl.1} parent=31 // pred_region
        %p181 = scmp.lt.s32.totalorder %s11, 1
        %s182 = scalar_select %p181, %s11, 1
        %s183 = smul.addr %s182, 48
        %s184 = smul.addr %s183, 8
        %s185 = scalar_lea.vmem %s0, %s184
      $region36: #{_neuralnet_forward_impl.1} parent=31 // pred_fallthru
        _
    $region32: #{_neuralnet_forward_impl.1} parent=5 // pred_fallthru
      _
    %p186 = scmp.le.s32.totalorder 1, %s11
    %p187 = scmp.lt.s32.totalorder %s11, 3
    %p188 = pnand %p186, %p187
    %p189 = pneg %p188
    // Predicated region
    $region37: #{_neuralnet_forward_impl.1} parent=5 // pred_check
      _
    $region38: #{_neuralnet_forward_impl.1} parent=5 // pred_check_branch
      %191 = sbr.rel (%p188) target = $region40
    $region39: #{_neuralnet_forward_impl.1} parent=5 // pred_region
      %s192 = ssub.s32 %s11, 1
      %p193 = scmp.lt.s32.totalorder %s16, 1
      %s194 = scalar_select %p193, %s16, 1
      %s195 = smul.addr %s194, 48
      %s196 = smul.addr %s195, 8
      %s197 = scalar_lea.vmem %s0, %s196
      %p198 = pneg %p37
      %p199 = pneg %p34
      %p200 = pneg %p58
      %p201 = pneg %p55
      %p202 = pneg %p79
      %p203 = pneg %p76
      %p204 = pneg %p100
      %p205 = pneg %p97
      %p206 = pneg %p121
      %p207 = pneg %p118
      %p208 = pneg %p147
      %p209 = pneg %p144
      %p210 = scmp.lt.s32.totalorder %s16, 1
      %s211 = scalar_select %p210, %s16, 1
      %s212 = smul.addr %s211, 8
      %s213 = scalar_lea.vmem %s5, %s212
      %p214 = scmp.lt.s32.totalorder %s16, 1
      %s215 = scalar_select %p214, %s16, 1
      %s216 = smul.addr %s215, 48
      %s217 = smul.addr %s216, 8
      %s218 = scalar_lea.vmem %s0, %s217
      %p219 = scmp.lt.s32.totalorder %s16, 1
      %s220 = scalar_select %p219, %s16, 1
      %s221 = smul.addr %s220, 8
      %s222 = scalar_lea.vmem %s5, %s221
      %v223 = vld [vmem:[%s218] sm:$0xff]
      %v224 = vld [vmem:[%s218 + $0x8] sm:$0xff]
      %v225 = vld [vmem:[%s218 + $0x10] sm:$0xf]
      %v226 = vld [vmem:[%s218 + $0x18] sm:$0xff]
      %v227 = vld [vmem:[%s218 + $0x20] sm:$0xff]
      %v228 = vld [vmem:[%s218 + $0x28] sm:$0xf]
      %v229 = vld [vmem:[%s218 + $0x30] sm:$0xff]
      %v230 = vld [vmem:[%s218 + $0x38] sm:$0xff]
      %v231 = vld [vmem:[%s218 + $0x40] sm:$0xf]
      %v232 = vld [vmem:[%s218 + $0x48] sm:$0xff]
      %v233 = vld [vmem:[%s218 + $0x50] sm:$0xff]
      %v234 = vld [vmem:[%s218 + $0x58] sm:$0xf]
      %v235 = vld [vmem:[%s218 + $0x60] sm:$0xff]
      %v236 = vld [vmem:[%s218 + $0x68] sm:$0xff]
      %v237 = vld [vmem:[%s218 + $0x70] sm:$0xf]
      %v238 = vld [vmem:[%s218 + $0x78] sm:$0xff]
      %v239 = vld [vmem:[%s218 + $0x80] sm:$0xff]
      %v240 = vld [vmem:[%s218 + $0x88] sm:$0xf]
      %v241 = vld [vmem:[%s218 + $0x90] sm:$0xff]
      %v242 = vld [vmem:[%s218 + $0x98] sm:$0xff]
      %v243 = vld [vmem:[%s218 + $0xa0] sm:$0xf]
      %v244 = vld [vmem:[%s218 + $0xa8] sm:$0xff]
      %v245 = vld [vmem:[%s218 + $0xb0] sm:$0xff]
      %v246 = vld [vmem:[%s218 + $0xb8] sm:$0xf]
      %v247 = vld [vmem:[%s218 + $0xc0] sm:$0xff]
      %v248 = vld [vmem:[%s218 + $0xc8] sm:$0xff]
      %v249 = vld [vmem:[%s218 + $0xd0] sm:$0xf]
      %v250 = vld [vmem:[%s218 + $0xd8] sm:$0xff]
      %v251 = vld [vmem:[%s218 + $0xe0] sm:$0xff]
      %v252 = vld [vmem:[%s218 + $0xe8] sm:$0xf]
      %v253 = vld [vmem:[%s218 + $0xf0] sm:$0xff]
      %v254 = vld [vmem:[%s218 + $0xf8] sm:$0xff]
      %v255 = vld [vmem:[%s218 + $0x100] sm:$0xf]
      %v256 = vld [vmem:[%s218 + $0x108] sm:$0xff]
      %v257 = vld [vmem:[%s218 + $0x110] sm:$0xff]
      %v258 = vld [vmem:[%s218 + $0x118] sm:$0xf]
      %v259 = vld [vmem:[%s218 + $0x120] sm:$0xff]
      %v260 = vld [vmem:[%s218 + $0x128] sm:$0xff]
      %v261 = vld [vmem:[%s218 + $0x130] sm:$0xf]
      %v262 = vld [vmem:[%s218 + $0x138] sm:$0xff]
      %v263 = vld [vmem:[%s218 + $0x140] sm:$0xff]
      %v264 = vld [vmem:[%s218 + $0x148] sm:$0xf]
      %v265 = vld [vmem:[%s218 + $0x150] sm:$0xff]
      %v266 = vld [vmem:[%s218 + $0x158] sm:$0xff]
      %v267 = vld [vmem:[%s218 + $0x160] sm:$0xf]
      %v268 = vld [vmem:[%s218 + $0x168] sm:$0xff]
      %v269 = vld [vmem:[%s218 + $0x170] sm:$0xff]
      %v270 = vld [vmem:[%s218 + $0x178] sm:$0xf]
      %295 = vrot.lane.b32.xlu0 %v226, 3
      %v296 = vpop.permute.xlu0 %295
      %297 = vrot.lane.b32.xlu0 %v227, 3
      %v298 = vpop.permute.xlu0 %297
      %299 = vrot.lane.b32.xlu0 %v229, 3
      %v300 = vpop.permute.xlu0 %299
      %301 = vrot.lane.b32.xlu0 %v230, 3
      %v302 = vpop.permute.xlu0 %301
      %303 = vrot.lane.b32.xlu0 %v232, 3
      %v304 = vpop.permute.xlu0 %303
      %305 = vrot.lane.b32.xlu0 %v233, 3
      %v306 = vpop.permute.xlu0 %305
      %307 = vrot.lane.b32.xlu0 %v235, 3
      %v308 = vpop.permute.xlu0 %307
      %309 = vrot.lane.b32.xlu0 %v236, 3
      %v310 = vpop.permute.xlu0 %309
      %311 = vrot.lane.b32.xlu0 %v238, 3
      %v312 = vpop.permute.xlu0 %311
      %313 = vrot.lane.b32.xlu0 %v239, 3
      %v314 = vpop.permute.xlu0 %313
      %315 = vrot.lane.b32.xlu0 %v241, 3
      %v316 = vpop.permute.xlu0 %315
      %317 = vrot.lane.b32.xlu0 %v242, 3
      %v318 = vpop.permute.xlu0 %317
      %319 = vrot.lane.b32.xlu0 %v244, 3
      %v320 = vpop.permute.xlu0 %319
      %321 = vrot.lane.b32.xlu0 %v245, 3
      %v322 = vpop.permute.xlu0 %321
      %323 = vrot.lane.b32.xlu0 %v247, 3
      %v324 = vpop.permute.xlu0 %323
      %325 = vrot.lane.b32.xlu0 %v248, 3
      %v326 = vpop.permute.xlu0 %325
      %327 = vrot.lane.b32.xlu0 %v250, 3
      %v328 = vpop.permute.xlu0 %327
      %329 = vrot.lane.b32.xlu0 %v251, 3
      %v330 = vpop.permute.xlu0 %329
      %331 = vrot.lane.b32.xlu0 %v253, 3
      %v332 = vpop.permute.xlu0 %331
      %333 = vrot.lane.b32.xlu0 %v254, 3
      %v334 = vpop.permute.xlu0 %333
      %335 = vrot.lane.b32.xlu0 %v256, 3
      %v336 = vpop.permute.xlu0 %335
      %337 = vrot.lane.b32.xlu0 %v257, 3
      %v338 = vpop.permute.xlu0 %337
      %339 = vrot.lane.b32.xlu0 %v259, 3
      %v340 = vpop.permute.xlu0 %339
      %341 = vrot.lane.b32.xlu0 %v260, 3
      %v342 = vpop.permute.xlu0 %341
      %369 = vrot.lane.b32.xlu0 %v229, 6
      %v370 = vpop.permute.xlu0 %369
      %371 = vrot.lane.b32.xlu0 %v230, 6
      %v372 = vpop.permute.xlu0 %371
      %373 = vrot.lane.b32.xlu0 %v232, 6
      %v374 = vpop.permute.xlu0 %373
      %375 = vrot.lane.b32.xlu0 %v233, 6
      %v376 = vpop.permute.xlu0 %375
      %377 = vrot.lane.b32.xlu0 %v235, 6
      %v378 = vpop.permute.xlu0 %377
      %379 = vrot.lane.b32.xlu0 %v236, 6
      %v380 = vpop.permute.xlu0 %379
      %381 = vrot.lane.b32.xlu0 %v238, 6
      %v382 = vpop.permute.xlu0 %381
      %383 = vrot.lane.b32.xlu0 %v239, 6
      %v384 = vpop.permute.xlu0 %383
      %385 = vrot.lane.b32.xlu0 %v241, 6
      %v386 = vpop.permute.xlu0 %385
      %387 = vrot.lane.b32.xlu0 %v242, 6
      %v388 = vpop.permute.xlu0 %387
      %389 = vrot.lane.b32.xlu0 %v244, 6
      %v390 = vpop.permute.xlu0 %389
      %391 = vrot.lane.b32.xlu0 %v245, 6
      %v392 = vpop.permute.xlu0 %391
      %393 = vrot.lane.b32.xlu0 %v247, 6
      %v394 = vpop.permute.xlu0 %393
      %395 = vrot.lane.b32.xlu0 %v248, 6
      %v396 = vpop.permute.xlu0 %395
      %397 = vrot.lane.b32.xlu0 %v250, 6
      %v398 = vpop.permute.xlu0 %397
      %399 = vrot.lane.b32.xlu0 %v251, 6
      %v400 = vpop.permute.xlu0 %399
      %401 = vrot.lane.b32.xlu0 %v253, 6
      %v402 = vpop.permute.xlu0 %401
      %403 = vrot.lane.b32.xlu0 %v254, 6
      %v404 = vpop.permute.xlu0 %403
      %405 = vrot.lane.b32.xlu0 %v256, 6
      %v406 = vpop.permute.xlu0 %405
      %407 = vrot.lane.b32.xlu0 %v257, 6
      %v408 = vpop.permute.xlu0 %407
      %409 = vrot.lane.b32.xlu0 %v259, 6
      %v410 = vpop.permute.xlu0 %409
      %411 = vrot.lane.b32.xlu0 %v260, 6
      %v412 = vpop.permute.xlu0 %411
      %413 = vrot.lane.b32.xlu0 %v262, 6
      %v414 = vpop.permute.xlu0 %413
      %415 = vrot.lane.b32.xlu0 %v263, 6
      %v416 = vpop.permute.xlu0 %415
      %443 = vrot.lane.b32.xlu0 %v232, 9
      %v444 = vpop.permute.xlu0 %443
      %445 = vrot.lane.b32.xlu0 %v233, 9
      %v446 = vpop.permute.xlu0 %445
      %447 = vrot.lane.b32.xlu0 %v235, 9
      %v448 = vpop.permute.xlu0 %447
      %449 = vrot.lane.b32.xlu0 %v236, 9
      %v450 = vpop.permute.xlu0 %449
      %451 = vrot.lane.b32.xlu0 %v238, 9
      %v452 = vpop.permute.xlu0 %451
      %453 = vrot.lane.b32.xlu0 %v239, 9
      %v454 = vpop.permute.xlu0 %453
      %455 = vrot.lane.b32.xlu0 %v241, 9
      %v456 = vpop.permute.xlu0 %455
      %457 = vrot.lane.b32.xlu0 %v242, 9
      %v458 = vpop.permute.xlu0 %457
      %459 = vrot.lane.b32.xlu0 %v244, 9
      %v460 = vpop.permute.xlu0 %459
      %461 = vrot.lane.b32.xlu0 %v245, 9
      %v462 = vpop.permute.xlu0 %461
      %463 = vrot.lane.b32.xlu0 %v247, 9
      %v464 = vpop.permute.xlu0 %463
      %465 = vrot.lane.b32.xlu0 %v248, 9
      %v466 = vpop.permute.xlu0 %465
      %467 = vrot.lane.b32.xlu0 %v250, 9
      %v468 = vpop.permute.xlu0 %467
      %469 = vrot.lane.b32.xlu0 %v251, 9
      %v470 = vpop.permute.xlu0 %469
      %471 = vrot.lane.b32.xlu0 %v253, 9
      %v472 = vpop.permute.xlu0 %471
      %473 = vrot.lane.b32.xlu0 %v254, 9
      %v474 = vpop.permute.xlu0 %473
      %475 = vrot.lane.b32.xlu0 %v256, 9
      %v476 = vpop.permute.xlu0 %475
      %477 = vrot.lane.b32.xlu0 %v257, 9
      %v478 = vpop.permute.xlu0 %477
      %479 = vrot.lane.b32.xlu0 %v259, 9
      %v480 = vpop.permute.xlu0 %479
      %481 = vrot.lane.b32.xlu0 %v260, 9
      %v482 = vpop.permute.xlu0 %481
      %483 = vrot.lane.b32.xlu0 %v262, 9
      %v484 = vpop.permute.xlu0 %483
      %485 = vrot.lane.b32.xlu0 %v263, 9
      %v486 = vpop.permute.xlu0 %485
      %487 = vrot.lane.b32.xlu0 %v265, 9
      %v488 = vpop.permute.xlu0 %487
      %489 = vrot.lane.b32.xlu0 %v266, 9
      %v490 = vpop.permute.xlu0 %489
      %517 = vrot.lane.b32.xlu0 %v235, 12
      %v518 = vpop.permute.xlu0 %517
      %519 = vrot.lane.b32.xlu0 %v236, 12
      %v520 = vpop.permute.xlu0 %519
      %521 = vrot.lane.b32.xlu0 %v238, 12
      %v522 = vpop.permute.xlu0 %521
      %523 = vrot.lane.b32.xlu0 %v239, 12
      %v524 = vpop.permute.xlu0 %523
      %525 = vrot.lane.b32.xlu0 %v241, 12
      %v526 = vpop.permute.xlu0 %525
      %527 = vrot.lane.b32.xlu0 %v242, 12
      %v528 = vpop.permute.xlu0 %527
      %529 = vrot.lane.b32.xlu0 %v244, 12
      %v530 = vpop.permute.xlu0 %529
      %531 = vrot.lane.b32.xlu0 %v245, 12
      %v532 = vpop.permute.xlu0 %531
      %533 = vrot.lane.b32.xlu0 %v247, 12
      %v534 = vpop.permute.xlu0 %533
      %535 = vrot.lane.b32.xlu0 %v248, 12
      %v536 = vpop.permute.xlu0 %535
      %537 = vrot.lane.b32.xlu0 %v250, 12
      %v538 = vpop.permute.xlu0 %537
      %539 = vrot.lane.b32.xlu0 %v251, 12
      %v540 = vpop.permute.xlu0 %539
      %541 = vrot.lane.b32.xlu0 %v253, 12
      %v542 = vpop.permute.xlu0 %541
      %543 = vrot.lane.b32.xlu0 %v254, 12
      %v544 = vpop.permute.xlu0 %543
      %545 = vrot.lane.b32.xlu0 %v256, 12
      %v546 = vpop.permute.xlu0 %545
      %547 = vrot.lane.b32.xlu0 %v257, 12
      %v548 = vpop.permute.xlu0 %547
      %549 = vrot.lane.b32.xlu0 %v259, 12
      %v550 = vpop.permute.xlu0 %549
      %551 = vrot.lane.b32.xlu0 %v260, 12
      %v552 = vpop.permute.xlu0 %551
      %553 = vrot.lane.b32.xlu0 %v262, 12
      %v554 = vpop.permute.xlu0 %553
      %555 = vrot.lane.b32.xlu0 %v263, 12
      %v556 = vpop.permute.xlu0 %555
      %557 = vrot.lane.b32.xlu0 %v265, 12
      %v558 = vpop.permute.xlu0 %557
      %559 = vrot.lane.b32.xlu0 %v266, 12
      %v560 = vpop.permute.xlu0 %559
      %561 = vrot.lane.b32.xlu0 %v268, 12
      %v562 = vpop.permute.xlu0 %561
      %563 = vrot.lane.b32.xlu0 %v269, 12
      %v564 = vpop.permute.xlu0 %563
      %vm603 = vcmask 1046528
      %v604 = vrot.slane %v223, 1
      %v605 = vrot.slane %v224, 1
      %v606 = vsel %vm603, %v604, %v605
      %v607 = vrot.slane %v225, 1
      %v608 = vsel %vm603, %v605, %v607
      %v609 = vrot.slane %v226, 1
      %v610 = vrot.slane %v227, 1
      %v611 = vsel %vm603, %v609, %v610
      %v612 = vrot.slane %v228, 1
      %v613 = vsel %vm603, %v610, %v612
      %v614 = vrot.slane %v229, 1
      %v615 = vrot.slane %v230, 1
      %v616 = vsel %vm603, %v614, %v615
      %v617 = vrot.slane %v231, 1
      %v618 = vsel %vm603, %v615, %v617
      %v619 = vrot.slane %v232, 1
      %v620 = vrot.slane %v233, 1
      %v621 = vsel %vm603, %v619, %v620
      %v622 = vrot.slane %v234, 1
      %v623 = vsel %vm603, %v620, %v622
      %v624 = vrot.slane %v235, 1
      %v625 = vrot.slane %v236, 1
      %v626 = vsel %vm603, %v624, %v625
      %v627 = vrot.slane %v237, 1
      %v628 = vsel %vm603, %v625, %v627
      %v629 = vrot.slane %v238, 1
      %v630 = vrot.slane %v239, 1
      %v631 = vsel %vm603, %v629, %v630
      %v632 = vrot.slane %v240, 1
      %v633 = vsel %vm603, %v630, %v632
      %v634 = vrot.slane %v241, 1
      %v635 = vrot.slane %v242, 1
      %v636 = vsel %vm603, %v634, %v635
      %v637 = vrot.slane %v243, 1
      %v638 = vsel %vm603, %v635, %v637
      %v639 = vrot.slane %v244, 1
      %v640 = vrot.slane %v245, 1
      %v641 = vsel %vm603, %v639, %v640
      %v642 = vrot.slane %v246, 1
      %v643 = vsel %vm603, %v640, %v642
      %v644 = vrot.slane %v247, 1
      %v645 = vrot.slane %v248, 1
      %v646 = vsel %vm603, %v644, %v645
      %v647 = vrot.slane %v249, 1
      %v648 = vsel %vm603, %v645, %v647
      %v649 = vrot.slane %v250, 1
      %v650 = vrot.slane %v251, 1
      %v651 = vsel %vm603, %v649, %v650
      %v652 = vrot.slane %v252, 1
      %v653 = vsel %vm603, %v650, %v652
      %v654 = vrot.slane %v253, 1
      %v655 = vrot.slane %v254, 1
      %v656 = vsel %vm603, %v654, %v655
      %v657 = vrot.slane %v255, 1
      %v658 = vsel %vm603, %v655, %v657
      %v659 = vrot.slane %v256, 1
      %v660 = vrot.slane %v257, 1
      %v661 = vsel %vm603, %v659, %v660
      %v662 = vrot.slane %v258, 1
      %v663 = vsel %vm603, %v660, %v662
      %664 = vrot.lane.b32.xlu0 %v606, 15
      %v665 = vpop.permute.xlu0 %664
      %666 = vrot.lane.b32.xlu0 %v608, 15
      %v667 = vpop.permute.xlu0 %666
      %668 = vrot.lane.b32.xlu0 %v611, 15
      %v669 = vpop.permute.xlu0 %668
      %670 = vrot.lane.b32.xlu0 %v613, 15
      %v671 = vpop.permute.xlu0 %670
      %672 = vrot.lane.b32.xlu0 %v616, 15
      %v673 = vpop.permute.xlu0 %672
      %674 = vrot.lane.b32.xlu0 %v618, 15
      %v675 = vpop.permute.xlu0 %674
      %676 = vrot.lane.b32.xlu0 %v621, 15
      %v677 = vpop.permute.xlu0 %676
      %678 = vrot.lane.b32.xlu0 %v623, 15
      %v679 = vpop.permute.xlu0 %678
      %680 = vrot.lane.b32.xlu0 %v626, 15
      %v681 = vpop.permute.xlu0 %680
      %682 = vrot.lane.b32.xlu0 %v628, 15
      %v683 = vpop.permute.xlu0 %682
      %684 = vrot.lane.b32.xlu0 %v631, 15
      %v685 = vpop.permute.xlu0 %684
      %686 = vrot.lane.b32.xlu0 %v633, 15
      %v687 = vpop.permute.xlu0 %686
      %688 = vrot.lane.b32.xlu0 %v636, 15
      %v689 = vpop.permute.xlu0 %688
      %690 = vrot.lane.b32.xlu0 %v638, 15
      %v691 = vpop.permute.xlu0 %690
      %692 = vrot.lane.b32.xlu0 %v641, 15
      %v693 = vpop.permute.xlu0 %692
      %694 = vrot.lane.b32.xlu0 %v643, 15
      %v695 = vpop.permute.xlu0 %694
      %696 = vrot.lane.b32.xlu0 %v646, 15
      %v697 = vpop.permute.xlu0 %696
      %698 = vrot.lane.b32.xlu0 %v648, 15
      %v699 = vpop.permute.xlu0 %698
      %700 = vrot.lane.b32.xlu0 %v651, 15
      %v701 = vpop.permute.xlu0 %700
      %702 = vrot.lane.b32.xlu0 %v653, 15
      %v703 = vpop.permute.xlu0 %702
      %704 = vrot.lane.b32.xlu0 %v656, 15
      %v705 = vpop.permute.xlu0 %704
      %706 = vrot.lane.b32.xlu0 %v658, 15
      %v707 = vpop.permute.xlu0 %706
      %708 = vrot.lane.b32.xlu0 %v661, 15
      %v709 = vpop.permute.xlu0 %708
      %710 = vrot.lane.b32.xlu0 %v663, 15
      %v711 = vpop.permute.xlu0 %710
      %v737 = vrot.slane %v259, 1
      %v738 = vrot.slane %v260, 1
      %v739 = vsel %vm603, %v737, %v738
      %v740 = vrot.slane %v261, 1
      %v741 = vsel %vm603, %v738, %v740
      %742 = vrot.lane.b32.xlu0 %v611, 18
      %v743 = vpop.permute.xlu0 %742
      %744 = vrot.lane.b32.xlu0 %v613, 18
      %v745 = vpop.permute.xlu0 %744
      %746 = vrot.lane.b32.xlu0 %v616, 18
      %v747 = vpop.permute.xlu0 %746
      %748 = vrot.lane.b32.xlu0 %v618, 18
      %v749 = vpop.permute.xlu0 %748
      %750 = vrot.lane.b32.xlu0 %v621, 18
      %v751 = vpop.permute.xlu0 %750
      %752 = vrot.lane.b32.xlu0 %v623, 18
      %v753 = vpop.permute.xlu0 %752
      %754 = vrot.lane.b32.xlu0 %v626, 18
      %v755 = vpop.permute.xlu0 %754
      %756 = vrot.lane.b32.xlu0 %v628, 18
      %v757 = vpop.permute.xlu0 %756
      %758 = vrot.lane.b32.xlu0 %v631, 18
      %v759 = vpop.permute.xlu0 %758
      %760 = vrot.lane.b32.xlu0 %v633, 18
      %v761 = vpop.permute.xlu0 %760
      %762 = vrot.lane.b32.xlu0 %v636, 18
      %v763 = vpop.permute.xlu0 %762
      %764 = vrot.lane.b32.xlu0 %v638, 18
      %v765 = vpop.permute.xlu0 %764
      %766 = vrot.lane.b32.xlu0 %v641, 18
      %v767 = vpop.permute.xlu0 %766
      %768 = vrot.lane.b32.xlu0 %v643, 18
      %v769 = vpop.permute.xlu0 %768
      %770 = vrot.lane.b32.xlu0 %v646, 18
      %v771 = vpop.permute.xlu0 %770
      %772 = vrot.lane.b32.xlu0 %v648, 18
      %v773 = vpop.permute.xlu0 %772
      %774 = vrot.lane.b32.xlu0 %v651, 18
      %v775 = vpop.permute.xlu0 %774
      %776 = vrot.lane.b32.xlu0 %v653, 18
      %v777 = vpop.permute.xlu0 %776
      %778 = vrot.lane.b32.xlu0 %v656, 18
      %v779 = vpop.permute.xlu0 %778
      %780 = vrot.lane.b32.xlu0 %v658, 18
      %v781 = vpop.permute.xlu0 %780
      %782 = vrot.lane.b32.xlu0 %v661, 18
      %v783 = vpop.permute.xlu0 %782
      %784 = vrot.lane.b32.xlu0 %v663, 18
      %v785 = vpop.permute.xlu0 %784
      %786 = vrot.lane.b32.xlu0 %v739, 18
      %v787 = vpop.permute.xlu0 %786
      %788 = vrot.lane.b32.xlu0 %v741, 18
      %v789 = vpop.permute.xlu0 %788
      %v815 = vrot.slane %v262, 1
      %v816 = vrot.slane %v263, 1
      %v817 = vsel %vm603, %v815, %v816
      %v818 = vrot.slane %v264, 1
      %v819 = vsel %vm603, %v816, %v818
      %820 = vrot.lane.b32.xlu0 %v616, 21
      %v821 = vpop.permute.xlu0 %820
      %822 = vrot.lane.b32.xlu0 %v618, 21
      %v823 = vpop.permute.xlu0 %822
      %824 = vrot.lane.b32.xlu0 %v621, 21
      %v825 = vpop.permute.xlu0 %824
      %826 = vrot.lane.b32.xlu0 %v623, 21
      %v827 = vpop.permute.xlu0 %826
      %828 = vrot.lane.b32.xlu0 %v626, 21
      %v829 = vpop.permute.xlu0 %828
      %830 = vrot.lane.b32.xlu0 %v628, 21
      %v831 = vpop.permute.xlu0 %830
      %832 = vrot.lane.b32.xlu0 %v631, 21
      %v833 = vpop.permute.xlu0 %832
      %834 = vrot.lane.b32.xlu0 %v633, 21
      %v835 = vpop.permute.xlu0 %834
      %836 = vrot.lane.b32.xlu0 %v636, 21
      %v837 = vpop.permute.xlu0 %836
      %838 = vrot.lane.b32.xlu0 %v638, 21
      %v839 = vpop.permute.xlu0 %838
      %840 = vrot.lane.b32.xlu0 %v641, 21
      %v841 = vpop.permute.xlu0 %840
      %842 = vrot.lane.b32.xlu0 %v643, 21
      %v843 = vpop.permute.xlu0 %842
      %844 = vrot.lane.b32.xlu0 %v646, 21
      %v845 = vpop.permute.xlu0 %844
      %846 = vrot.lane.b32.xlu0 %v648, 21
      %v847 = vpop.permute.xlu0 %846
      %848 = vrot.lane.b32.xlu0 %v651, 21
      %v849 = vpop.permute.xlu0 %848
      %850 = vrot.lane.b32.xlu0 %v653, 21
      %v851 = vpop.permute.xlu0 %850
      %852 = vrot.lane.b32.xlu0 %v656, 21
      %v853 = vpop.permute.xlu0 %852
      %854 = vrot.lane.b32.xlu0 %v658, 21
      %v855 = vpop.permute.xlu0 %854
      %856 = vrot.lane.b32.xlu0 %v661, 21
      %v857 = vpop.permute.xlu0 %856
      %858 = vrot.lane.b32.xlu0 %v663, 21
      %v859 = vpop.permute.xlu0 %858
      %860 = vrot.lane.b32.xlu0 %v739, 21
      %v861 = vpop.permute.xlu0 %860
      %862 = vrot.lane.b32.xlu0 %v741, 21
      %v863 = vpop.permute.xlu0 %862
      %864 = vrot.lane.b32.xlu0 %v817, 21
      %v865 = vpop.permute.xlu0 %864
      %866 = vrot.lane.b32.xlu0 %v819, 21
      %v867 = vpop.permute.xlu0 %866
      %v893 = vrot.slane %v265, 1
      %v894 = vrot.slane %v266, 1
      %v895 = vsel %vm603, %v893, %v894
      %v896 = vrot.slane %v267, 1
      %v897 = vsel %vm603, %v894, %v896
      %898 = vrot.lane.b32.xlu0 %v621, 24
      %v899 = vpop.permute.xlu0 %898
      %900 = vrot.lane.b32.xlu0 %v623, 24
      %v901 = vpop.permute.xlu0 %900
      %902 = vrot.lane.b32.xlu0 %v626, 24
      %v903 = vpop.permute.xlu0 %902
      %904 = vrot.lane.b32.xlu0 %v628, 24
      %v905 = vpop.permute.xlu0 %904
      %906 = vrot.lane.b32.xlu0 %v631, 24
      %v907 = vpop.permute.xlu0 %906
      %908 = vrot.lane.b32.xlu0 %v633, 24
      %v909 = vpop.permute.xlu0 %908
      %910 = vrot.lane.b32.xlu0 %v636, 24
      %v911 = vpop.permute.xlu0 %910
      %912 = vrot.lane.b32.xlu0 %v638, 24
      %v913 = vpop.permute.xlu0 %912
      %914 = vrot.lane.b32.xlu0 %v641, 24
      %v915 = vpop.permute.xlu0 %914
      %916 = vrot.lane.b32.xlu0 %v643, 24
      %v917 = vpop.permute.xlu0 %916
      %918 = vrot.lane.b32.xlu0 %v646, 24
      %v919 = vpop.permute.xlu0 %918
      %920 = vrot.lane.b32.xlu0 %v648, 24
      %v921 = vpop.permute.xlu0 %920
      %922 = vrot.lane.b32.xlu0 %v651, 24
      %v923 = vpop.permute.xlu0 %922
      %924 = vrot.lane.b32.xlu0 %v653, 24
      %v925 = vpop.permute.xlu0 %924
      %926 = vrot.lane.b32.xlu0 %v656, 24
      %v927 = vpop.permute.xlu0 %926
      %928 = vrot.lane.b32.xlu0 %v658, 24
      %v929 = vpop.permute.xlu0 %928
      %930 = vrot.lane.b32.xlu0 %v661, 24
      %v931 = vpop.permute.xlu0 %930
      %932 = vrot.lane.b32.xlu0 %v663, 24
      %v933 = vpop.permute.xlu0 %932
      %934 = vrot.lane.b32.xlu0 %v739, 24
      %v935 = vpop.permute.xlu0 %934
      %936 = vrot.lane.b32.xlu0 %v741, 24
      %v937 = vpop.permute.xlu0 %936
      %938 = vrot.lane.b32.xlu0 %v817, 24
      %v939 = vpop.permute.xlu0 %938
      %940 = vrot.lane.b32.xlu0 %v819, 24
      %v941 = vpop.permute.xlu0 %940
      %942 = vrot.lane.b32.xlu0 %v895, 24
      %v943 = vpop.permute.xlu0 %942
      %944 = vrot.lane.b32.xlu0 %v897, 24
      %v945 = vpop.permute.xlu0 %944
      %v971 = vrot.slane %v268, 1
      %v972 = vrot.slane %v269, 1
      %v973 = vsel %vm603, %v971, %v972
      %v974 = vrot.slane %v270, 1
      %v975 = vsel %vm603, %v972, %v974
      %976 = vrot.lane.b32.xlu0 %v626, 27
      %v977 = vpop.permute.xlu0 %976
      %978 = vrot.lane.b32.xlu0 %v628, 27
      %v979 = vpop.permute.xlu0 %978
      %980 = vrot.lane.b32.xlu0 %v631, 27
      %v981 = vpop.permute.xlu0 %980
      %982 = vrot.lane.b32.xlu0 %v633, 27
      %v983 = vpop.permute.xlu0 %982
      %984 = vrot.lane.b32.xlu0 %v636, 27
      %v985 = vpop.permute.xlu0 %984
      %986 = vrot.lane.b32.xlu0 %v638, 27
      %v987 = vpop.permute.xlu0 %986
      %988 = vrot.lane.b32.xlu0 %v641, 27
      %v989 = vpop.permute.xlu0 %988
      %990 = vrot.lane.b32.xlu0 %v643, 27
      %v991 = vpop.permute.xlu0 %990
      %992 = vrot.lane.b32.xlu0 %v646, 27
      %v993 = vpop.permute.xlu0 %992
      %994 = vrot.lane.b32.xlu0 %v648, 27
      %v995 = vpop.permute.xlu0 %994
      %996 = vrot.lane.b32.xlu0 %v651, 27
      %v997 = vpop.permute.xlu0 %996
      %998 = vrot.lane.b32.xlu0 %v653, 27
      %v999 = vpop.permute.xlu0 %998
      %1000 = vrot.lane.b32.xlu0 %v656, 27
      %v1001 = vpop.permute.xlu0 %1000
      %1002 = vrot.lane.b32.xlu0 %v658, 27
      %v1003 = vpop.permute.xlu0 %1002
      %1004 = vrot.lane.b32.xlu0 %v661, 27
      %v1005 = vpop.permute.xlu0 %1004
      %1006 = vrot.lane.b32.xlu0 %v663, 27
      %v1007 = vpop.permute.xlu0 %1006
      %1008 = vrot.lane.b32.xlu0 %v739, 27
      %v1009 = vpop.permute.xlu0 %1008
      %1010 = vrot.lane.b32.xlu0 %v741, 27
      %v1011 = vpop.permute.xlu0 %1010
      %1012 = vrot.lane.b32.xlu0 %v817, 27
      %v1013 = vpop.permute.xlu0 %1012
      %1014 = vrot.lane.b32.xlu0 %v819, 27
      %v1015 = vpop.permute.xlu0 %1014
      %1016 = vrot.lane.b32.xlu0 %v895, 27
      %v1017 = vpop.permute.xlu0 %1016
      %1018 = vrot.lane.b32.xlu0 %v897, 27
      %v1019 = vpop.permute.xlu0 %1018
      %1020 = vrot.lane.b32.xlu0 %v973, 27
      %v1021 = vpop.permute.xlu0 %1020
      %1022 = vrot.lane.b32.xlu0 %v975, 27
      %v1023 = vpop.permute.xlu0 %1022
      %vm1048 = vcmask 1045504
      %v1049 = vrot.slane %v223, 2
      %v1050 = vrot.slane %v224, 2
      %v1051 = vsel %vm1048, %v1049, %v1050
      %v1052 = vrot.slane %v225, 2
      %v1053 = vsel %vm1048, %v1050, %v1052
      %v1054 = vrot.slane %v226, 2
      %v1055 = vrot.slane %v227, 2
      %v1056 = vsel %vm1048, %v1054, %v1055
      %v1057 = vrot.slane %v228, 2
      %v1058 = vsel %vm1048, %v1055, %v1057
      %v1059 = vrot.slane %v229, 2
      %v1060 = vrot.slane %v230, 2
      %v1061 = vsel %vm1048, %v1059, %v1060
      %v1062 = vrot.slane %v231, 2
      %v1063 = vsel %vm1048, %v1060, %v1062
      %v1064 = vrot.slane %v232, 2
      %v1065 = vrot.slane %v233, 2
      %v1066 = vsel %vm1048, %v1064, %v1065
      %v1067 = vrot.slane %v234, 2
      %v1068 = vsel %vm1048, %v1065, %v1067
      %v1069 = vrot.slane %v235, 2
      %v1070 = vrot.slane %v236, 2
      %v1071 = vsel %vm1048, %v1069, %v1070
      %v1072 = vrot.slane %v237, 2
      %v1073 = vsel %vm1048, %v1070, %v1072
      %v1074 = vrot.slane %v238, 2
      %v1075 = vrot.slane %v239, 2
      %v1076 = vsel %vm1048, %v1074, %v1075
      %v1077 = vrot.slane %v240, 2
      %v1078 = vsel %vm1048, %v1075, %v1077
      %v1079 = vrot.slane %v241, 2
      %v1080 = vrot.slane %v242, 2
      %v1081 = vsel %vm1048, %v1079, %v1080
      %v1082 = vrot.slane %v243, 2
      %v1083 = vsel %vm1048, %v1080, %v1082
      %v1084 = vrot.slane %v244, 2
      %v1085 = vrot.slane %v245, 2
      %v1086 = vsel %vm1048, %v1084, %v1085
      %v1087 = vrot.slane %v246, 2
      %v1088 = vsel %vm1048, %v1085, %v1087
      %v1089 = vrot.slane %v247, 2
      %v1090 = vrot.slane %v248, 2
      %v1091 = vsel %vm1048, %v1089, %v1090
      %v1092 = vrot.slane %v249, 2
      %v1093 = vsel %vm1048, %v1090, %v1092
      %v1094 = vrot.slane %v250, 2
      %v1095 = vrot.slane %v251, 2
      %v1096 = vsel %vm1048, %v1094, %v1095
      %v1097 = vrot.slane %v252, 2
      %v1098 = vsel %vm1048, %v1095, %v1097
      %v1099 = vrot.slane %v253, 2
      %v1100 = vrot.slane %v254, 2
      %v1101 = vsel %vm1048, %v1099, %v1100
      %v1102 = vrot.slane %v255, 2
      %v1103 = vsel %vm1048, %v1100, %v1102
      %v1104 = vrot.slane %v256, 2
      %v1105 = vrot.slane %v257, 2
      %v1106 = vsel %vm1048, %v1104, %v1105
      %v1107 = vrot.slane %v258, 2
      %v1108 = vsel %vm1048, %v1105, %v1107
      %1109 = vrot.lane.b32.xlu0 %v1051, 30
      %v1110 = vpop.permute.xlu0 %1109
      %1111 = vrot.lane.b32.xlu0 %v1053, 30
      %v1112 = vpop.permute.xlu0 %1111
      %1113 = vrot.lane.b32.xlu0 %v1056, 30
      %v1114 = vpop.permute.xlu0 %1113
      %1115 = vrot.lane.b32.xlu0 %v1058, 30
      %v1116 = vpop.permute.xlu0 %1115
      %1117 = vrot.lane.b32.xlu0 %v1061, 30
      %v1118 = vpop.permute.xlu0 %1117
      %1119 = vrot.lane.b32.xlu0 %v1063, 30
      %v1120 = vpop.permute.xlu0 %1119
      %1121 = vrot.lane.b32.xlu0 %v1066, 30
      %v1122 = vpop.permute.xlu0 %1121
      %1123 = vrot.lane.b32.xlu0 %v1068, 30
      %v1124 = vpop.permute.xlu0 %1123
      %1125 = vrot.lane.b32.xlu0 %v1071, 30
      %v1126 = vpop.permute.xlu0 %1125
      %1127 = vrot.lane.b32.xlu0 %v1073, 30
      %v1128 = vpop.permute.xlu0 %1127
      %1129 = vrot.lane.b32.xlu0 %v1076, 30
      %v1130 = vpop.permute.xlu0 %1129
      %1131 = vrot.lane.b32.xlu0 %v1078, 30
      %v1132 = vpop.permute.xlu0 %1131
      %1133 = vrot.lane.b32.xlu0 %v1081, 30
      %v1134 = vpop.permute.xlu0 %1133
      %1135 = vrot.lane.b32.xlu0 %v1083, 30
      %v1136 = vpop.permute.xlu0 %1135
      %1137 = vrot.lane.b32.xlu0 %v1086, 30
      %v1138 = vpop.permute.xlu0 %1137
      %1139 = vrot.lane.b32.xlu0 %v1088, 30
      %v1140 = vpop.permute.xlu0 %1139
      %1141 = vrot.lane.b32.xlu0 %v1091, 30
      %v1142 = vpop.permute.xlu0 %1141
      %1143 = vrot.lane.b32.xlu0 %v1093, 30
      %v1144 = vpop.permute.xlu0 %1143
      %1145 = vrot.lane.b32.xlu0 %v1096, 30
      %v1146 = vpop.permute.xlu0 %1145
      %1147 = vrot.lane.b32.xlu0 %v1098, 30
      %v1148 = vpop.permute.xlu0 %1147
      %1149 = vrot.lane.b32.xlu0 %v1101, 30
      %v1150 = vpop.permute.xlu0 %1149
      %1151 = vrot.lane.b32.xlu0 %v1103, 30
      %v1152 = vpop.permute.xlu0 %1151
      %1153 = vrot.lane.b32.xlu0 %v1106, 30
      %v1154 = vpop.permute.xlu0 %1153
      %1155 = vrot.lane.b32.xlu0 %v1108, 30
      %v1156 = vpop.permute.xlu0 %1155
      %v1181 = vrot.slane %v259, 2
      %v1182 = vrot.slane %v260, 2
      %v1183 = vsel %vm1048, %v1181, %v1182
      %v1184 = vrot.slane %v261, 2
      %v1185 = vsel %vm1048, %v1182, %v1184
      %1186 = vrot.lane.b32.xlu0 %v1056, 33
      %v1187 = vpop.permute.xlu0 %1186
      %1188 = vrot.lane.b32.xlu0 %v1058, 33
      %v1189 = vpop.permute.xlu0 %1188
      %1190 = vrot.lane.b32.xlu0 %v1061, 33
      %v1191 = vpop.permute.xlu0 %1190
      %1192 = vrot.lane.b32.xlu0 %v1063, 33
      %v1193 = vpop.permute.xlu0 %1192
      %1194 = vrot.lane.b32.xlu0 %v1066, 33
      %v1195 = vpop.permute.xlu0 %1194
      %1196 = vrot.lane.b32.xlu0 %v1068, 33
      %v1197 = vpop.permute.xlu0 %1196
      %1198 = vrot.lane.b32.xlu0 %v1071, 33
      %v1199 = vpop.permute.xlu0 %1198
      %1200 = vrot.lane.b32.xlu0 %v1073, 33
      %v1201 = vpop.permute.xlu0 %1200
      %1202 = vrot.lane.b32.xlu0 %v1076, 33
      %v1203 = vpop.permute.xlu0 %1202
      %1204 = vrot.lane.b32.xlu0 %v1078, 33
      %v1205 = vpop.permute.xlu0 %1204
      %1206 = vrot.lane.b32.xlu0 %v1081, 33
      %v1207 = vpop.permute.xlu0 %1206
      %1208 = vrot.lane.b32.xlu0 %v1083, 33
      %v1209 = vpop.permute.xlu0 %1208
      %1210 = vrot.lane.b32.xlu0 %v1086, 33
      %v1211 = vpop.permute.xlu0 %1210
      %1212 = vrot.lane.b32.xlu0 %v1088, 33
      %v1213 = vpop.permute.xlu0 %1212
      %1214 = vrot.lane.b32.xlu0 %v1091, 33
      %v1215 = vpop.permute.xlu0 %1214
      %1216 = vrot.lane.b32.xlu0 %v1093, 33
      %v1217 = vpop.permute.xlu0 %1216
      %1218 = vrot.lane.b32.xlu0 %v1096, 33
      %v1219 = vpop.permute.xlu0 %1218
      %1220 = vrot.lane.b32.xlu0 %v1098, 33
      %v1221 = vpop.permute.xlu0 %1220
      %1222 = vrot.lane.b32.xlu0 %v1101, 33
      %v1223 = vpop.permute.xlu0 %1222
      %1224 = vrot.lane.b32.xlu0 %v1103, 33
      %v1225 = vpop.permute.xlu0 %1224
      %1226 = vrot.lane.b32.xlu0 %v1106, 33
      %v1227 = vpop.permute.xlu0 %1226
      %1228 = vrot.lane.b32.xlu0 %v1108, 33
      %v1229 = vpop.permute.xlu0 %1228
      %1230 = vrot.lane.b32.xlu0 %v1183, 33
      %v1231 = vpop.permute.xlu0 %1230
      %1232 = vrot.lane.b32.xlu0 %v1185, 33
      %v1233 = vpop.permute.xlu0 %1232
      %v1258 = vrot.slane %v262, 2
      %v1259 = vrot.slane %v263, 2
      %v1260 = vsel %vm1048, %v1258, %v1259
      %v1261 = vrot.slane %v264, 2
      %v1262 = vsel %vm1048, %v1259, %v1261
      %1263 = vrot.lane.b32.xlu0 %v1061, 36
      %v1264 = vpop.permute.xlu0 %1263
      %1265 = vrot.lane.b32.xlu0 %v1063, 36
      %v1266 = vpop.permute.xlu0 %1265
      %1267 = vrot.lane.b32.xlu0 %v1066, 36
      %v1268 = vpop.permute.xlu0 %1267
      %1269 = vrot.lane.b32.xlu0 %v1068, 36
      %v1270 = vpop.permute.xlu0 %1269
      %1271 = vrot.lane.b32.xlu0 %v1071, 36
      %v1272 = vpop.permute.xlu0 %1271
      %1273 = vrot.lane.b32.xlu0 %v1073, 36
      %v1274 = vpop.permute.xlu0 %1273
      %1275 = vrot.lane.b32.xlu0 %v1076, 36
      %v1276 = vpop.permute.xlu0 %1275
      %1277 = vrot.lane.b32.xlu0 %v1078, 36
      %v1278 = vpop.permute.xlu0 %1277
      %1279 = vrot.lane.b32.xlu0 %v1081, 36
      %v1280 = vpop.permute.xlu0 %1279
      %1281 = vrot.lane.b32.xlu0 %v1083, 36
      %v1282 = vpop.permute.xlu0 %1281
      %1283 = vrot.lane.b32.xlu0 %v1086, 36
      %v1284 = vpop.permute.xlu0 %1283
      %1285 = vrot.lane.b32.xlu0 %v1088, 36
      %v1286 = vpop.permute.xlu0 %1285
      %1287 = vrot.lane.b32.xlu0 %v1091, 36
      %v1288 = vpop.permute.xlu0 %1287
      %1289 = vrot.lane.b32.xlu0 %v1093, 36
      %v1290 = vpop.permute.xlu0 %1289
      %1291 = vrot.lane.b32.xlu0 %v1096, 36
      %v1292 = vpop.permute.xlu0 %1291
      %1293 = vrot.lane.b32.xlu0 %v1098, 36
      %v1294 = vpop.permute.xlu0 %1293
      %1295 = vrot.lane.b32.xlu0 %v1101, 36
      %v1296 = vpop.permute.xlu0 %1295
      %1297 = vrot.lane.b32.xlu0 %v1103, 36
      %v1298 = vpop.permute.xlu0 %1297
      %1299 = vrot.lane.b32.xlu0 %v1106, 36
      %v1300 = vpop.permute.xlu0 %1299
      %1301 = vrot.lane.b32.xlu0 %v1108, 36
      %v1302 = vpop.permute.xlu0 %1301
      %1303 = vrot.lane.b32.xlu0 %v1183, 36
      %v1304 = vpop.permute.xlu0 %1303
      %1305 = vrot.lane.b32.xlu0 %v1185, 36
      %v1306 = vpop.permute.xlu0 %1305
      %1307 = vrot.lane.b32.xlu0 %v1260, 36
      %v1308 = vpop.permute.xlu0 %1307
      %1309 = vrot.lane.b32.xlu0 %v1262, 36
      %v1310 = vpop.permute.xlu0 %1309
      %v1335 = vrot.slane %v265, 2
      %v1336 = vrot.slane %v266, 2
      %v1337 = vsel %vm1048, %v1335, %v1336
      %v1338 = vrot.slane %v267, 2
      %v1339 = vsel %vm1048, %v1336, %v1338
      %1340 = vrot.lane.b32.xlu0 %v1066, 39
      %v1341 = vpop.permute.xlu0 %1340
      %1342 = vrot.lane.b32.xlu0 %v1068, 39
      %v1343 = vpop.permute.xlu0 %1342
      %1344 = vrot.lane.b32.xlu0 %v1071, 39
      %v1345 = vpop.permute.xlu0 %1344
      %1346 = vrot.lane.b32.xlu0 %v1073, 39
      %v1347 = vpop.permute.xlu0 %1346
      %1348 = vrot.lane.b32.xlu0 %v1076, 39
      %v1349 = vpop.permute.xlu0 %1348
      %1350 = vrot.lane.b32.xlu0 %v1078, 39
      %v1351 = vpop.permute.xlu0 %1350
      %1352 = vrot.lane.b32.xlu0 %v1081, 39
      %v1353 = vpop.permute.xlu0 %1352
      %1354 = vrot.lane.b32.xlu0 %v1083, 39
      %v1355 = vpop.permute.xlu0 %1354
      %1356 = vrot.lane.b32.xlu0 %v1086, 39
      %v1357 = vpop.permute.xlu0 %1356
      %1358 = vrot.lane.b32.xlu0 %v1088, 39
      %v1359 = vpop.permute.xlu0 %1358
      %1360 = vrot.lane.b32.xlu0 %v1091, 39
      %v1361 = vpop.permute.xlu0 %1360
      %1362 = vrot.lane.b32.xlu0 %v1093, 39
      %v1363 = vpop.permute.xlu0 %1362
      %1364 = vrot.lane.b32.xlu0 %v1096, 39
      %v1365 = vpop.permute.xlu0 %1364
      %1366 = vrot.lane.b32.xlu0 %v1098, 39
      %v1367 = vpop.permute.xlu0 %1366
      %1368 = vrot.lane.b32.xlu0 %v1101, 39
      %v1369 = vpop.permute.xlu0 %1368
      %1370 = vrot.lane.b32.xlu0 %v1103, 39
      %v1371 = vpop.permute.xlu0 %1370
      %1372 = vrot.lane.b32.xlu0 %v1106, 39
      %v1373 = vpop.permute.xlu0 %1372
      %1374 = vrot.lane.b32.xlu0 %v1108, 39
      %v1375 = vpop.permute.xlu0 %1374
      %1376 = vrot.lane.b32.xlu0 %v1183, 39
      %v1377 = vpop.permute.xlu0 %1376
      %1378 = vrot.lane.b32.xlu0 %v1185, 39
      %v1379 = vpop.permute.xlu0 %1378
      %1380 = vrot.lane.b32.xlu0 %v1260, 39
      %v1381 = vpop.permute.xlu0 %1380
      %1382 = vrot.lane.b32.xlu0 %v1262, 39
      %v1383 = vpop.permute.xlu0 %1382
      %1384 = vrot.lane.b32.xlu0 %v1337, 39
      %v1385 = vpop.permute.xlu0 %1384
      %1386 = vrot.lane.b32.xlu0 %v1339, 39
      %v1387 = vpop.permute.xlu0 %1386
      %v1412 = vrot.slane %v268, 2
      %v1413 = vrot.slane %v269, 2
      %v1414 = vsel %vm1048, %v1412, %v1413
      %v1415 = vrot.slane %v270, 2
      %v1416 = vsel %vm1048, %v1413, %v1415
      %1417 = vrot.lane.b32.xlu0 %v1071, 42
      %v1418 = vpop.permute.xlu0 %1417
      %1419 = vrot.lane.b32.xlu0 %v1073, 42
      %v1420 = vpop.permute.xlu0 %1419
      %1421 = vrot.lane.b32.xlu0 %v1076, 42
      %v1422 = vpop.permute.xlu0 %1421
      %1423 = vrot.lane.b32.xlu0 %v1078, 42
      %v1424 = vpop.permute.xlu0 %1423
      %1425 = vrot.lane.b32.xlu0 %v1081, 42
      %v1426 = vpop.permute.xlu0 %1425
      %1427 = vrot.lane.b32.xlu0 %v1083, 42
      %v1428 = vpop.permute.xlu0 %1427
      %1429 = vrot.lane.b32.xlu0 %v1086, 42
      %v1430 = vpop.permute.xlu0 %1429
      %1431 = vrot.lane.b32.xlu0 %v1088, 42
      %v1432 = vpop.permute.xlu0 %1431
      %1433 = vrot.lane.b32.xlu0 %v1091, 42
      %v1434 = vpop.permute.xlu0 %1433
      %1435 = vrot.lane.b32.xlu0 %v1093, 42
      %v1436 = vpop.permute.xlu0 %1435
      %1437 = vrot.lane.b32.xlu0 %v1096, 42
      %v1438 = vpop.permute.xlu0 %1437
      %1439 = vrot.lane.b32.xlu0 %v1098, 42
      %v1440 = vpop.permute.xlu0 %1439
      %1441 = vrot.lane.b32.xlu0 %v1101, 42
      %v1442 = vpop.permute.xlu0 %1441
      %1443 = vrot.lane.b32.xlu0 %v1103, 42
      %v1444 = vpop.permute.xlu0 %1443
      %1445 = vrot.lane.b32.xlu0 %v1106, 42
      %v1446 = vpop.permute.xlu0 %1445
      %1447 = vrot.lane.b32.xlu0 %v1108, 42
      %v1448 = vpop.permute.xlu0 %1447
      %1449 = vrot.lane.b32.xlu0 %v1183, 42
      %v1450 = vpop.permute.xlu0 %1449
      %1451 = vrot.lane.b32.xlu0 %v1185, 42
      %v1452 = vpop.permute.xlu0 %1451
      %1453 = vrot.lane.b32.xlu0 %v1260, 42
      %v1454 = vpop.permute.xlu0 %1453
      %1455 = vrot.lane.b32.xlu0 %v1262, 42
      %v1456 = vpop.permute.xlu0 %1455
      %1457 = vrot.lane.b32.xlu0 %v1337, 42
      %v1458 = vpop.permute.xlu0 %1457
      %1459 = vrot.lane.b32.xlu0 %v1339, 42
      %v1460 = vpop.permute.xlu0 %1459
      %1461 = vrot.lane.b32.xlu0 %v1414, 42
      %v1462 = vpop.permute.xlu0 %1461
      %1463 = vrot.lane.b32.xlu0 %v1416, 42
      %v1464 = vpop.permute.xlu0 %1463
      %vm1489 = vcmask 1044480
      %v1490 = vrot.slane %v223, 3
      %v1491 = vrot.slane %v224, 3
      %v1492 = vsel %vm1489, %v1490, %v1491
      %v1493 = vrot.slane %v225, 3
      %v1494 = vsel %vm1489, %v1491, %v1493
      %v1495 = vrot.slane %v226, 3
      %v1496 = vrot.slane %v227, 3
      %v1497 = vsel %vm1489, %v1495, %v1496
      %v1498 = vrot.slane %v228, 3
      %v1499 = vsel %vm1489, %v1496, %v1498
      %v1500 = vrot.slane %v229, 3
      %v1501 = vrot.slane %v230, 3
      %v1502 = vsel %vm1489, %v1500, %v1501
      %v1503 = vrot.slane %v231, 3
      %v1504 = vsel %vm1489, %v1501, %v1503
      %v1505 = vrot.slane %v232, 3
      %v1506 = vrot.slane %v233, 3
      %v1507 = vsel %vm1489, %v1505, %v1506
      %v1508 = vrot.slane %v234, 3
      %v1509 = vsel %vm1489, %v1506, %v1508
      %v1510 = vrot.slane %v235, 3
      %v1511 = vrot.slane %v236, 3
      %v1512 = vsel %vm1489, %v1510, %v1511
      %v1513 = vrot.slane %v237, 3
      %v1514 = vsel %vm1489, %v1511, %v1513
      %v1515 = vrot.slane %v238, 3
      %v1516 = vrot.slane %v239, 3
      %v1517 = vsel %vm1489, %v1515, %v1516
      %v1518 = vrot.slane %v240, 3
      %v1519 = vsel %vm1489, %v1516, %v1518
      %v1520 = vrot.slane %v241, 3
      %v1521 = vrot.slane %v242, 3
      %v1522 = vsel %vm1489, %v1520, %v1521
      %v1523 = vrot.slane %v243, 3
      %v1524 = vsel %vm1489, %v1521, %v1523
      %v1525 = vrot.slane %v244, 3
      %v1526 = vrot.slane %v245, 3
      %v1527 = vsel %vm1489, %v1525, %v1526
      %v1528 = vrot.slane %v246, 3
      %v1529 = vsel %vm1489, %v1526, %v1528
      %v1530 = vrot.slane %v247, 3
      %v1531 = vrot.slane %v248, 3
      %v1532 = vsel %vm1489, %v1530, %v1531
      %v1533 = vrot.slane %v249, 3
      %v1534 = vsel %vm1489, %v1531, %v1533
      %v1535 = vrot.slane %v250, 3
      %v1536 = vrot.slane %v251, 3
      %v1537 = vsel %vm1489, %v1535, %v1536
      %v1538 = vrot.slane %v252, 3
      %v1539 = vsel %vm1489, %v1536, %v1538
      %v1540 = vrot.slane %v253, 3
      %v1541 = vrot.slane %v254, 3
      %v1542 = vsel %vm1489, %v1540, %v1541
      %v1543 = vrot.slane %v255, 3
      %v1544 = vsel %vm1489, %v1541, %v1543
      %v1545 = vrot.slane %v256, 3
      %v1546 = vrot.slane %v257, 3
      %v1547 = vsel %vm1489, %v1545, %v1546
      %v1548 = vrot.slane %v258, 3
      %v1549 = vsel %vm1489, %v1546, %v1548
      %1550 = vrot.lane.b32.xlu0 %v1492, 45
      %v1551 = vpop.permute.xlu0 %1550
      %1552 = vrot.lane.b32.xlu0 %v1494, 45
      %v1553 = vpop.permute.xlu0 %1552
      %1554 = vrot.lane.b32.xlu0 %v1497, 45
      %v1555 = vpop.permute.xlu0 %1554
      %1556 = vrot.lane.b32.xlu0 %v1499, 45
      %v1557 = vpop.permute.xlu0 %1556
      %1558 = vrot.lane.b32.xlu0 %v1502, 45
      %v1559 = vpop.permute.xlu0 %1558
      %1560 = vrot.lane.b32.xlu0 %v1504, 45
      %v1561 = vpop.permute.xlu0 %1560
      %1562 = vrot.lane.b32.xlu0 %v1507, 45
      %v1563 = vpop.permute.xlu0 %1562
      %1564 = vrot.lane.b32.xlu0 %v1509, 45
      %v1565 = vpop.permute.xlu0 %1564
      %1566 = vrot.lane.b32.xlu0 %v1512, 45
      %v1567 = vpop.permute.xlu0 %1566
      %1568 = vrot.lane.b32.xlu0 %v1514, 45
      %v1569 = vpop.permute.xlu0 %1568
      %1570 = vrot.lane.b32.xlu0 %v1517, 45
      %v1571 = vpop.permute.xlu0 %1570
      %1572 = vrot.lane.b32.xlu0 %v1519, 45
      %v1573 = vpop.permute.xlu0 %1572
      %1574 = vrot.lane.b32.xlu0 %v1522, 45
      %v1575 = vpop.permute.xlu0 %1574
      %1576 = vrot.lane.b32.xlu0 %v1524, 45
      %v1577 = vpop.permute.xlu0 %1576
      %1578 = vrot.lane.b32.xlu0 %v1527, 45
      %v1579 = vpop.permute.xlu0 %1578
      %1580 = vrot.lane.b32.xlu0 %v1529, 45
      %v1581 = vpop.permute.xlu0 %1580
      %1582 = vrot.lane.b32.xlu0 %v1532, 45
      %v1583 = vpop.permute.xlu0 %1582
      %1584 = vrot.lane.b32.xlu0 %v1534, 45
      %v1585 = vpop.permute.xlu0 %1584
      %1586 = vrot.lane.b32.xlu0 %v1537, 45
      %v1587 = vpop.permute.xlu0 %1586
      %1588 = vrot.lane.b32.xlu0 %v1539, 45
      %v1589 = vpop.permute.xlu0 %1588
      %1590 = vrot.lane.b32.xlu0 %v1542, 45
      %v1591 = vpop.permute.xlu0 %1590
      %1592 = vrot.lane.b32.xlu0 %v1544, 45
      %v1593 = vpop.permute.xlu0 %1592
      %1594 = vrot.lane.b32.xlu0 %v1547, 45
      %v1595 = vpop.permute.xlu0 %1594
      %1596 = vrot.lane.b32.xlu0 %v1549, 45
      %v1597 = vpop.permute.xlu0 %1596
      %vm1622 = vcmask 23552
      %v1623 = vsel %vm1622, %v223, %v296
      %v1624 = vsel %vm1622, %v224, %v298
      %v1625 = vsel %vm1622, %v226, %v300
      %v1626 = vsel %vm1622, %v227, %v302
      %v1627 = vsel %vm1622, %v229, %v304
      %v1628 = vsel %vm1622, %v230, %v306
      %v1629 = vsel %vm1622, %v232, %v308
      %v1630 = vsel %vm1622, %v233, %v310
      %v1631 = vsel %vm1622, %v235, %v312
      %v1632 = vsel %vm1622, %v236, %v314
      %v1633 = vsel %vm1622, %v238, %v316
      %v1634 = vsel %vm1622, %v239, %v318
      %v1635 = vsel %vm1622, %v241, %v320
      %v1636 = vsel %vm1622, %v242, %v322
      %v1637 = vsel %vm1622, %v244, %v324
      %v1638 = vsel %vm1622, %v245, %v326
      %v1639 = vsel %vm1622, %v247, %v328
      %v1640 = vsel %vm1622, %v248, %v330
      %v1641 = vsel %vm1622, %v250, %v332
      %v1642 = vsel %vm1622, %v251, %v334
      %v1643 = vsel %vm1622, %v253, %v336
      %v1644 = vsel %vm1622, %v254, %v338
      %v1645 = vsel %vm1622, %v256, %v340
      %v1646 = vsel %vm1622, %v257, %v342
      %vm1647 = vcmask 48128
      %v1648 = vsel %vm1647, %v1623, %v370
      %v1649 = vsel %vm1647, %v1624, %v372
      %v1650 = vsel %vm1647, %v1625, %v374
      %v1651 = vsel %vm1647, %v1626, %v376
      %v1652 = vsel %vm1647, %v1627, %v378
      %v1653 = vsel %vm1647, %v1628, %v380
      %v1654 = vsel %vm1647, %v1629, %v382
      %v1655 = vsel %vm1647, %v1630, %v384
      %v1656 = vsel %vm1647, %v1631, %v386
      %v1657 = vsel %vm1647, %v1632, %v388
      %v1658 = vsel %vm1647, %v1633, %v390
      %v1659 = vsel %vm1647, %v1634, %v392
      %v1660 = vsel %vm1647, %v1635, %v394
      %v1661 = vsel %vm1647, %v1636, %v396
      %v1662 = vsel %vm1647, %v1637, %v398
      %v1663 = vsel %vm1647, %v1638, %v400
      %v1664 = vsel %vm1647, %v1639, %v402
      %v1665 = vsel %vm1647, %v1640, %v404
      %v1666 = vsel %vm1647, %v1641, %v406
      %v1667 = vsel %vm1647, %v1642, %v408
      %v1668 = vsel %vm1647, %v1643, %v410
      %v1669 = vsel %vm1647, %v1644, %v412
      %v1670 = vsel %vm1647, %v1645, %v414
      %v1671 = vsel %vm1647, %v1646, %v416
      %vm1672 = vcmask 72704
      %v1673 = vsel %vm1672, %v1648, %v444
      %v1674 = vsel %vm1672, %v1649, %v446
      %v1675 = vsel %vm1672, %v1650, %v448
      %v1676 = vsel %vm1672, %v1651, %v450
      %v1677 = vsel %vm1672, %v1652, %v452
      %v1678 = vsel %vm1672, %v1653, %v454
      %v1679 = vsel %vm1672, %v1654, %v456
      %v1680 = vsel %vm1672, %v1655, %v458
      %v1681 = vsel %vm1672, %v1656, %v460
      %v1682 = vsel %vm1672, %v1657, %v462
      %v1683 = vsel %vm1672, %v1658, %v464
      %v1684 = vsel %vm1672, %v1659, %v466
      %v1685 = vsel %vm1672, %v1660, %v468
      %v1686 = vsel %vm1672, %v1661, %v470
      %v1687 = vsel %vm1672, %v1662, %v472
      %v1688 = vsel %vm1672, %v1663, %v474
      %v1689 = vsel %vm1672, %v1664, %v476
      %v1690 = vsel %vm1672, %v1665, %v478
      %v1691 = vsel %vm1672, %v1666, %v480
      %v1692 = vsel %vm1672, %v1667, %v482
      %v1693 = vsel %vm1672, %v1668, %v484
      %v1694 = vsel %vm1672, %v1669, %v486
      %v1695 = vsel %vm1672, %v1670, %v488
      %v1696 = vsel %vm1672, %v1671, %v490
      %vm1697 = vcmask 97280
      %v1698 = vsel %vm1697, %v1673, %v518
      %v1699 = vsel %vm1697, %v1674, %v520
      %v1700 = vsel %vm1697, %v1675, %v522
      %v1701 = vsel %vm1697, %v1676, %v524
      %v1702 = vsel %vm1697, %v1677, %v526
      %v1703 = vsel %vm1697, %v1678, %v528
      %v1704 = vsel %vm1697, %v1679, %v530
      %v1705 = vsel %vm1697, %v1680, %v532
      %v1706 = vsel %vm1697, %v1681, %v534
      %v1707 = vsel %vm1697, %v1682, %v536
      %v1708 = vsel %vm1697, %v1683, %v538
      %v1709 = vsel %vm1697, %v1684, %v540
      %v1710 = vsel %vm1697, %v1685, %v542
      %v1711 = vsel %vm1697, %v1686, %v544
      %v1712 = vsel %vm1697, %v1687, %v546
      %v1713 = vsel %vm1697, %v1688, %v548
      %v1714 = vsel %vm1697, %v1689, %v550
      %v1715 = vsel %vm1697, %v1690, %v552
      %v1716 = vsel %vm1697, %v1691, %v554
      %v1717 = vsel %vm1697, %v1692, %v556
      %v1718 = vsel %vm1697, %v1693, %v558
      %v1719 = vsel %vm1697, %v1694, %v560
      %v1720 = vsel %vm1697, %v1695, %v562
      %v1721 = vsel %vm1697, %v1696, %v564
      %vm1722 = vcmask 121856
      %v1723 = vsel %vm1722, %v1698, %v665
      %v1724 = vsel %vm1722, %v1699, %v667
      %v1725 = vsel %vm1722, %v1700, %v669
      %v1726 = vsel %vm1722, %v1701, %v671
      %v1727 = vsel %vm1722, %v1702, %v673
      %v1728 = vsel %vm1722, %v1703, %v675
      %v1729 = vsel %vm1722, %v1704, %v677
      %v1730 = vsel %vm1722, %v1705, %v679
      %v1731 = vsel %vm1722, %v1706, %v681
      %v1732 = vsel %vm1722, %v1707, %v683
      %v1733 = vsel %vm1722, %v1708, %v685
      %v1734 = vsel %vm1722, %v1709, %v687
      %v1735 = vsel %vm1722, %v1710, %v689
      %v1736 = vsel %vm1722, %v1711, %v691
      %v1737 = vsel %vm1722, %v1712, %v693
      %v1738 = vsel %vm1722, %v1713, %v695
      %v1739 = vsel %vm1722, %v1714, %v697
      %v1740 = vsel %vm1722, %v1715, %v699
      %v1741 = vsel %vm1722, %v1716, %v701
      %v1742 = vsel %vm1722, %v1717, %v703
      %v1743 = vsel %vm1722, %v1718, %v705
      %v1744 = vsel %vm1722, %v1719, %v707
      %v1745 = vsel %vm1722, %v1720, %v709
      %v1746 = vsel %vm1722, %v1721, %v711
      %vm1747 = vcmask 146432
      %v1748 = vsel %vm1747, %v1723, %v743
      %v1749 = vsel %vm1747, %v1724, %v745
      %v1750 = vsel %vm1747, %v1725, %v747
      %v1751 = vsel %vm1747, %v1726, %v749
      %v1752 = vsel %vm1747, %v1727, %v751
      %v1753 = vsel %vm1747, %v1728, %v753
      %v1754 = vsel %vm1747, %v1729, %v755
      %v1755 = vsel %vm1747, %v1730, %v757
      %v1756 = vsel %vm1747, %v1731, %v759
      %v1757 = vsel %vm1747, %v1732, %v761
      %v1758 = vsel %vm1747, %v1733, %v763
      %v1759 = vsel %vm1747, %v1734, %v765
      %v1760 = vsel %vm1747, %v1735, %v767
      %v1761 = vsel %vm1747, %v1736, %v769
      %v1762 = vsel %vm1747, %v1737, %v771
      %v1763 = vsel %vm1747, %v1738, %v773
      %v1764 = vsel %vm1747, %v1739, %v775
      %v1765 = vsel %vm1747, %v1740, %v777
      %v1766 = vsel %vm1747, %v1741, %v779
      %v1767 = vsel %vm1747, %v1742, %v781
      %v1768 = vsel %vm1747, %v1743, %v783
      %v1769 = vsel %vm1747, %v1744, %v785
      %v1770 = vsel %vm1747, %v1745, %v787
      %v1771 = vsel %vm1747, %v1746, %v789
      %vm1772 = vcmask 171008
      %v1773 = vsel %vm1772, %v1748, %v821
      %v1774 = vsel %vm1772, %v1749, %v823
      %v1775 = vsel %vm1772, %v1750, %v825
      %v1776 = vsel %vm1772, %v1751, %v827
      %v1777 = vsel %vm1772, %v1752, %v829
      %v1778 = vsel %vm1772, %v1753, %v831
      %v1779 = vsel %vm1772, %v1754, %v833
      %v1780 = vsel %vm1772, %v1755, %v835
      %v1781 = vsel %vm1772, %v1756, %v837
      %v1782 = vsel %vm1772, %v1757, %v839
      %v1783 = vsel %vm1772, %v1758, %v841
      %v1784 = vsel %vm1772, %v1759, %v843
      %v1785 = vsel %vm1772, %v1760, %v845
      %v1786 = vsel %vm1772, %v1761, %v847
      %v1787 = vsel %vm1772, %v1762, %v849
      %v1788 = vsel %vm1772, %v1763, %v851
      %v1789 = vsel %vm1772, %v1764, %v853
      %v1790 = vsel %vm1772, %v1765, %v855
      %v1791 = vsel %vm1772, %v1766, %v857
      %v1792 = vsel %vm1772, %v1767, %v859
      %v1793 = vsel %vm1772, %v1768, %v861
      %v1794 = vsel %vm1772, %v1769, %v863
      %v1795 = vsel %vm1772, %v1770, %v865
      %v1796 = vsel %vm1772, %v1771, %v867
      %vm1797 = vcmask 195584
      %v1798 = vsel %vm1797, %v1773, %v899
      %v1799 = vsel %vm1797, %v1774, %v901
      %v1800 = vsel %vm1797, %v1775, %v903
      %v1801 = vsel %vm1797, %v1776, %v905
      %v1802 = vsel %vm1797, %v1777, %v907
      %v1803 = vsel %vm1797, %v1778, %v909
      %v1804 = vsel %vm1797, %v1779, %v911
      %v1805 = vsel %vm1797, %v1780, %v913
      %v1806 = vsel %vm1797, %v1781, %v915
      %v1807 = vsel %vm1797, %v1782, %v917
      %v1808 = vsel %vm1797, %v1783, %v919
      %v1809 = vsel %vm1797, %v1784, %v921
      %v1810 = vsel %vm1797, %v1785, %v923
      %v1811 = vsel %vm1797, %v1786, %v925
      %v1812 = vsel %vm1797, %v1787, %v927
      %v1813 = vsel %vm1797, %v1788, %v929
      %v1814 = vsel %vm1797, %v1789, %v931
      %v1815 = vsel %vm1797, %v1790, %v933
      %v1816 = vsel %vm1797, %v1791, %v935
      %v1817 = vsel %vm1797, %v1792, %v937
      %v1818 = vsel %vm1797, %v1793, %v939
      %v1819 = vsel %vm1797, %v1794, %v941
      %v1820 = vsel %vm1797, %v1795, %v943
      %v1821 = vsel %vm1797, %v1796, %v945
      %vm1822 = vcmask 220160
      %v1823 = vsel %vm1822, %v1798, %v977
      %v1824 = vsel %vm1822, %v1799, %v979
      %v1825 = vsel %vm1822, %v1800, %v981
      %v1826 = vsel %vm1822, %v1801, %v983
      %v1827 = vsel %vm1822, %v1802, %v985
      %v1828 = vsel %vm1822, %v1803, %v987
      %v1829 = vsel %vm1822, %v1804, %v989
      %v1830 = vsel %vm1822, %v1805, %v991
      %v1831 = vsel %vm1822, %v1806, %v993
      %v1832 = vsel %vm1822, %v1807, %v995
      %v1833 = vsel %vm1822, %v1808, %v997
      %v1834 = vsel %vm1822, %v1809, %v999
      %v1835 = vsel %vm1822, %v1810, %v1001
      %v1836 = vsel %vm1822, %v1811, %v1003
      %v1837 = vsel %vm1822, %v1812, %v1005
      %v1838 = vsel %vm1822, %v1813, %v1007
      %v1839 = vsel %vm1822, %v1814, %v1009
      %v1840 = vsel %vm1822, %v1815, %v1011
      %v1841 = vsel %vm1822, %v1816, %v1013
      %v1842 = vsel %vm1822, %v1817, %v1015
      %v1843 = vsel %vm1822, %v1818, %v1017
      %v1844 = vsel %vm1822, %v1819, %v1019
      %v1845 = vsel %vm1822, %v1820, %v1021
      %v1846 = vsel %vm1822, %v1821, %v1023
      %vm1847 = vcmask 244736
      %v1848 = vsel %vm1847, %v1823, %v1110
      %v1849 = vsel %vm1847, %v1824, %v1112
      %v1850 = vsel %vm1847, %v1825, %v1114
      %v1851 = vsel %vm1847, %v1826, %v1116
      %v1852 = vsel %vm1847, %v1827, %v1118
      %v1853 = vsel %vm1847, %v1828, %v1120
      %v1854 = vsel %vm1847, %v1829, %v1122
      %v1855 = vsel %vm1847, %v1830, %v1124
      %v1856 = vsel %vm1847, %v1831, %v1126
      %v1857 = vsel %vm1847, %v1832, %v1128
      %v1858 = vsel %vm1847, %v1833, %v1130
      %v1859 = vsel %vm1847, %v1834, %v1132
      %v1860 = vsel %vm1847, %v1835, %v1134
      %v1861 = vsel %vm1847, %v1836, %v1136
      %v1862 = vsel %vm1847, %v1837, %v1138
      %v1863 = vsel %vm1847, %v1838, %v1140
      %v1864 = vsel %vm1847, %v1839, %v1142
      %v1865 = vsel %vm1847, %v1840, %v1144
      %v1866 = vsel %vm1847, %v1841, %v1146
      %v1867 = vsel %vm1847, %v1842, %v1148
      %v1868 = vsel %vm1847, %v1843, %v1150
      %v1869 = vsel %vm1847, %v1844, %v1152
      %v1870 = vsel %vm1847, %v1845, %v1154
      %v1871 = vsel %vm1847, %v1846, %v1156
      %vm1872 = vcmask 269312
      %v1873 = vsel %vm1872, %v1848, %v1187
      %v1874 = vsel %vm1872, %v1849, %v1189
      %v1875 = vsel %vm1872, %v1850, %v1191
      %v1876 = vsel %vm1872, %v1851, %v1193
      %v1877 = vsel %vm1872, %v1852, %v1195
      %v1878 = vsel %vm1872, %v1853, %v1197
      %v1879 = vsel %vm1872, %v1854, %v1199
      %v1880 = vsel %vm1872, %v1855, %v1201
      %v1881 = vsel %vm1872, %v1856, %v1203
      %v1882 = vsel %vm1872, %v1857, %v1205
      %v1883 = vsel %vm1872, %v1858, %v1207
      %v1884 = vsel %vm1872, %v1859, %v1209
      %v1885 = vsel %vm1872, %v1860, %v1211
      %v1886 = vsel %vm1872, %v1861, %v1213
      %v1887 = vsel %vm1872, %v1862, %v1215
      %v1888 = vsel %vm1872, %v1863, %v1217
      %v1889 = vsel %vm1872, %v1864, %v1219
      %v1890 = vsel %vm1872, %v1865, %v1221
      %v1891 = vsel %vm1872, %v1866, %v1223
      %v1892 = vsel %vm1872, %v1867, %v1225
      %v1893 = vsel %vm1872, %v1868, %v1227
      %v1894 = vsel %vm1872, %v1869, %v1229
      %v1895 = vsel %vm1872, %v1870, %v1231
      %v1896 = vsel %vm1872, %v1871, %v1233
      %vm1897 = vcmask 293888
      %v1898 = vsel %vm1897, %v1873, %v1264
      %v1899 = vsel %vm1897, %v1874, %v1266
      %v1900 = vsel %vm1897, %v1875, %v1268
      %v1901 = vsel %vm1897, %v1876, %v1270
      %v1902 = vsel %vm1897, %v1877, %v1272
      %v1903 = vsel %vm1897, %v1878, %v1274
      %v1904 = vsel %vm1897, %v1879, %v1276
      %v1905 = vsel %vm1897, %v1880, %v1278
      %v1906 = vsel %vm1897, %v1881, %v1280
      %v1907 = vsel %vm1897, %v1882, %v1282
      %v1908 = vsel %vm1897, %v1883, %v1284
      %v1909 = vsel %vm1897, %v1884, %v1286
      %v1910 = vsel %vm1897, %v1885, %v1288
      %v1911 = vsel %vm1897, %v1886, %v1290
      %v1912 = vsel %vm1897, %v1887, %v1292
      %v1913 = vsel %vm1897, %v1888, %v1294
      %v1914 = vsel %vm1897, %v1889, %v1296
      %v1915 = vsel %vm1897, %v1890, %v1298
      %v1916 = vsel %vm1897, %v1891, %v1300
      %v1917 = vsel %vm1897, %v1892, %v1302
      %v1918 = vsel %vm1897, %v1893, %v1304
      %v1919 = vsel %vm1897, %v1894, %v1306
      %v1920 = vsel %vm1897, %v1895, %v1308
      %v1921 = vsel %vm1897, %v1896, %v1310
      %vm1922 = vcmask 318464
      %v1923 = vsel %vm1922, %v1898, %v1341
      %v1924 = vsel %vm1922, %v1899, %v1343
      %v1925 = vsel %vm1922, %v1900, %v1345
      %v1926 = vsel %vm1922, %v1901, %v1347
      %v1927 = vsel %vm1922, %v1902, %v1349
      %v1928 = vsel %vm1922, %v1903, %v1351
      %v1929 = vsel %vm1922, %v1904, %v1353
      %v1930 = vsel %vm1922, %v1905, %v1355
      %v1931 = vsel %vm1922, %v1906, %v1357
      %v1932 = vsel %vm1922, %v1907, %v1359
      %v1933 = vsel %vm1922, %v1908, %v1361
      %v1934 = vsel %vm1922, %v1909, %v1363
      %v1935 = vsel %vm1922, %v1910, %v1365
      %v1936 = vsel %vm1922, %v1911, %v1367
      %v1937 = vsel %vm1922, %v1912, %v1369
      %v1938 = vsel %vm1922, %v1913, %v1371
      %v1939 = vsel %vm1922, %v1914, %v1373
      %v1940 = vsel %vm1922, %v1915, %v1375
      %v1941 = vsel %vm1922, %v1916, %v1377
      %v1942 = vsel %vm1922, %v1917, %v1379
      %v1943 = vsel %vm1922, %v1918, %v1381
      %v1944 = vsel %vm1922, %v1919, %v1383
      %v1945 = vsel %vm1922, %v1920, %v1385
      %v1946 = vsel %vm1922, %v1921, %v1387
      %vm1947 = vcmask 343040
      %v1948 = vsel %vm1947, %v1923, %v1418
      %v1949 = vsel %vm1947, %v1924, %v1420
      %v1950 = vsel %vm1947, %v1925, %v1422
      %v1951 = vsel %vm1947, %v1926, %v1424
      %v1952 = vsel %vm1947, %v1927, %v1426
      %v1953 = vsel %vm1947, %v1928, %v1428
      %v1954 = vsel %vm1947, %v1929, %v1430
      %v1955 = vsel %vm1947, %v1930, %v1432
      %v1956 = vsel %vm1947, %v1931, %v1434
      %v1957 = vsel %vm1947, %v1932, %v1436
      %v1958 = vsel %vm1947, %v1933, %v1438
      %v1959 = vsel %vm1947, %v1934, %v1440
      %v1960 = vsel %vm1947, %v1935, %v1442
      %v1961 = vsel %vm1947, %v1936, %v1444
      %v1962 = vsel %vm1947, %v1937, %v1446
      %v1963 = vsel %vm1947, %v1938, %v1448
      %v1964 = vsel %vm1947, %v1939, %v1450
      %v1965 = vsel %vm1947, %v1940, %v1452
      %v1966 = vsel %vm1947, %v1941, %v1454
      %v1967 = vsel %vm1947, %v1942, %v1456
      %v1968 = vsel %vm1947, %v1943, %v1458
      %v1969 = vsel %vm1947, %v1944, %v1460
      %v1970 = vsel %vm1947, %v1945, %v1462
      %v1971 = vsel %vm1947, %v1946, %v1464
      %vm1972 = vcmask 367616
      %v1973 = vsel %vm1972, %v1948, %v1551
      %v1974 = vsel %vm1972, %v1949, %v1553
      %v1975 = vsel %vm1972, %v1950, %v1555
      %v1976 = vsel %vm1972, %v1951, %v1557
      %v1977 = vsel %vm1972, %v1952, %v1559
      %v1978 = vsel %vm1972, %v1953, %v1561
      %v1979 = vsel %vm1972, %v1954, %v1563
      %v1980 = vsel %vm1972, %v1955, %v1565
      %v1981 = vsel %vm1972, %v1956, %v1567
      %v1982 = vsel %vm1972, %v1957, %v1569
      %v1983 = vsel %vm1972, %v1958, %v1571
      %v1984 = vsel %vm1972, %v1959, %v1573
      %v1985 = vsel %vm1972, %v1960, %v1575
      %v1986 = vsel %vm1972, %v1961, %v1577
      %v1987 = vsel %vm1972, %v1962, %v1579
      %v1988 = vsel %vm1972, %v1963, %v1581
      %v1989 = vsel %vm1972, %v1964, %v1583
      %v1990 = vsel %vm1972, %v1965, %v1585
      %v1991 = vsel %vm1972, %v1966, %v1587
      %v1992 = vsel %vm1972, %v1967, %v1589
      %v1993 = vsel %vm1972, %v1968, %v1591
      %v1994 = vsel %vm1972, %v1969, %v1593
      %v1995 = vsel %vm1972, %v1970, %v1595
      %v1996 = vsel %vm1972, %v1971, %v1597
      %1997 = vrot.lane.b32.xlu0 %v231, 3
      %v1998 = vpop.permute.xlu0 %1997
      %1999 = vrot.lane.b32.xlu0 %v234, 3
      %v2000 = vpop.permute.xlu0 %1999
      %2001 = vrot.lane.b32.xlu0 %v237, 3
      %v2002 = vpop.permute.xlu0 %2001
      %2003 = vrot.lane.b32.xlu0 %v240, 3
      %v2004 = vpop.permute.xlu0 %2003
      %2005 = vrot.lane.b32.xlu0 %v243, 3
      %v2006 = vpop.permute.xlu0 %2005
      %2007 = vrot.lane.b32.xlu0 %v246, 3
      %v2008 = vpop.permute.xlu0 %2007
      %2009 = vrot.lane.b32.xlu0 %v249, 3
      %v2010 = vpop.permute.xlu0 %2009
      %2011 = vrot.lane.b32.xlu0 %v252, 3
      %v2012 = vpop.permute.xlu0 %2011
      %2013 = vrot.lane.b32.xlu0 %v255, 3
      %v2014 = vpop.permute.xlu0 %2013
      %2015 = vrot.lane.b32.xlu0 %v258, 3
      %v2016 = vpop.permute.xlu0 %2015
      %2017 = vrot.lane.b32.xlu0 %v261, 3
      %v2018 = vpop.permute.xlu0 %2017
      %2019 = vrot.lane.b32.xlu0 %v262, 3
      %v2020 = vpop.permute.xlu0 %2019
      %2021 = vrot.lane.b32.xlu0 %v263, 3
      %v2022 = vpop.permute.xlu0 %2021
      %2023 = vrot.lane.b32.xlu0 %v264, 3
      %v2024 = vpop.permute.xlu0 %2023
      %2039 = vrot.lane.b32.xlu0 %v234, 6
      %v2040 = vpop.permute.xlu0 %2039
      %2041 = vrot.lane.b32.xlu0 %v237, 6
      %v2042 = vpop.permute.xlu0 %2041
      %2043 = vrot.lane.b32.xlu0 %v240, 6
      %v2044 = vpop.permute.xlu0 %2043
      %2045 = vrot.lane.b32.xlu0 %v243, 6
      %v2046 = vpop.permute.xlu0 %2045
      %2047 = vrot.lane.b32.xlu0 %v246, 6
      %v2048 = vpop.permute.xlu0 %2047
      %2049 = vrot.lane.b32.xlu0 %v249, 6
      %v2050 = vpop.permute.xlu0 %2049
      %2051 = vrot.lane.b32.xlu0 %v252, 6
      %v2052 = vpop.permute.xlu0 %2051
      %2053 = vrot.lane.b32.xlu0 %v255, 6
      %v2054 = vpop.permute.xlu0 %2053
      %2055 = vrot.lane.b32.xlu0 %v258, 6
      %v2056 = vpop.permute.xlu0 %2055
      %2057 = vrot.lane.b32.xlu0 %v261, 6
      %v2058 = vpop.permute.xlu0 %2057
      %2059 = vrot.lane.b32.xlu0 %v264, 6
      %v2060 = vpop.permute.xlu0 %2059
      %2061 = vrot.lane.b32.xlu0 %v265, 6
      %v2062 = vpop.permute.xlu0 %2061
      %2063 = vrot.lane.b32.xlu0 %v266, 6
      %v2064 = vpop.permute.xlu0 %2063
      %2065 = vrot.lane.b32.xlu0 %v267, 6
      %v2066 = vpop.permute.xlu0 %2065
      %2081 = vrot.lane.b32.xlu0 %v237, 9
      %v2082 = vpop.permute.xlu0 %2081
      %2083 = vrot.lane.b32.xlu0 %v240, 9
      %v2084 = vpop.permute.xlu0 %2083
      %2085 = vrot.lane.b32.xlu0 %v243, 9
      %v2086 = vpop.permute.xlu0 %2085
      %2087 = vrot.lane.b32.xlu0 %v246, 9
      %v2088 = vpop.permute.xlu0 %2087
      %2089 = vrot.lane.b32.xlu0 %v249, 9
      %v2090 = vpop.permute.xlu0 %2089
      %2091 = vrot.lane.b32.xlu0 %v252, 9
      %v2092 = vpop.permute.xlu0 %2091
      %2093 = vrot.lane.b32.xlu0 %v255, 9
      %v2094 = vpop.permute.xlu0 %2093
      %2095 = vrot.lane.b32.xlu0 %v258, 9
      %v2096 = vpop.permute.xlu0 %2095
      %2097 = vrot.lane.b32.xlu0 %v261, 9
      %v2098 = vpop.permute.xlu0 %2097
      %2099 = vrot.lane.b32.xlu0 %v264, 9
      %v2100 = vpop.permute.xlu0 %2099
      %2101 = vrot.lane.b32.xlu0 %v267, 9
      %v2102 = vpop.permute.xlu0 %2101
      %2103 = vrot.lane.b32.xlu0 %v268, 9
      %v2104 = vpop.permute.xlu0 %2103
      %2105 = vrot.lane.b32.xlu0 %v269, 9
      %v2106 = vpop.permute.xlu0 %2105
      %2107 = vrot.lane.b32.xlu0 %v270, 9
      %v2108 = vpop.permute.xlu0 %2107
      %2123 = vrot.lane.b32.xlu0 %v606, 12
      %v2124 = vpop.permute.xlu0 %2123
      %2125 = vrot.lane.b32.xlu0 %v608, 12
      %v2126 = vpop.permute.xlu0 %2125
      %2127 = vrot.lane.b32.xlu0 %v607, 12
      %v2128 = vpop.permute.xlu0 %2127
      %2129 = vrot.lane.b32.xlu0 %v611, 12
      %v2130 = vpop.permute.xlu0 %2129
      %2131 = vrot.lane.b32.xlu0 %v613, 12
      %v2132 = vpop.permute.xlu0 %2131
      %2133 = vrot.lane.b32.xlu0 %v612, 12
      %v2134 = vpop.permute.xlu0 %2133
      %2135 = vrot.lane.b32.xlu0 %v616, 12
      %v2136 = vpop.permute.xlu0 %2135
      %2137 = vrot.lane.b32.xlu0 %v618, 12
      %v2138 = vpop.permute.xlu0 %2137
      %2139 = vrot.lane.b32.xlu0 %v617, 12
      %v2140 = vpop.permute.xlu0 %2139
      %2141 = vrot.lane.b32.xlu0 %v621, 12
      %v2142 = vpop.permute.xlu0 %2141
      %2143 = vrot.lane.b32.xlu0 %v623, 12
      %v2144 = vpop.permute.xlu0 %2143
      %2145 = vrot.lane.b32.xlu0 %v622, 12
      %v2146 = vpop.permute.xlu0 %2145
      %2147 = vrot.lane.b32.xlu0 %v626, 12
      %v2148 = vpop.permute.xlu0 %2147
      %2149 = vrot.lane.b32.xlu0 %v628, 12
      %v2150 = vpop.permute.xlu0 %2149
      %2151 = vrot.lane.b32.xlu0 %v627, 12
      %v2152 = vpop.permute.xlu0 %2151
      %2153 = vrot.lane.b32.xlu0 %v631, 12
      %v2154 = vpop.permute.xlu0 %2153
      %2155 = vrot.lane.b32.xlu0 %v633, 12
      %v2156 = vpop.permute.xlu0 %2155
      %2157 = vrot.lane.b32.xlu0 %v632, 12
      %v2158 = vpop.permute.xlu0 %2157
      %2159 = vrot.lane.b32.xlu0 %v636, 12
      %v2160 = vpop.permute.xlu0 %2159
      %2161 = vrot.lane.b32.xlu0 %v638, 12
      %v2162 = vpop.permute.xlu0 %2161
      %2163 = vrot.lane.b32.xlu0 %v637, 12
      %v2164 = vpop.permute.xlu0 %2163
      %2165 = vrot.lane.b32.xlu0 %v641, 12
      %v2166 = vpop.permute.xlu0 %2165
      %2167 = vrot.lane.b32.xlu0 %v643, 12
      %v2168 = vpop.permute.xlu0 %2167
      %2169 = vrot.lane.b32.xlu0 %v642, 12
      %v2170 = vpop.permute.xlu0 %2169
      %2171 = vrot.lane.b32.xlu0 %v646, 12
      %v2172 = vpop.permute.xlu0 %2171
      %2173 = vrot.lane.b32.xlu0 %v648, 12
      %v2174 = vpop.permute.xlu0 %2173
      %2175 = vrot.lane.b32.xlu0 %v647, 12
      %v2176 = vpop.permute.xlu0 %2175
      %2177 = vrot.lane.b32.xlu0 %v651, 12
      %v2178 = vpop.permute.xlu0 %2177
      %2179 = vrot.lane.b32.xlu0 %v653, 12
      %v2180 = vpop.permute.xlu0 %2179
      %2181 = vrot.lane.b32.xlu0 %v652, 12
      %v2182 = vpop.permute.xlu0 %2181
      %2183 = vrot.lane.b32.xlu0 %v656, 12
      %v2184 = vpop.permute.xlu0 %2183
      %2185 = vrot.lane.b32.xlu0 %v658, 12
      %v2186 = vpop.permute.xlu0 %2185
      %2187 = vrot.lane.b32.xlu0 %v657, 12
      %v2188 = vpop.permute.xlu0 %2187
      %2189 = vrot.lane.b32.xlu0 %v661, 12
      %v2190 = vpop.permute.xlu0 %2189
      %2191 = vrot.lane.b32.xlu0 %v663, 12
      %v2192 = vpop.permute.xlu0 %2191
      %2193 = vrot.lane.b32.xlu0 %v662, 12
      %v2194 = vpop.permute.xlu0 %2193
      %2231 = vrot.lane.b32.xlu0 %v612, 15
      %v2232 = vpop.permute.xlu0 %2231
      %2233 = vrot.lane.b32.xlu0 %v617, 15
      %v2234 = vpop.permute.xlu0 %2233
      %2235 = vrot.lane.b32.xlu0 %v622, 15
      %v2236 = vpop.permute.xlu0 %2235
      %2237 = vrot.lane.b32.xlu0 %v627, 15
      %v2238 = vpop.permute.xlu0 %2237
      %2239 = vrot.lane.b32.xlu0 %v632, 15
      %v2240 = vpop.permute.xlu0 %2239
      %2241 = vrot.lane.b32.xlu0 %v637, 15
      %v2242 = vpop.permute.xlu0 %2241
      %2243 = vrot.lane.b32.xlu0 %v642, 15
      %v2244 = vpop.permute.xlu0 %2243
      %2245 = vrot.lane.b32.xlu0 %v647, 15
      %v2246 = vpop.permute.xlu0 %2245
      %2247 = vrot.lane.b32.xlu0 %v652, 15
      %v2248 = vpop.permute.xlu0 %2247
      %2249 = vrot.lane.b32.xlu0 %v657, 15
      %v2250 = vpop.permute.xlu0 %2249
      %2251 = vrot.lane.b32.xlu0 %v662, 15
      %v2252 = vpop.permute.xlu0 %2251
      %2253 = vrot.lane.b32.xlu0 %v739, 15
      %v2254 = vpop.permute.xlu0 %2253
      %2255 = vrot.lane.b32.xlu0 %v741, 15
      %v2256 = vpop.permute.xlu0 %2255
      %2257 = vrot.lane.b32.xlu0 %v740, 15
      %v2258 = vpop.permute.xlu0 %2257
      %2273 = vrot.lane.b32.xlu0 %v617, 18
      %v2274 = vpop.permute.xlu0 %2273
      %2275 = vrot.lane.b32.xlu0 %v622, 18
      %v2276 = vpop.permute.xlu0 %2275
      %2277 = vrot.lane.b32.xlu0 %v627, 18
      %v2278 = vpop.permute.xlu0 %2277
      %2279 = vrot.lane.b32.xlu0 %v632, 18
      %v2280 = vpop.permute.xlu0 %2279
      %2281 = vrot.lane.b32.xlu0 %v637, 18
      %v2282 = vpop.permute.xlu0 %2281
      %2283 = vrot.lane.b32.xlu0 %v642, 18
      %v2284 = vpop.permute.xlu0 %2283
      %2285 = vrot.lane.b32.xlu0 %v647, 18
      %v2286 = vpop.permute.xlu0 %2285
      %2287 = vrot.lane.b32.xlu0 %v652, 18
      %v2288 = vpop.permute.xlu0 %2287
      %2289 = vrot.lane.b32.xlu0 %v657, 18
      %v2290 = vpop.permute.xlu0 %2289
      %2291 = vrot.lane.b32.xlu0 %v662, 18
      %v2292 = vpop.permute.xlu0 %2291
      %2293 = vrot.lane.b32.xlu0 %v740, 18
      %v2294 = vpop.permute.xlu0 %2293
      %2295 = vrot.lane.b32.xlu0 %v817, 18
      %v2296 = vpop.permute.xlu0 %2295
      %2297 = vrot.lane.b32.xlu0 %v819, 18
      %v2298 = vpop.permute.xlu0 %2297
      %2299 = vrot.lane.b32.xlu0 %v818, 18
      %v2300 = vpop.permute.xlu0 %2299
      %2315 = vrot.lane.b32.xlu0 %v622, 21
      %v2316 = vpop.permute.xlu0 %2315
      %2317 = vrot.lane.b32.xlu0 %v627, 21
      %v2318 = vpop.permute.xlu0 %2317
      %2319 = vrot.lane.b32.xlu0 %v632, 21
      %v2320 = vpop.permute.xlu0 %2319
      %2321 = vrot.lane.b32.xlu0 %v637, 21
      %v2322 = vpop.permute.xlu0 %2321
      %2323 = vrot.lane.b32.xlu0 %v642, 21
      %v2324 = vpop.permute.xlu0 %2323
      %2325 = vrot.lane.b32.xlu0 %v647, 21
      %v2326 = vpop.permute.xlu0 %2325
      %2327 = vrot.lane.b32.xlu0 %v652, 21
      %v2328 = vpop.permute.xlu0 %2327
      %2329 = vrot.lane.b32.xlu0 %v657, 21
      %v2330 = vpop.permute.xlu0 %2329
      %2331 = vrot.lane.b32.xlu0 %v662, 21
      %v2332 = vpop.permute.xlu0 %2331
      %2333 = vrot.lane.b32.xlu0 %v740, 21
      %v2334 = vpop.permute.xlu0 %2333
      %2335 = vrot.lane.b32.xlu0 %v818, 21
      %v2336 = vpop.permute.xlu0 %2335
      %2337 = vrot.lane.b32.xlu0 %v895, 21
      %v2338 = vpop.permute.xlu0 %2337
      %2339 = vrot.lane.b32.xlu0 %v897, 21
      %v2340 = vpop.permute.xlu0 %2339
      %2341 = vrot.lane.b32.xlu0 %v896, 21
      %v2342 = vpop.permute.xlu0 %2341
      %2357 = vrot.lane.b32.xlu0 %v627, 24
      %v2358 = vpop.permute.xlu0 %2357
      %2359 = vrot.lane.b32.xlu0 %v632, 24
      %v2360 = vpop.permute.xlu0 %2359
      %2361 = vrot.lane.b32.xlu0 %v637, 24
      %v2362 = vpop.permute.xlu0 %2361
      %2363 = vrot.lane.b32.xlu0 %v642, 24
      %v2364 = vpop.permute.xlu0 %2363
      %2365 = vrot.lane.b32.xlu0 %v647, 24
      %v2366 = vpop.permute.xlu0 %2365
      %2367 = vrot.lane.b32.xlu0 %v652, 24
      %v2368 = vpop.permute.xlu0 %2367
      %2369 = vrot.lane.b32.xlu0 %v657, 24
      %v2370 = vpop.permute.xlu0 %2369
      %2371 = vrot.lane.b32.xlu0 %v662, 24
      %v2372 = vpop.permute.xlu0 %2371
      %2373 = vrot.lane.b32.xlu0 %v740, 24
      %v2374 = vpop.permute.xlu0 %2373
      %2375 = vrot.lane.b32.xlu0 %v818, 24
      %v2376 = vpop.permute.xlu0 %2375
      %2377 = vrot.lane.b32.xlu0 %v896, 24
      %v2378 = vpop.permute.xlu0 %2377
      %2379 = vrot.lane.b32.xlu0 %v973, 24
      %v2380 = vpop.permute.xlu0 %2379
      %2381 = vrot.lane.b32.xlu0 %v975, 24
      %v2382 = vpop.permute.xlu0 %2381
      %2383 = vrot.lane.b32.xlu0 %v974, 24
      %v2384 = vpop.permute.xlu0 %2383
      %v2399 = vsel %vm1622, %v228, %v1998
      %v2400 = vsel %vm1622, %v231, %v2000
      %v2401 = vsel %vm1622, %v234, %v2002
      %v2402 = vsel %vm1622, %v237, %v2004
      %v2403 = vsel %vm1622, %v240, %v2006
      %v2404 = vsel %vm1622, %v243, %v2008
      %v2405 = vsel %vm1622, %v246, %v2010
      %v2406 = vsel %vm1622, %v249, %v2012
      %v2407 = vsel %vm1622, %v252, %v2014
      %v2408 = vsel %vm1622, %v255, %v2016
      %v2409 = vsel %vm1622, %v258, %v2018
      %v2410 = vsel %vm1622, %v259, %v2020
      %v2411 = vsel %vm1622, %v260, %v2022
      %v2412 = vsel %vm1622, %v261, %v2024
      %v2413 = vsel %vm1647, %v2399, %v2040
      %v2414 = vsel %vm1647, %v2400, %v2042
      %v2415 = vsel %vm1647, %v2401, %v2044
      %v2416 = vsel %vm1647, %v2402, %v2046
      %v2417 = vsel %vm1647, %v2403, %v2048
      %v2418 = vsel %vm1647, %v2404, %v2050
      %v2419 = vsel %vm1647, %v2405, %v2052
      %v2420 = vsel %vm1647, %v2406, %v2054
      %v2421 = vsel %vm1647, %v2407, %v2056
      %v2422 = vsel %vm1647, %v2408, %v2058
      %v2423 = vsel %vm1647, %v2409, %v2060
      %v2424 = vsel %vm1647, %v2410, %v2062
      %v2425 = vsel %vm1647, %v2411, %v2064
      %v2426 = vsel %vm1647, %v2412, %v2066
      %v2427 = vsel %vm1672, %v2413, %v2082
      %v2428 = vsel %vm1672, %v2414, %v2084
      %v2429 = vsel %vm1672, %v2415, %v2086
      %v2430 = vsel %vm1672, %v2416, %v2088
      %v2431 = vsel %vm1672, %v2417, %v2090
      %v2432 = vsel %vm1672, %v2418, %v2092
      %v2433 = vsel %vm1672, %v2419, %v2094
      %v2434 = vsel %vm1672, %v2420, %v2096
      %v2435 = vsel %vm1672, %v2421, %v2098
      %v2436 = vsel %vm1672, %v2422, %v2100
      %v2437 = vsel %vm1672, %v2423, %v2102
      %v2438 = vsel %vm1672, %v2424, %v2104
      %v2439 = vsel %vm1672, %v2425, %v2106
      %v2440 = vsel %vm1672, %v2426, %v2108
      %v2441 = vsel %vm1697, %v1675, %v2124
      %v2442 = vsel %vm1697, %v1676, %v2126
      %v2443 = vsel %vm1697, %v2427, %v2128
      %v2444 = vsel %vm1697, %v1677, %v2130
      %v2445 = vsel %vm1697, %v1678, %v2132
      %v2446 = vsel %vm1697, %v2428, %v2134
      %v2447 = vsel %vm1697, %v1679, %v2136
      %v2448 = vsel %vm1697, %v1680, %v2138
      %v2449 = vsel %vm1697, %v2429, %v2140
      %v2450 = vsel %vm1697, %v1681, %v2142
      %v2451 = vsel %vm1697, %v1682, %v2144
      %v2452 = vsel %vm1697, %v2430, %v2146
      %v2453 = vsel %vm1697, %v1683, %v2148
      %v2454 = vsel %vm1697, %v1684, %v2150
      %v2455 = vsel %vm1697, %v2431, %v2152
      %v2456 = vsel %vm1697, %v1685, %v2154
      %v2457 = vsel %vm1697, %v1686, %v2156
      %v2458 = vsel %vm1697, %v2432, %v2158
      %v2459 = vsel %vm1697, %v1687, %v2160
      %v2460 = vsel %vm1697, %v1688, %v2162
      %v2461 = vsel %vm1697, %v2433, %v2164
      %v2462 = vsel %vm1697, %v1689, %v2166
      %v2463 = vsel %vm1697, %v1690, %v2168
      %v2464 = vsel %vm1697, %v2434, %v2170
      %v2465 = vsel %vm1697, %v1691, %v2172
      %v2466 = vsel %vm1697, %v1692, %v2174
      %v2467 = vsel %vm1697, %v2435, %v2176
      %v2468 = vsel %vm1697, %v1693, %v2178
      %v2469 = vsel %vm1697, %v1694, %v2180
      %v2470 = vsel %vm1697, %v2436, %v2182
      %v2471 = vsel %vm1697, %v1695, %v2184
      %v2472 = vsel %vm1697, %v1696, %v2186
      %v2473 = vsel %vm1697, %v2437, %v2188
      %v2474 = vsel %vm1697, %v2438, %v2190
      %v2475 = vsel %vm1697, %v2439, %v2192
      %v2476 = vsel %vm1697, %v2440, %v2194
      %v2477 = vsel %vm1722, %v2441, %v669
      %v2478 = vsel %vm1722, %v2442, %v671
      %v2479 = vsel %vm1722, %v2443, %v2232
      %v2480 = vsel %vm1722, %v2444, %v673
      %v2481 = vsel %vm1722, %v2445, %v675
      %v2482 = vsel %vm1722, %v2446, %v2234
      %v2483 = vsel %vm1722, %v2447, %v677
      %v2484 = vsel %vm1722, %v2448, %v679
      %v2485 = vsel %vm1722, %v2449, %v2236
      %v2486 = vsel %vm1722, %v2450, %v681
      %v2487 = vsel %vm1722, %v2451, %v683
      %v2488 = vsel %vm1722, %v2452, %v2238
      %v2489 = vsel %vm1722, %v2453, %v685
      %v2490 = vsel %vm1722, %v2454, %v687
      %v2491 = vsel %vm1722, %v2455, %v2240
      %v2492 = vsel %vm1722, %v2456, %v689
      %v2493 = vsel %vm1722, %v2457, %v691
      %v2494 = vsel %vm1722, %v2458, %v2242
      %v2495 = vsel %vm1722, %v2459, %v693
      %v2496 = vsel %vm1722, %v2460, %v695
      %v2497 = vsel %vm1722, %v2461, %v2244
      %v2498 = vsel %vm1722, %v2462, %v697
      %v2499 = vsel %vm1722, %v2463, %v699
      %v2500 = vsel %vm1722, %v2464, %v2246
      %v2501 = vsel %vm1722, %v2465, %v701
      %v2502 = vsel %vm1722, %v2466, %v703
      %v2503 = vsel %vm1722, %v2467, %v2248
      %v2504 = vsel %vm1722, %v2468, %v705
      %v2505 = vsel %vm1722, %v2469, %v707
      %v2506 = vsel %vm1722, %v2470, %v2250
      %v2507 = vsel %vm1722, %v2471, %v709
      %v2508 = vsel %vm1722, %v2472, %v711
      %v2509 = vsel %vm1722, %v2473, %v2252
      %v2510 = vsel %vm1722, %v2474, %v2254
      %v2511 = vsel %vm1722, %v2475, %v2256
      %v2512 = vsel %vm1722, %v2476, %v2258
      %v2513 = vsel %vm1747, %v2477, %v747
      %v2514 = vsel %vm1747, %v2478, %v749
      %v2515 = vsel %vm1747, %v2479, %v2274
      %v2516 = vsel %vm1747, %v2480, %v751
      %v2517 = vsel %vm1747, %v2481, %v753
      %v2518 = vsel %vm1747, %v2482, %v2276
      %v2519 = vsel %vm1747, %v2483, %v755
      %v2520 = vsel %vm1747, %v2484, %v757
      %v2521 = vsel %vm1747, %v2485, %v2278
      %v2522 = vsel %vm1747, %v2486, %v759
      %v2523 = vsel %vm1747, %v2487, %v761
      %v2524 = vsel %vm1747, %v2488, %v2280
      %v2525 = vsel %vm1747, %v2489, %v763
      %v2526 = vsel %vm1747, %v2490, %v765
      %v2527 = vsel %vm1747, %v2491, %v2282
      %v2528 = vsel %vm1747, %v2492, %v767
      %v2529 = vsel %vm1747, %v2493, %v769
      %v2530 = vsel %vm1747, %v2494, %v2284
      %v2531 = vsel %vm1747, %v2495, %v771
      %v2532 = vsel %vm1747, %v2496, %v773
      %v2533 = vsel %vm1747, %v2497, %v2286
      %v2534 = vsel %vm1747, %v2498, %v775
      %v2535 = vsel %vm1747, %v2499, %v777
      %v2536 = vsel %vm1747, %v2500, %v2288
      %v2537 = vsel %vm1747, %v2501, %v779
      %v2538 = vsel %vm1747, %v2502, %v781
      %v2539 = vsel %vm1747, %v2503, %v2290
      %v2540 = vsel %vm1747, %v2504, %v783
      %v2541 = vsel %vm1747, %v2505, %v785
      %v2542 = vsel %vm1747, %v2506, %v2292
      %v2543 = vsel %vm1747, %v2507, %v787
      %v2544 = vsel %vm1747, %v2508, %v789
      %v2545 = vsel %vm1747, %v2509, %v2294
      %v2546 = vsel %vm1747, %v2510, %v2296
      %v2547 = vsel %vm1747, %v2511, %v2298
      %v2548 = vsel %vm1747, %v2512, %v2300
      %v2549 = vsel %vm1772, %v2513, %v825
      %v2550 = vsel %vm1772, %v2514, %v827
      %v2551 = vsel %vm1772, %v2515, %v2316
      %v2552 = vsel %vm1772, %v2516, %v829
      %v2553 = vsel %vm1772, %v2517, %v831
      %v2554 = vsel %vm1772, %v2518, %v2318
      %v2555 = vsel %vm1772, %v2519, %v833
      %v2556 = vsel %vm1772, %v2520, %v835
      %v2557 = vsel %vm1772, %v2521, %v2320
      %v2558 = vsel %vm1772, %v2522, %v837
      %v2559 = vsel %vm1772, %v2523, %v839
      %v2560 = vsel %vm1772, %v2524, %v2322
      %v2561 = vsel %vm1772, %v2525, %v841
      %v2562 = vsel %vm1772, %v2526, %v843
      %v2563 = vsel %vm1772, %v2527, %v2324
      %v2564 = vsel %vm1772, %v2528, %v845
      %v2565 = vsel %vm1772, %v2529, %v847
      %v2566 = vsel %vm1772, %v2530, %v2326
      %v2567 = vsel %vm1772, %v2531, %v849
      %v2568 = vsel %vm1772, %v2532, %v851
      %v2569 = vsel %vm1772, %v2533, %v2328
      %v2570 = vsel %vm1772, %v2534, %v853
      %v2571 = vsel %vm1772, %v2535, %v855
      %v2572 = vsel %vm1772, %v2536, %v2330
      %v2573 = vsel %vm1772, %v2537, %v857
      %v2574 = vsel %vm1772, %v2538, %v859
      %v2575 = vsel %vm1772, %v2539, %v2332
      %v2576 = vsel %vm1772, %v2540, %v861
      %v2577 = vsel %vm1772, %v2541, %v863
      %v2578 = vsel %vm1772, %v2542, %v2334
      %v2579 = vsel %vm1772, %v2543, %v865
      %v2580 = vsel %vm1772, %v2544, %v867
      %v2581 = vsel %vm1772, %v2545, %v2336
      %v2582 = vsel %vm1772, %v2546, %v2338
      %v2583 = vsel %vm1772, %v2547, %v2340
      %v2584 = vsel %vm1772, %v2548, %v2342
      %v2585 = vsel %vm1797, %v2549, %v903
      %v2586 = vsel %vm1797, %v2550, %v905
      %v2587 = vsel %vm1797, %v2551, %v2358
      %v2588 = vsel %vm1797, %v2552, %v907
      %v2589 = vsel %vm1797, %v2553, %v909
      %v2590 = vsel %vm1797, %v2554, %v2360
      %v2591 = vsel %vm1797, %v2555, %v911
      %v2592 = vsel %vm1797, %v2556, %v913
      %v2593 = vsel %vm1797, %v2557, %v2362
      %v2594 = vsel %vm1797, %v2558, %v915
      %v2595 = vsel %vm1797, %v2559, %v917
      %v2596 = vsel %vm1797, %v2560, %v2364
      %v2597 = vsel %vm1797, %v2561, %v919
      %v2598 = vsel %vm1797, %v2562, %v921
      %v2599 = vsel %vm1797, %v2563, %v2366
      %v2600 = vsel %vm1797, %v2564, %v923
      %v2601 = vsel %vm1797, %v2565, %v925
      %v2602 = vsel %vm1797, %v2566, %v2368
      %v2603 = vsel %vm1797, %v2567, %v927
      %v2604 = vsel %vm1797, %v2568, %v929
      %v2605 = vsel %vm1797, %v2569, %v2370
      %v2606 = vsel %vm1797, %v2570, %v931
      %v2607 = vsel %vm1797, %v2571, %v933
      %v2608 = vsel %vm1797, %v2572, %v2372
      %v2609 = vsel %vm1797, %v2573, %v935
      %v2610 = vsel %vm1797, %v2574, %v937
      %v2611 = vsel %vm1797, %v2575, %v2374
      %v2612 = vsel %vm1797, %v2576, %v939
      %v2613 = vsel %vm1797, %v2577, %v941
      %v2614 = vsel %vm1797, %v2578, %v2376
      %v2615 = vsel %vm1797, %v2579, %v943
      %v2616 = vsel %vm1797, %v2580, %v945
      %v2617 = vsel %vm1797, %v2581, %v2378
      %v2618 = vsel %vm1797, %v2582, %v2380
      %v2619 = vsel %vm1797, %v2583, %v2382
      %v2620 = vsel %vm1797, %v2584, %v2384
      %v2657 = vrot.slane %v2585, 3
      %v2658 = vrot.slane %v2586, 3
      %v2659 = vsel %vm1489, %v2657, %v2658
      %v2660 = vrot.slane %v2587, 3
      %v2661 = vsel %vm1489, %v2658, %v2660
      %v2662 = vrot.slane %v2588, 3
      %v2663 = vrot.slane %v2589, 3
      %v2664 = vsel %vm1489, %v2662, %v2663
      %v2665 = vrot.slane %v2590, 3
      %v2666 = vsel %vm1489, %v2663, %v2665
      %v2667 = vrot.slane %v2591, 3
      %v2668 = vrot.slane %v2592, 3
      %v2669 = vsel %vm1489, %v2667, %v2668
      %v2670 = vrot.slane %v2593, 3
      %v2671 = vsel %vm1489, %v2668, %v2670
      %v2672 = vrot.slane %v2594, 3
      %v2673 = vrot.slane %v2595, 3
      %v2674 = vsel %vm1489, %v2672, %v2673
      %v2675 = vrot.slane %v2596, 3
      %v2676 = vsel %vm1489, %v2673, %v2675
      %v2677 = vrot.slane %v2597, 3
      %v2678 = vrot.slane %v2598, 3
      %v2679 = vsel %vm1489, %v2677, %v2678
      %v2680 = vrot.slane %v2599, 3
      %v2681 = vsel %vm1489, %v2678, %v2680
      %v2682 = vrot.slane %v2600, 3
      %v2683 = vrot.slane %v2601, 3
      %v2684 = vsel %vm1489, %v2682, %v2683
      %v2685 = vrot.slane %v2602, 3
      %v2686 = vsel %vm1489, %v2683, %v2685
      %v2687 = vrot.slane %v2603, 3
      %v2688 = vrot.slane %v2604, 3
      %v2689 = vsel %vm1489, %v2687, %v2688
      %v2690 = vrot.slane %v2605, 3
      %v2691 = vsel %vm1489, %v2688, %v2690
      %v2692 = vrot.slane %v2606, 3
      %v2693 = vrot.slane %v2607, 3
      %v2694 = vsel %vm1489, %v2692, %v2693
      %v2695 = vrot.slane %v2608, 3
      %v2696 = vsel %vm1489, %v2693, %v2695
      %v2697 = vrot.slane %v2609, 3
      %v2698 = vrot.slane %v2610, 3
      %v2699 = vsel %vm1489, %v2697, %v2698
      %v2700 = vrot.slane %v2611, 3
      %v2701 = vsel %vm1489, %v2698, %v2700
      %v2702 = vrot.slane %v2612, 3
      %v2703 = vrot.slane %v2613, 3
      %v2704 = vsel %vm1489, %v2702, %v2703
      %v2705 = vrot.slane %v2614, 3
      %v2706 = vsel %vm1489, %v2703, %v2705
      %v2707 = vrot.slane %v2615, 3
      %v2708 = vrot.slane %v2616, 3
      %v2709 = vsel %vm1489, %v2707, %v2708
      %v2710 = vrot.slane %v2617, 3
      %v2711 = vsel %vm1489, %v2708, %v2710
      %v2712 = vrot.slane %v2618, 3
      %v2713 = vrot.slane %v2619, 3
      %v2714 = vsel %vm1489, %v2712, %v2713
      %v2715 = vrot.slane %v2620, 3
      %v2716 = vsel %vm1489, %v2713, %v2715
      %2717 = vrot.lane.b32.xlu0 %v2659, 48
      %v2718 = vpop.permute.xlu0 %2717
      %2719 = vrot.lane.b32.xlu0 %v2661, 48
      %v2720 = vpop.permute.xlu0 %2719
      %2721 = vrot.lane.b32.xlu0 %v2664, 48
      %v2722 = vpop.permute.xlu0 %2721
      %2723 = vrot.lane.b32.xlu0 %v2666, 48
      %v2724 = vpop.permute.xlu0 %2723
      %2725 = vrot.lane.b32.xlu0 %v2669, 48
      %v2726 = vpop.permute.xlu0 %2725
      %2727 = vrot.lane.b32.xlu0 %v2671, 48
      %v2728 = vpop.permute.xlu0 %2727
      %2729 = vrot.lane.b32.xlu0 %v2674, 48
      %v2730 = vpop.permute.xlu0 %2729
      %2731 = vrot.lane.b32.xlu0 %v2676, 48
      %v2732 = vpop.permute.xlu0 %2731
      %2733 = vrot.lane.b32.xlu0 %v2679, 48
      %v2734 = vpop.permute.xlu0 %2733
      %2735 = vrot.lane.b32.xlu0 %v2681, 48
      %v2736 = vpop.permute.xlu0 %2735
      %2737 = vrot.lane.b32.xlu0 %v2684, 48
      %v2738 = vpop.permute.xlu0 %2737
      %2739 = vrot.lane.b32.xlu0 %v2686, 48
      %v2740 = vpop.permute.xlu0 %2739
      %2741 = vrot.lane.b32.xlu0 %v2689, 48
      %v2742 = vpop.permute.xlu0 %2741
      %2743 = vrot.lane.b32.xlu0 %v2691, 48
      %v2744 = vpop.permute.xlu0 %2743
      %2745 = vrot.lane.b32.xlu0 %v2694, 48
      %v2746 = vpop.permute.xlu0 %2745
      %2747 = vrot.lane.b32.xlu0 %v2696, 48
      %v2748 = vpop.permute.xlu0 %2747
      %2749 = vrot.lane.b32.xlu0 %v2699, 48
      %v2750 = vpop.permute.xlu0 %2749
      %2751 = vrot.lane.b32.xlu0 %v2701, 48
      %v2752 = vpop.permute.xlu0 %2751
      %2753 = vrot.lane.b32.xlu0 %v2704, 48
      %v2754 = vpop.permute.xlu0 %2753
      %2755 = vrot.lane.b32.xlu0 %v2706, 48
      %v2756 = vpop.permute.xlu0 %2755
      %2757 = vrot.lane.b32.xlu0 %v2709, 48
      %v2758 = vpop.permute.xlu0 %2757
      %2759 = vrot.lane.b32.xlu0 %v2711, 48
      %v2760 = vpop.permute.xlu0 %2759
      %2761 = vrot.lane.b32.xlu0 %v2714, 48
      %v2762 = vpop.permute.xlu0 %2761
      %2763 = vrot.lane.b32.xlu0 %v2716, 48
      %v2764 = vpop.permute.xlu0 %2763
      %vm2789 = vcmask 392192
      %v2790 = vsel %vm2789, %v1973, %v2718
      %v2791 = vsel %vm2789, %v1974, %v2720
      %v2792 = vsel %vm2789, %v1975, %v2722
      %v2793 = vsel %vm2789, %v1976, %v2724
      %v2794 = vsel %vm2789, %v1977, %v2726
      %v2795 = vsel %vm2789, %v1978, %v2728
      %v2796 = vsel %vm2789, %v1979, %v2730
      %v2797 = vsel %vm2789, %v1980, %v2732
      %v2798 = vsel %vm2789, %v1981, %v2734
      %v2799 = vsel %vm2789, %v1982, %v2736
      %v2800 = vsel %vm2789, %v1983, %v2738
      %v2801 = vsel %vm2789, %v1984, %v2740
      %v2802 = vsel %vm2789, %v1985, %v2742
      %v2803 = vsel %vm2789, %v1986, %v2744
      %v2804 = vsel %vm2789, %v1987, %v2746
      %v2805 = vsel %vm2789, %v1988, %v2748
      %v2806 = vsel %vm2789, %v1989, %v2750
      %v2807 = vsel %vm2789, %v1990, %v2752
      %v2808 = vsel %vm2789, %v1991, %v2754
      %v2809 = vsel %vm2789, %v1992, %v2756
      %v2810 = vsel %vm2789, %v1993, %v2758
      %v2811 = vsel %vm2789, %v1994, %v2760
      %v2812 = vsel %vm2789, %v1995, %v2762
      %v2813 = vsel %vm2789, %v1996, %v2764
      %v2814 = vld [vmem:[%s1] sm:$0xff]
      %v2815 = vld [vmem:[%s1 + $0x8] sm:$0xff]
      %v2816 = vld [vmem:[%s1 + $0x10] sm:$0xff]
      %v2817 = vld [vmem:[%s1 + $0x18] sm:$0xff]
      %v2818 = vld [vmem:[%s1 + $0x20] sm:$0xff]
      %v2819 = vld [vmem:[%s1 + $0x28] sm:$0xff]
      %v2820 = vld [vmem:[%s1 + $0x30] sm:$0xff]
      %v2821 = vld [vmem:[%s1 + $0x38] sm:$0xff]
      %v2822 = vld [vmem:[%s1 + $0x40] sm:$0xff]
      %v2823 = vld [vmem:[%s1 + $0x48] sm:$0x7]
      %v2824 = vld [vmem:[%s2] sm:$0x1]
      %v2826 = vlaneseq
      %v2827 = vshrl.u32 %v2826, 7
      %v2828 = vsub.s32 0, %v2827
      %v2829 = vrot.slane %v2824, %v2828
      %vm2831 = vcmask 613376
      %v2833 = vsel %vm2831, %v2790, 0
      %v2836 = vsel %vm2831, %v2791, 0
      %v2839 = vsel %vm2831, %v2792, 0
      %v2842 = vsel %vm2831, %v2793, 0
      %v2845 = vsel %vm2831, %v2794, 0
      %v2848 = vsel %vm2831, %v2795, 0
      %v2851 = vsel %vm2831, %v2796, 0
      %v2854 = vsel %vm2831, %v2797, 0
      %v2857 = vsel %vm2831, %v2798, 0
      %v2860 = vsel %vm2831, %v2799, 0
      %v2863 = vsel %vm2831, %v2800, 0
      %v2866 = vsel %vm2831, %v2801, 0
      %v2869 = vsel %vm2831, %v2802, 0
      %v2872 = vsel %vm2831, %v2803, 0
      %v2875 = vsel %vm2831, %v2804, 0
      %v2878 = vsel %vm2831, %v2805, 0
      %v2881 = vsel %vm2831, %v2806, 0
      %v2884 = vsel %vm2831, %v2807, 0
      %v2887 = vsel %vm2831, %v2808, 0
      %v2890 = vsel %vm2831, %v2809, 0
      %v2893 = vsel %vm2831, %v2810, 0
      %v2896 = vsel %vm2831, %v2811, 0
      %v2899 = vsel %vm2831, %v2812, 0
      %v2902 = vsel %vm2831, %v2813, 0
      %vm2904 = vcmask 1042432
      %v2906 = vsel %vm2904, %v2823, 0
      %2908 = vmatprep.subr.mxu0 0.0
      %2909 = vmatpush1.msra.mxu0 0.0
      %2910 = vmatprep.subr.mxu0 0.0
      %2911 = vmatpush1.msra.mxu0 0.0
      %2912 = vmatprep.subr.mxu0 0.0
      %2913 = vmatpush1.msra.mxu0 0.0
      %2914 = vmatprep.subr.mxu0 0.0
      %2915 = vmatpush1.msra.mxu0 0.0
      %2916 = vmatprep.subr.mxu0 0.0
      %2917 = vmatpush1.msra.mxu0 0.0
      %2918 = vmatprep.subr.mxu0 0.0
      %2919 = vmatpush1.msra.mxu0 0.0
      %2920 = vmatprep.subr.mxu0 0.0
      %2921 = vmatpush1.msra.mxu0 %v2906
      %2922 = vmatprep.subr.mxu0 0.0
      %2923 = vmatpush1.msra.mxu0 %v2822
      %2924 = vmatprep.subr.mxu0 0.0
      %2925 = vmatpush1.msra.mxu0 %v2821
      %2926 = vmatprep.subr.mxu0 0.0
      %2927 = vmatpush1.msra.mxu0 %v2820
      %2928 = vmatprep.subr.mxu0 0.0
      %2929 = vmatpush1.msra.mxu0 %v2819
      %2930 = vmatprep.subr.mxu0 0.0
      %2931 = vmatpush1.msra.mxu0 %v2818
      %2932 = vmatprep.subr.mxu0 0.0
      %2933 = vmatpush1.msra.mxu0 %v2817
      %2934 = vmatprep.subr.mxu0 0.0
      %2935 = vmatpush1.msra.mxu0 %v2816
      %2936 = vmatprep.subr.mxu0 0.0
      %2937 = vmatpush1.msra.mxu0 %v2815
      %2938 = vmatprep.subr.mxu0 0.0
      %2939 = vmatpush1.msra.mxu0 %v2814
      %2940 = vmatprep.subr.mxu0 0.0
      %2941 = vmatpush2.msra.mxu0 0.0
      %2942 = vmatprep.subr.mxu0 0.0
      %2943 = vmatpush2.msra.mxu0 0.0
      %2944 = vmatprep.subr.mxu0 0.0
      %2945 = vmatpush2.msra.mxu0 0.0
      %2946 = vmatprep.subr.mxu0 0.0
      %2947 = vmatpush2.msra.mxu0 0.0
      %2948 = vmatprep.subr.mxu0 0.0
      %2949 = vmatpush2.msra.mxu0 0.0
      %2950 = vmatprep.subr.mxu0 0.0
      %2951 = vmatpush2.msra.mxu0 0.0
      %2952 = vmatprep.subr.mxu0 0.0
      %2953 = vmatpush2.msra.mxu0 0.0
      %2954 = vmatprep.subr.mxu0 0.0
      %2955 = vmatpush2.msra.mxu0 0.0
      %2956 = vmatprep.subr.mxu0 0.0
      %2957 = vmatpush2.msra.mxu0 0.0
      %2958 = vmatprep.subr.mxu0 0.0
      %2959 = vmatpush2.msra.mxu0 0.0
      %2960 = vmatprep.subr.mxu0 0.0
      %2961 = vmatpush2.msra.mxu0 0.0
      %2962 = vmatprep.subr.mxu0 0.0
      %2963 = vmatpush2.msra.mxu0 0.0
      %2964 = vmatprep.subr.mxu0 0.0
      %2965 = vmatpush2.msra.mxu0 0.0
      %2966 = vmatprep.subr.mxu0 0.0
      %2967 = vmatpush2.msra.mxu0 0.0
      %2968 = vmatprep.subr.mxu0 0.0
      %2969 = vmatpush2.msra.mxu0 0.0
      %2970 = vmatprep.subr.mxu0 0.0
      %2971 = vmatpush2.msra.mxu0 0.0
      %2972 = vmatprep.mubr.f32.mxu0 0.0
      %2973 = vmatmul.mubr.f32.gmra.mxu0 %v2833
      %v2974 = vpop.f32.mrf.mxu0
      %v2975 = vadd.f32 %v2829, %v2974
      %v2976 = vpop.f32.mrf.mxu0
      %2977 = vmatprep.mubr.f32.mxu0 0.0
      %2978 = vmatmul.mubr.f32.gmra.mxu0 %v2836
      %v2979 = vpop.f32.mrf.mxu0
      %v2980 = vadd.f32 %v2829, %v2979
      %v2981 = vpop.f32.mrf.mxu0
      %2982 = vmatprep.mubr.f32.mxu0 0.0
      %2983 = vmatmul.mubr.f32.gmra.mxu0 %v2839
      %v2984 = vpop.f32.mrf.mxu0
      %v2985 = vadd.f32 %v2829, %v2984
      %v2986 = vpop.f32.mrf.mxu0
      %2987 = vmatprep.mubr.f32.mxu0 0.0
      %2988 = vmatmul.mubr.f32.gmra.mxu0 %v2842
      %v2989 = vpop.f32.mrf.mxu0
      %v2990 = vadd.f32 %v2829, %v2989
      %v2991 = vpop.f32.mrf.mxu0
      %2992 = vmatprep.mubr.f32.mxu0 0.0
      %2993 = vmatmul.mubr.f32.gmra.mxu0 %v2845
      %v2994 = vpop.f32.mrf.mxu0
      %v2995 = vadd.f32 %v2829, %v2994
      %v2996 = vpop.f32.mrf.mxu0
      %2997 = vmatprep.mubr.f32.mxu0 0.0
      %2998 = vmatmul.mubr.f32.gmra.mxu0 %v2848
      %v2999 = vpop.f32.mrf.mxu0
      %v3000 = vadd.f32 %v2829, %v2999
      %v3001 = vpop.f32.mrf.mxu0
      %3002 = vmatprep.mubr.f32.mxu0 0.0
      %3003 = vmatmul.mubr.f32.gmra.mxu0 %v2851
      %v3004 = vpop.f32.mrf.mxu0
      %v3005 = vadd.f32 %v2829, %v3004
      %v3006 = vpop.f32.mrf.mxu0
      %3007 = vmatprep.mubr.f32.mxu0 0.0
      %3008 = vmatmul.mubr.f32.gmra.mxu0 %v2854
      %v3009 = vpop.f32.mrf.mxu0
      %v3010 = vadd.f32 %v2829, %v3009
      %v3011 = vpop.f32.mrf.mxu0
      %3012 = vmatprep.mubr.f32.mxu0 0.0
      %3013 = vmatmul.mubr.f32.gmra.mxu0 %v2857
      %v3014 = vpop.f32.mrf.mxu0
      %v3015 = vadd.f32 %v2829, %v3014
      %v3016 = vpop.f32.mrf.mxu0
      %3017 = vmatprep.mubr.f32.mxu0 0.0
      %3018 = vmatmul.mubr.f32.gmra.mxu0 %v2860
      %v3019 = vpop.f32.mrf.mxu0
      %v3020 = vadd.f32 %v2829, %v3019
      %v3021 = vpop.f32.mrf.mxu0
      %3022 = vmatprep.mubr.f32.mxu0 0.0
      %3023 = vmatmul.mubr.f32.gmra.mxu0 %v2863
      %v3024 = vpop.f32.mrf.mxu0
      %v3025 = vadd.f32 %v2829, %v3024
      %v3026 = vpop.f32.mrf.mxu0
      %3027 = vmatprep.mubr.f32.mxu0 0.0
      %3028 = vmatmul.mubr.f32.gmra.mxu0 %v2866
      %v3029 = vpop.f32.mrf.mxu0
      %v3030 = vadd.f32 %v2829, %v3029
      %v3031 = vpop.f32.mrf.mxu0
      %3032 = vmatprep.mubr.f32.mxu0 0.0
      %3033 = vmatmul.mubr.f32.gmra.mxu0 %v2869
      %v3034 = vpop.f32.mrf.mxu0
      %v3035 = vadd.f32 %v2829, %v3034
      %v3036 = vpop.f32.mrf.mxu0
      %3037 = vmatprep.mubr.f32.mxu0 0.0
      %3038 = vmatmul.mubr.f32.gmra.mxu0 %v2872
      %v3039 = vpop.f32.mrf.mxu0
      %v3040 = vadd.f32 %v2829, %v3039
      %v3041 = vpop.f32.mrf.mxu0
      %3042 = vmatprep.mubr.f32.mxu0 0.0
      %3043 = vmatmul.mubr.f32.gmra.mxu0 %v2875
      %v3044 = vpop.f32.mrf.mxu0
      %v3045 = vadd.f32 %v2829, %v3044
      %v3046 = vpop.f32.mrf.mxu0
      %3047 = vmatprep.mubr.f32.mxu0 0.0
      %3048 = vmatmul.mubr.f32.gmra.mxu0 %v2878
      %v3049 = vpop.f32.mrf.mxu0
      %v3050 = vadd.f32 %v2829, %v3049
      %v3051 = vpop.f32.mrf.mxu0
      %3052 = vmatprep.mubr.f32.mxu0 0.0
      %3053 = vmatmul.mubr.f32.gmra.mxu0 %v2881
      %v3054 = vpop.f32.mrf.mxu0
      %v3055 = vadd.f32 %v2829, %v3054
      %v3056 = vpop.f32.mrf.mxu0
      %3057 = vmatprep.mubr.f32.mxu0 0.0
      %3058 = vmatmul.mubr.f32.gmra.mxu0 %v2884
      %v3059 = vpop.f32.mrf.mxu0
      %v3060 = vadd.f32 %v2829, %v3059
      %v3061 = vpop.f32.mrf.mxu0
      %3062 = vmatprep.mubr.f32.mxu0 0.0
      %3063 = vmatmul.mubr.f32.gmra.mxu0 %v2887
      %v3064 = vpop.f32.mrf.mxu0
      %v3065 = vadd.f32 %v2829, %v3064
      %v3066 = vpop.f32.mrf.mxu0
      %3067 = vmatprep.mubr.f32.mxu0 0.0
      %3068 = vmatmul.mubr.f32.gmra.mxu0 %v2890
      %v3069 = vpop.f32.mrf.mxu0
      %v3070 = vadd.f32 %v2829, %v3069
      %v3071 = vpop.f32.mrf.mxu0
      %3072 = vmatprep.mubr.f32.mxu0 0.0
      %3073 = vmatmul.mubr.f32.gmra.mxu0 %v2893
      %v3074 = vpop.f32.mrf.mxu0
      %v3075 = vadd.f32 %v2829, %v3074
      %v3076 = vpop.f32.mrf.mxu0
      %3077 = vmatprep.mubr.f32.mxu0 0.0
      %3078 = vmatmul.mubr.f32.gmra.mxu0 %v2896
      %v3079 = vpop.f32.mrf.mxu0
      %v3080 = vadd.f32 %v2829, %v3079
      %v3081 = vpop.f32.mrf.mxu0
      %3082 = vmatprep.mubr.f32.mxu0 0.0
      %3083 = vmatmul.mubr.f32.gmra.mxu0 %v2899
      %v3084 = vpop.f32.mrf.mxu0
      %v3085 = vadd.f32 %v2829, %v3084
      %v3086 = vpop.f32.mrf.mxu0
      %3087 = vmatprep.mubr.f32.mxu0 0.0
      %3088 = vmatmul.mubr.f32.gmra.mxu0 %v2902
      %v3089 = vpop.f32.mrf.mxu0
      %v3090 = vadd.f32 %v2829, %v3089
      %v3091 = vpop.f32.mrf.mxu0
      %3092 = vdwg.mxu0
      %v3093 = vmax.f32 %v2975, 0.0
      %v3094 = vmax.f32 %v2980, 0.0
      %v3095 = vmax.f32 %v2985, 0.0
      %v3096 = vmax.f32 %v2990, 0.0
      %v3097 = vmax.f32 %v2995, 0.0
      %v3098 = vmax.f32 %v3000, 0.0
      %v3099 = vmax.f32 %v3005, 0.0
      %v3100 = vmax.f32 %v3010, 0.0
      %v3101 = vmax.f32 %v3015, 0.0
      %v3102 = vmax.f32 %v3020, 0.0
      %v3103 = vmax.f32 %v3025, 0.0
      %v3104 = vmax.f32 %v3030, 0.0
      %v3105 = vmax.f32 %v3035, 0.0
      %v3106 = vmax.f32 %v3040, 0.0
      %v3107 = vmax.f32 %v3045, 0.0
      %v3108 = vmax.f32 %v3050, 0.0
      %v3109 = vmax.f32 %v3055, 0.0
      %v3110 = vmax.f32 %v3060, 0.0
      %v3111 = vmax.f32 %v3065, 0.0
      %v3112 = vmax.f32 %v3070, 0.0
      %v3113 = vmax.f32 %v3075, 0.0
      %v3114 = vmax.f32 %v3080, 0.0
      %v3115 = vmax.f32 %v3085, 0.0
      %v3116 = vmax.f32 %v3090, 0.0
      %3125 = vrot.lane.b32.xlu0 %v3095, 6
      %v3126 = vpop.permute.xlu0 %3125
      %3127 = vrot.lane.b32.xlu0 %v3097, 6
      %v3128 = vpop.permute.xlu0 %3127
      %3129 = vrot.lane.b32.xlu0 %v3099, 6
      %v3130 = vpop.permute.xlu0 %3129
      %3131 = vrot.lane.b32.xlu0 %v3101, 6
      %v3132 = vpop.permute.xlu0 %3131
      %3133 = vrot.lane.b32.xlu0 %v3103, 6
      %v3134 = vpop.permute.xlu0 %3133
      %3135 = vrot.lane.b32.xlu0 %v3105, 6
      %v3136 = vpop.permute.xlu0 %3135
      %3137 = vrot.lane.b32.xlu0 %v3107, 6
      %v3138 = vpop.permute.xlu0 %3137
      %3139 = vrot.lane.b32.xlu0 %v3109, 6
      %v3140 = vpop.permute.xlu0 %3139
      %3150 = vrot.lane.b32.xlu0 %v3097, 12
      %v3151 = vpop.permute.xlu0 %3150
      %3152 = vrot.lane.b32.xlu0 %v3099, 12
      %v3153 = vpop.permute.xlu0 %3152
      %3154 = vrot.lane.b32.xlu0 %v3101, 12
      %v3155 = vpop.permute.xlu0 %3154
      %3156 = vrot.lane.b32.xlu0 %v3103, 12
      %v3157 = vpop.permute.xlu0 %3156
      %3158 = vrot.lane.b32.xlu0 %v3105, 12
      %v3159 = vpop.permute.xlu0 %3158
      %3160 = vrot.lane.b32.xlu0 %v3107, 12
      %v3161 = vpop.permute.xlu0 %3160
      %3162 = vrot.lane.b32.xlu0 %v3109, 12
      %v3163 = vpop.permute.xlu0 %3162
      %3164 = vrot.lane.b32.xlu0 %v3111, 12
      %v3165 = vpop.permute.xlu0 %3164
      %3175 = vrot.lane.b32.xlu0 %v3099, 18
      %v3176 = vpop.permute.xlu0 %3175
      %3177 = vrot.lane.b32.xlu0 %v3101, 18
      %v3178 = vpop.permute.xlu0 %3177
      %3179 = vrot.lane.b32.xlu0 %v3103, 18
      %v3180 = vpop.permute.xlu0 %3179
      %3181 = vrot.lane.b32.xlu0 %v3105, 18
      %v3182 = vpop.permute.xlu0 %3181
      %3183 = vrot.lane.b32.xlu0 %v3107, 18
      %v3184 = vpop.permute.xlu0 %3183
      %3185 = vrot.lane.b32.xlu0 %v3109, 18
      %v3186 = vpop.permute.xlu0 %3185
      %3187 = vrot.lane.b32.xlu0 %v3111, 18
      %v3188 = vpop.permute.xlu0 %3187
      %3189 = vrot.lane.b32.xlu0 %v3113, 18
      %v3190 = vpop.permute.xlu0 %3189
      %3200 = vrot.lane.b32.xlu0 %v3101, 24
      %v3201 = vpop.permute.xlu0 %3200
      %3202 = vrot.lane.b32.xlu0 %v3103, 24
      %v3203 = vpop.permute.xlu0 %3202
      %3204 = vrot.lane.b32.xlu0 %v3105, 24
      %v3205 = vpop.permute.xlu0 %3204
      %3206 = vrot.lane.b32.xlu0 %v3107, 24
      %v3207 = vpop.permute.xlu0 %3206
      %3208 = vrot.lane.b32.xlu0 %v3109, 24
      %v3209 = vpop.permute.xlu0 %3208
      %3210 = vrot.lane.b32.xlu0 %v3111, 24
      %v3211 = vpop.permute.xlu0 %3210
      %3212 = vrot.lane.b32.xlu0 %v3113, 24
      %v3213 = vpop.permute.xlu0 %3212
      %3214 = vrot.lane.b32.xlu0 %v3115, 24
      %v3215 = vpop.permute.xlu0 %3214
      %v3233 = vrot.slane %v3093, 1
      %v3234 = vrot.slane %v3094, 1
      %v3235 = vsel %vm603, %v3233, %v3234
      %v3236 = vrot.slane %v3095, 1
      %v3237 = vrot.slane %v3096, 1
      %v3238 = vsel %vm603, %v3236, %v3237
      %v3239 = vrot.slane %v3097, 1
      %v3240 = vrot.slane %v3098, 1
      %v3241 = vsel %vm603, %v3239, %v3240
      %v3242 = vrot.slane %v3099, 1
      %v3243 = vrot.slane %v3100, 1
      %v3244 = vsel %vm603, %v3242, %v3243
      %v3245 = vrot.slane %v3101, 1
      %v3246 = vrot.slane %v3102, 1
      %v3247 = vsel %vm603, %v3245, %v3246
      %v3248 = vrot.slane %v3103, 1
      %v3249 = vrot.slane %v3104, 1
      %v3250 = vsel %vm603, %v3248, %v3249
      %v3251 = vrot.slane %v3105, 1
      %v3252 = vrot.slane %v3106, 1
      %v3253 = vsel %vm603, %v3251, %v3252
      %v3254 = vrot.slane %v3107, 1
      %v3255 = vrot.slane %v3108, 1
      %v3256 = vsel %vm603, %v3254, %v3255
      %3257 = vrot.lane.b32.xlu0 %v3235, 30
      %v3258 = vpop.permute.xlu0 %3257
      %3259 = vrot.lane.b32.xlu0 %v3238, 30
      %v3260 = vpop.permute.xlu0 %3259
      %3261 = vrot.lane.b32.xlu0 %v3241, 30
      %v3262 = vpop.permute.xlu0 %3261
      %3263 = vrot.lane.b32.xlu0 %v3244, 30
      %v3264 = vpop.permute.xlu0 %3263
      %3265 = vrot.lane.b32.xlu0 %v3247, 30
      %v3266 = vpop.permute.xlu0 %3265
      %3267 = vrot.lane.b32.xlu0 %v3250, 30
      %v3268 = vpop.permute.xlu0 %3267
      %3269 = vrot.lane.b32.xlu0 %v3253, 30
      %v3270 = vpop.permute.xlu0 %3269
      %3271 = vrot.lane.b32.xlu0 %v3256, 30
      %v3272 = vpop.permute.xlu0 %3271
      %v3282 = vrot.slane %v3109, 1
      %v3283 = vrot.slane %v3110, 1
      %v3284 = vsel %vm603, %v3282, %v3283
      %3285 = vrot.lane.b32.xlu0 %v3238, 36
      %v3286 = vpop.permute.xlu0 %3285
      %3287 = vrot.lane.b32.xlu0 %v3241, 36
      %v3288 = vpop.permute.xlu0 %3287
      %3289 = vrot.lane.b32.xlu0 %v3244, 36
      %v3290 = vpop.permute.xlu0 %3289
      %3291 = vrot.lane.b32.xlu0 %v3247, 36
      %v3292 = vpop.permute.xlu0 %3291
      %3293 = vrot.lane.b32.xlu0 %v3250, 36
      %v3294 = vpop.permute.xlu0 %3293
      %3295 = vrot.lane.b32.xlu0 %v3253, 36
      %v3296 = vpop.permute.xlu0 %3295
      %3297 = vrot.lane.b32.xlu0 %v3256, 36
      %v3298 = vpop.permute.xlu0 %3297
      %3299 = vrot.lane.b32.xlu0 %v3284, 36
      %v3300 = vpop.permute.xlu0 %3299
      %v3310 = vrot.slane %v3111, 1
      %v3311 = vrot.slane %v3112, 1
      %v3312 = vsel %vm603, %v3310, %v3311
      %3313 = vrot.lane.b32.xlu0 %v3241, 42
      %v3314 = vpop.permute.xlu0 %3313
      %3315 = vrot.lane.b32.xlu0 %v3244, 42
      %v3316 = vpop.permute.xlu0 %3315
      %3317 = vrot.lane.b32.xlu0 %v3247, 42
      %v3318 = vpop.permute.xlu0 %3317
      %3319 = vrot.lane.b32.xlu0 %v3250, 42
      %v3320 = vpop.permute.xlu0 %3319
      %3321 = vrot.lane.b32.xlu0 %v3253, 42
      %v3322 = vpop.permute.xlu0 %3321
      %3323 = vrot.lane.b32.xlu0 %v3256, 42
      %v3324 = vpop.permute.xlu0 %3323
      %3325 = vrot.lane.b32.xlu0 %v3284, 42
      %v3326 = vpop.permute.xlu0 %3325
      %3327 = vrot.lane.b32.xlu0 %v3312, 42
      %v3328 = vpop.permute.xlu0 %3327
      %v3338 = vrot.slane %v3113, 1
      %v3339 = vrot.slane %v3114, 1
      %v3340 = vsel %vm603, %v3338, %v3339
      %3341 = vrot.lane.b32.xlu0 %v3244, 48
      %v3342 = vpop.permute.xlu0 %3341
      %3343 = vrot.lane.b32.xlu0 %v3247, 48
      %v3344 = vpop.permute.xlu0 %3343
      %3345 = vrot.lane.b32.xlu0 %v3250, 48
      %v3346 = vpop.permute.xlu0 %3345
      %3347 = vrot.lane.b32.xlu0 %v3253, 48
      %v3348 = vpop.permute.xlu0 %3347
      %3349 = vrot.lane.b32.xlu0 %v3256, 48
      %v3350 = vpop.permute.xlu0 %3349
      %3351 = vrot.lane.b32.xlu0 %v3284, 48
      %v3352 = vpop.permute.xlu0 %3351
      %3353 = vrot.lane.b32.xlu0 %v3312, 48
      %v3354 = vpop.permute.xlu0 %3353
      %3355 = vrot.lane.b32.xlu0 %v3340, 48
      %v3356 = vpop.permute.xlu0 %3355
      %v3366 = vrot.slane %v3115, 1
      %v3367 = vrot.slane %v3116, 1
      %v3368 = vsel %vm603, %v3366, %v3367
      %3369 = vrot.lane.b32.xlu0 %v3247, 54
      %v3370 = vpop.permute.xlu0 %3369
      %3371 = vrot.lane.b32.xlu0 %v3250, 54
      %v3372 = vpop.permute.xlu0 %3371
      %3373 = vrot.lane.b32.xlu0 %v3253, 54
      %v3374 = vpop.permute.xlu0 %3373
      %3375 = vrot.lane.b32.xlu0 %v3256, 54
      %v3376 = vpop.permute.xlu0 %3375
      %3377 = vrot.lane.b32.xlu0 %v3284, 54
      %v3378 = vpop.permute.xlu0 %3377
      %3379 = vrot.lane.b32.xlu0 %v3312, 54
      %v3380 = vpop.permute.xlu0 %3379
      %3381 = vrot.lane.b32.xlu0 %v3340, 54
      %v3382 = vpop.permute.xlu0 %3381
      %3383 = vrot.lane.b32.xlu0 %v3368, 54
      %v3384 = vpop.permute.xlu0 %3383
      %v3393 = vrot.slane %v3093, 2
      %v3394 = vrot.slane %v3094, 2
      %v3395 = vsel %vm1048, %v3393, %v3394
      %v3396 = vrot.slane %v3095, 2
      %v3397 = vrot.slane %v3096, 2
      %v3398 = vsel %vm1048, %v3396, %v3397
      %v3399 = vrot.slane %v3097, 2
      %v3400 = vrot.slane %v3098, 2
      %v3401 = vsel %vm1048, %v3399, %v3400
      %v3402 = vrot.slane %v3099, 2
      %v3403 = vrot.slane %v3100, 2
      %v3404 = vsel %vm1048, %v3402, %v3403
      %v3405 = vrot.slane %v3101, 2
      %v3406 = vrot.slane %v3102, 2
      %v3407 = vsel %vm1048, %v3405, %v3406
      %v3408 = vrot.slane %v3103, 2
      %v3409 = vrot.slane %v3104, 2
      %v3410 = vsel %vm1048, %v3408, %v3409
      %v3411 = vrot.slane %v3105, 2
      %v3412 = vrot.slane %v3106, 2
      %v3413 = vsel %vm1048, %v3411, %v3412
      %v3414 = vrot.slane %v3107, 2
      %v3415 = vrot.slane %v3108, 2
      %v3416 = vsel %vm1048, %v3414, %v3415
      %3417 = vrot.lane.b32.xlu0 %v3395, 60
      %v3418 = vpop.permute.xlu0 %3417
      %3419 = vrot.lane.b32.xlu0 %v3398, 60
      %v3420 = vpop.permute.xlu0 %3419
      %3421 = vrot.lane.b32.xlu0 %v3401, 60
      %v3422 = vpop.permute.xlu0 %3421
      %3423 = vrot.lane.b32.xlu0 %v3404, 60
      %v3424 = vpop.permute.xlu0 %3423
      %3425 = vrot.lane.b32.xlu0 %v3407, 60
      %v3426 = vpop.permute.xlu0 %3425
      %3427 = vrot.lane.b32.xlu0 %v3410, 60
      %v3428 = vpop.permute.xlu0 %3427
      %3429 = vrot.lane.b32.xlu0 %v3413, 60
      %v3430 = vpop.permute.xlu0 %3429
      %3431 = vrot.lane.b32.xlu0 %v3416, 60
      %v3432 = vpop.permute.xlu0 %3431
      %v3441 = vrot.slane %v3109, 2
      %v3442 = vrot.slane %v3110, 2
      %v3443 = vsel %vm1048, %v3441, %v3442
      %3444 = vrot.lane.b32.xlu0 %v3398, 66
      %v3445 = vpop.permute.xlu0 %3444
      %3446 = vrot.lane.b32.xlu0 %v3401, 66
      %v3447 = vpop.permute.xlu0 %3446
      %3448 = vrot.lane.b32.xlu0 %v3404, 66
      %v3449 = vpop.permute.xlu0 %3448
      %3450 = vrot.lane.b32.xlu0 %v3407, 66
      %v3451 = vpop.permute.xlu0 %3450
      %3452 = vrot.lane.b32.xlu0 %v3410, 66
      %v3453 = vpop.permute.xlu0 %3452
      %3454 = vrot.lane.b32.xlu0 %v3413, 66
      %v3455 = vpop.permute.xlu0 %3454
      %3456 = vrot.lane.b32.xlu0 %v3416, 66
      %v3457 = vpop.permute.xlu0 %3456
      %3458 = vrot.lane.b32.xlu0 %v3443, 66
      %v3459 = vpop.permute.xlu0 %3458
      %v3468 = vrot.slane %v3111, 2
      %v3469 = vrot.slane %v3112, 2
      %v3470 = vsel %vm1048, %v3468, %v3469
      %3471 = vrot.lane.b32.xlu0 %v3401, 72
      %v3472 = vpop.permute.xlu0 %3471
      %3473 = vrot.lane.b32.xlu0 %v3404, 72
      %v3474 = vpop.permute.xlu0 %3473
      %3475 = vrot.lane.b32.xlu0 %v3407, 72
      %v3476 = vpop.permute.xlu0 %3475
      %3477 = vrot.lane.b32.xlu0 %v3410, 72
      %v3478 = vpop.permute.xlu0 %3477
      %3479 = vrot.lane.b32.xlu0 %v3413, 72
      %v3480 = vpop.permute.xlu0 %3479
      %3481 = vrot.lane.b32.xlu0 %v3416, 72
      %v3482 = vpop.permute.xlu0 %3481
      %3483 = vrot.lane.b32.xlu0 %v3443, 72
      %v3484 = vpop.permute.xlu0 %3483
      %3485 = vrot.lane.b32.xlu0 %v3470, 72
      %v3486 = vpop.permute.xlu0 %3485
      %v3495 = vrot.slane %v3113, 2
      %v3496 = vrot.slane %v3114, 2
      %v3497 = vsel %vm1048, %v3495, %v3496
      %3498 = vrot.lane.b32.xlu0 %v3404, 78
      %v3499 = vpop.permute.xlu0 %3498
      %3500 = vrot.lane.b32.xlu0 %v3407, 78
      %v3501 = vpop.permute.xlu0 %3500
      %3502 = vrot.lane.b32.xlu0 %v3410, 78
      %v3503 = vpop.permute.xlu0 %3502
      %3504 = vrot.lane.b32.xlu0 %v3413, 78
      %v3505 = vpop.permute.xlu0 %3504
      %3506 = vrot.lane.b32.xlu0 %v3416, 78
      %v3507 = vpop.permute.xlu0 %3506
      %3508 = vrot.lane.b32.xlu0 %v3443, 78
      %v3509 = vpop.permute.xlu0 %3508
      %3510 = vrot.lane.b32.xlu0 %v3470, 78
      %v3511 = vpop.permute.xlu0 %3510
      %3512 = vrot.lane.b32.xlu0 %v3497, 78
      %v3513 = vpop.permute.xlu0 %3512
      %v3522 = vrot.slane %v3115, 2
      %v3523 = vrot.slane %v3116, 2
      %v3524 = vsel %vm1048, %v3522, %v3523
      %3525 = vrot.lane.b32.xlu0 %v3407, 84
      %v3526 = vpop.permute.xlu0 %3525
      %3527 = vrot.lane.b32.xlu0 %v3410, 84
      %v3528 = vpop.permute.xlu0 %3527
      %3529 = vrot.lane.b32.xlu0 %v3413, 84
      %v3530 = vpop.permute.xlu0 %3529
      %3531 = vrot.lane.b32.xlu0 %v3416, 84
      %v3532 = vpop.permute.xlu0 %3531
      %3533 = vrot.lane.b32.xlu0 %v3443, 84
      %v3534 = vpop.permute.xlu0 %3533
      %3535 = vrot.lane.b32.xlu0 %v3470, 84
      %v3536 = vpop.permute.xlu0 %3535
      %3537 = vrot.lane.b32.xlu0 %v3497, 84
      %v3538 = vpop.permute.xlu0 %3537
      %3539 = vrot.lane.b32.xlu0 %v3524, 84
      %v3540 = vpop.permute.xlu0 %3539
      %v3549 = vrot.slane %v3093, 3
      %v3550 = vrot.slane %v3094, 3
      %v3551 = vsel %vm1489, %v3549, %v3550
      %v3552 = vrot.slane %v3095, 3
      %v3553 = vrot.slane %v3096, 3
      %v3554 = vsel %vm1489, %v3552, %v3553
      %v3555 = vrot.slane %v3097, 3
      %v3556 = vrot.slane %v3098, 3
      %v3557 = vsel %vm1489, %v3555, %v3556
      %v3558 = vrot.slane %v3099, 3
      %v3559 = vrot.slane %v3100, 3
      %v3560 = vsel %vm1489, %v3558, %v3559
      %v3561 = vrot.slane %v3101, 3
      %v3562 = vrot.slane %v3102, 3
      %v3563 = vsel %vm1489, %v3561, %v3562
      %v3564 = vrot.slane %v3103, 3
      %v3565 = vrot.slane %v3104, 3
      %v3566 = vsel %vm1489, %v3564, %v3565
      %v3567 = vrot.slane %v3105, 3
      %v3568 = vrot.slane %v3106, 3
      %v3569 = vsel %vm1489, %v3567, %v3568
      %v3570 = vrot.slane %v3107, 3
      %v3571 = vrot.slane %v3108, 3
      %v3572 = vsel %vm1489, %v3570, %v3571
      %3573 = vrot.lane.b32.xlu0 %v3551, 90
      %v3574 = vpop.permute.xlu0 %3573
      %3575 = vrot.lane.b32.xlu0 %v3554, 90
      %v3576 = vpop.permute.xlu0 %3575
      %3577 = vrot.lane.b32.xlu0 %v3557, 90
      %v3578 = vpop.permute.xlu0 %3577
      %3579 = vrot.lane.b32.xlu0 %v3560, 90
      %v3580 = vpop.permute.xlu0 %3579
      %3581 = vrot.lane.b32.xlu0 %v3563, 90
      %v3582 = vpop.permute.xlu0 %3581
      %3583 = vrot.lane.b32.xlu0 %v3566, 90
      %v3584 = vpop.permute.xlu0 %3583
      %3585 = vrot.lane.b32.xlu0 %v3569, 90
      %v3586 = vpop.permute.xlu0 %3585
      %3587 = vrot.lane.b32.xlu0 %v3572, 90
      %v3588 = vpop.permute.xlu0 %3587
      %v3597 = vsel %vm1647, %v3093, %v3126
      %v3598 = vsel %vm1647, %v3095, %v3128
      %v3599 = vsel %vm1647, %v3097, %v3130
      %v3600 = vsel %vm1647, %v3099, %v3132
      %v3601 = vsel %vm1647, %v3101, %v3134
      %v3602 = vsel %vm1647, %v3103, %v3136
      %v3603 = vsel %vm1647, %v3105, %v3138
      %v3604 = vsel %vm1647, %v3107, %v3140
      %v3605 = vsel %vm1697, %v3597, %v3151
      %v3606 = vsel %vm1697, %v3598, %v3153
      %v3607 = vsel %vm1697, %v3599, %v3155
      %v3608 = vsel %vm1697, %v3600, %v3157
      %v3609 = vsel %vm1697, %v3601, %v3159
      %v3610 = vsel %vm1697, %v3602, %v3161
      %v3611 = vsel %vm1697, %v3603, %v3163
      %v3612 = vsel %vm1697, %v3604, %v3165
      %v3613 = vsel %vm1747, %v3605, %v3176
      %v3614 = vsel %vm1747, %v3606, %v3178
      %v3615 = vsel %vm1747, %v3607, %v3180
      %v3616 = vsel %vm1747, %v3608, %v3182
      %v3617 = vsel %vm1747, %v3609, %v3184
      %v3618 = vsel %vm1747, %v3610, %v3186
      %v3619 = vsel %vm1747, %v3611, %v3188
      %v3620 = vsel %vm1747, %v3612, %v3190
      %v3621 = vsel %vm1797, %v3613, %v3201
      %v3622 = vsel %vm1797, %v3614, %v3203
      %v3623 = vsel %vm1797, %v3615, %v3205
      %v3624 = vsel %vm1797, %v3616, %v3207
      %v3625 = vsel %vm1797, %v3617, %v3209
      %v3626 = vsel %vm1797, %v3618, %v3211
      %v3627 = vsel %vm1797, %v3619, %v3213
      %v3628 = vsel %vm1797, %v3620, %v3215
      %v3629 = vsel %vm1847, %v3621, %v3258
      %v3630 = vsel %vm1847, %v3622, %v3260
      %v3631 = vsel %vm1847, %v3623, %v3262
      %v3632 = vsel %vm1847, %v3624, %v3264
      %v3633 = vsel %vm1847, %v3625, %v3266
      %v3634 = vsel %vm1847, %v3626, %v3268
      %v3635 = vsel %vm1847, %v3627, %v3270
      %v3636 = vsel %vm1847, %v3628, %v3272
      %v3637 = vsel %vm1897, %v3629, %v3286
      %v3638 = vsel %vm1897, %v3630, %v3288
      %v3639 = vsel %vm1897, %v3631, %v3290
      %v3640 = vsel %vm1897, %v3632, %v3292
      %v3641 = vsel %vm1897, %v3633, %v3294
      %v3642 = vsel %vm1897, %v3634, %v3296
      %v3643 = vsel %vm1897, %v3635, %v3298
      %v3644 = vsel %vm1897, %v3636, %v3300
      %v3645 = vsel %vm1947, %v3637, %v3314
      %v3646 = vsel %vm1947, %v3638, %v3316
      %v3647 = vsel %vm1947, %v3639, %v3318
      %v3648 = vsel %vm1947, %v3640, %v3320
      %v3649 = vsel %vm1947, %v3641, %v3322
      %v3650 = vsel %vm1947, %v3642, %v3324
      %v3651 = vsel %vm1947, %v3643, %v3326
      %v3652 = vsel %vm1947, %v3644, %v3328
      %v3653 = vsel %vm2789, %v3645, %v3342
      %v3654 = vsel %vm2789, %v3646, %v3344
      %v3655 = vsel %vm2789, %v3647, %v3346
      %v3656 = vsel %vm2789, %v3648, %v3348
      %v3657 = vsel %vm2789, %v3649, %v3350
      %v3658 = vsel %vm2789, %v3650, %v3352
      %v3659 = vsel %vm2789, %v3651, %v3354
      %v3660 = vsel %vm2789, %v3652, %v3356
      %vm3661 = vcmask 441344
      %v3662 = vsel %vm3661, %v3653, %v3370
      %v3663 = vsel %vm3661, %v3654, %v3372
      %v3664 = vsel %vm3661, %v3655, %v3374
      %v3665 = vsel %vm3661, %v3656, %v3376
      %v3666 = vsel %vm3661, %v3657, %v3378
      %v3667 = vsel %vm3661, %v3658, %v3380
      %v3668 = vsel %vm3661, %v3659, %v3382
      %v3669 = vsel %vm3661, %v3660, %v3384
      %vm3670 = vcmask 490496
      %v3671 = vsel %vm3670, %v3662, %v3418
      %v3672 = vsel %vm3670, %v3663, %v3420
      %v3673 = vsel %vm3670, %v3664, %v3422
      %v3674 = vsel %vm3670, %v3665, %v3424
      %v3675 = vsel %vm3670, %v3666, %v3426
      %v3676 = vsel %vm3670, %v3667, %v3428
      %v3677 = vsel %vm3670, %v3668, %v3430
      %v3678 = vsel %vm3670, %v3669, %v3432
      %vm3679 = vcmask 539648
      %v3680 = vsel %vm3679, %v3671, %v3445
      %v3681 = vsel %vm3679, %v3672, %v3447
      %v3682 = vsel %vm3679, %v3673, %v3449
      %v3683 = vsel %vm3679, %v3674, %v3451
      %v3684 = vsel %vm3679, %v3675, %v3453
      %v3685 = vsel %vm3679, %v3676, %v3455
      %v3686 = vsel %vm3679, %v3677, %v3457
      %v3687 = vsel %vm3679, %v3678, %v3459
      %vm3688 = vcmask 588800
      %v3689 = vsel %vm3688, %v3680, %v3472
      %v3690 = vsel %vm3688, %v3681, %v3474
      %v3691 = vsel %vm3688, %v3682, %v3476
      %v3692 = vsel %vm3688, %v3683, %v3478
      %v3693 = vsel %vm3688, %v3684, %v3480
      %v3694 = vsel %vm3688, %v3685, %v3482
      %v3695 = vsel %vm3688, %v3686, %v3484
      %v3696 = vsel %vm3688, %v3687, %v3486
      %vm3697 = vcmask 637952
      %v3698 = vsel %vm3697, %v3689, %v3499
      %v3699 = vsel %vm3697, %v3690, %v3501
      %v3700 = vsel %vm3697, %v3691, %v3503
      %v3701 = vsel %vm3697, %v3692, %v3505
      %v3702 = vsel %vm3697, %v3693, %v3507
      %v3703 = vsel %vm3697, %v3694, %v3509
      %v3704 = vsel %vm3697, %v3695, %v3511
      %v3705 = vsel %vm3697, %v3696, %v3513
      %vm3706 = vcmask 687104
      %v3707 = vsel %vm3706, %v3698, %v3526
      %v3708 = vsel %vm3706, %v3699, %v3528
      %v3709 = vsel %vm3706, %v3700, %v3530
      %v3710 = vsel %vm3706, %v3701, %v3532
      %v3711 = vsel %vm3706, %v3702, %v3534
      %v3712 = vsel %vm3706, %v3703, %v3536
      %v3713 = vsel %vm3706, %v3704, %v3538
      %v3714 = vsel %vm3706, %v3705, %v3540
      %vm3715 = vcmask 736256
      %v3716 = vsel %vm3715, %v3707, %v3574
      %v3717 = vsel %vm3715, %v3708, %v3576
      %v3718 = vsel %vm3715, %v3709, %v3578
      %v3719 = vsel %vm3715, %v3710, %v3580
      %v3720 = vsel %vm3715, %v3711, %v3582
      %v3721 = vsel %vm3715, %v3712, %v3584
      %v3722 = vsel %vm3715, %v3713, %v3586
      %v3723 = vsel %vm3715, %v3714, %v3588
      %3724 = vrot.lane.b32.xlu0 %v3098, 6
      %v3725 = vpop.permute.xlu0 %3724
      %3726 = vrot.lane.b32.xlu0 %v3100, 6
      %v3727 = vpop.permute.xlu0 %3726
      %3728 = vrot.lane.b32.xlu0 %v3102, 6
      %v3729 = vpop.permute.xlu0 %3728
      %3730 = vrot.lane.b32.xlu0 %v3104, 6
      %v3731 = vpop.permute.xlu0 %3730
      %3732 = vrot.lane.b32.xlu0 %v3106, 6
      %v3733 = vpop.permute.xlu0 %3732
      %3734 = vrot.lane.b32.xlu0 %v3108, 6
      %v3735 = vpop.permute.xlu0 %3734
      %3736 = vrot.lane.b32.xlu0 %v3110, 6
      %v3737 = vpop.permute.xlu0 %3736
      %3738 = vrot.lane.b32.xlu0 %v3111, 6
      %v3739 = vpop.permute.xlu0 %3738
      %3740 = vrot.lane.b32.xlu0 %v3112, 6
      %v3741 = vpop.permute.xlu0 %3740
      %3751 = vrot.lane.b32.xlu0 %v3100, 12
      %v3752 = vpop.permute.xlu0 %3751
      %3753 = vrot.lane.b32.xlu0 %v3102, 12
      %v3754 = vpop.permute.xlu0 %3753
      %3755 = vrot.lane.b32.xlu0 %v3104, 12
      %v3756 = vpop.permute.xlu0 %3755
      %3757 = vrot.lane.b32.xlu0 %v3106, 12
      %v3758 = vpop.permute.xlu0 %3757
      %3759 = vrot.lane.b32.xlu0 %v3108, 12
      %v3760 = vpop.permute.xlu0 %3759
      %3761 = vrot.lane.b32.xlu0 %v3110, 12
      %v3762 = vpop.permute.xlu0 %3761
      %3763 = vrot.lane.b32.xlu0 %v3112, 12
      %v3764 = vpop.permute.xlu0 %3763
      %3765 = vrot.lane.b32.xlu0 %v3113, 12
      %v3766 = vpop.permute.xlu0 %3765
      %3767 = vrot.lane.b32.xlu0 %v3114, 12
      %v3768 = vpop.permute.xlu0 %3767
      %3778 = vrot.lane.b32.xlu0 %v3102, 18
      %v3779 = vpop.permute.xlu0 %3778
      %3780 = vrot.lane.b32.xlu0 %v3104, 18
      %v3781 = vpop.permute.xlu0 %3780
      %3782 = vrot.lane.b32.xlu0 %v3106, 18
      %v3783 = vpop.permute.xlu0 %3782
      %3784 = vrot.lane.b32.xlu0 %v3108, 18
      %v3785 = vpop.permute.xlu0 %3784
      %3786 = vrot.lane.b32.xlu0 %v3110, 18
      %v3787 = vpop.permute.xlu0 %3786
      %3788 = vrot.lane.b32.xlu0 %v3112, 18
      %v3789 = vpop.permute.xlu0 %3788
      %3790 = vrot.lane.b32.xlu0 %v3114, 18
      %v3791 = vpop.permute.xlu0 %3790
      %3792 = vrot.lane.b32.xlu0 %v3115, 18
      %v3793 = vpop.permute.xlu0 %3792
      %3794 = vrot.lane.b32.xlu0 %v3116, 18
      %v3795 = vpop.permute.xlu0 %3794
      %3805 = vrot.lane.b32.xlu0 %v3235, 24
      %v3806 = vpop.permute.xlu0 %3805
      %3807 = vrot.lane.b32.xlu0 %v3234, 24
      %v3808 = vpop.permute.xlu0 %3807
      %3809 = vrot.lane.b32.xlu0 %v3238, 24
      %v3810 = vpop.permute.xlu0 %3809
      %3811 = vrot.lane.b32.xlu0 %v3237, 24
      %v3812 = vpop.permute.xlu0 %3811
      %3813 = vrot.lane.b32.xlu0 %v3241, 24
      %v3814 = vpop.permute.xlu0 %3813
      %3815 = vrot.lane.b32.xlu0 %v3240, 24
      %v3816 = vpop.permute.xlu0 %3815
      %3817 = vrot.lane.b32.xlu0 %v3244, 24
      %v3818 = vpop.permute.xlu0 %3817
      %3819 = vrot.lane.b32.xlu0 %v3243, 24
      %v3820 = vpop.permute.xlu0 %3819
      %3821 = vrot.lane.b32.xlu0 %v3247, 24
      %v3822 = vpop.permute.xlu0 %3821
      %3823 = vrot.lane.b32.xlu0 %v3246, 24
      %v3824 = vpop.permute.xlu0 %3823
      %3825 = vrot.lane.b32.xlu0 %v3250, 24
      %v3826 = vpop.permute.xlu0 %3825
      %3827 = vrot.lane.b32.xlu0 %v3249, 24
      %v3828 = vpop.permute.xlu0 %3827
      %3829 = vrot.lane.b32.xlu0 %v3253, 24
      %v3830 = vpop.permute.xlu0 %3829
      %3831 = vrot.lane.b32.xlu0 %v3252, 24
      %v3832 = vpop.permute.xlu0 %3831
      %3833 = vrot.lane.b32.xlu0 %v3256, 24
      %v3834 = vpop.permute.xlu0 %3833
      %3835 = vrot.lane.b32.xlu0 %v3255, 24
      %v3836 = vpop.permute.xlu0 %3835
      %3853 = vrot.lane.b32.xlu0 %v3237, 30
      %v3854 = vpop.permute.xlu0 %3853
      %3855 = vrot.lane.b32.xlu0 %v3240, 30
      %v3856 = vpop.permute.xlu0 %3855
      %3857 = vrot.lane.b32.xlu0 %v3243, 30
      %v3858 = vpop.permute.xlu0 %3857
      %3859 = vrot.lane.b32.xlu0 %v3246, 30
      %v3860 = vpop.permute.xlu0 %3859
      %3861 = vrot.lane.b32.xlu0 %v3249, 30
      %v3862 = vpop.permute.xlu0 %3861
      %3863 = vrot.lane.b32.xlu0 %v3252, 30
      %v3864 = vpop.permute.xlu0 %3863
      %3865 = vrot.lane.b32.xlu0 %v3255, 30
      %v3866 = vpop.permute.xlu0 %3865
      %3867 = vrot.lane.b32.xlu0 %v3284, 30
      %v3868 = vpop.permute.xlu0 %3867
      %3869 = vrot.lane.b32.xlu0 %v3283, 30
      %v3870 = vpop.permute.xlu0 %3869
      %3880 = vrot.lane.b32.xlu0 %v3240, 36
      %v3881 = vpop.permute.xlu0 %3880
      %3882 = vrot.lane.b32.xlu0 %v3243, 36
      %v3883 = vpop.permute.xlu0 %3882
      %3884 = vrot.lane.b32.xlu0 %v3246, 36
      %v3885 = vpop.permute.xlu0 %3884
      %3886 = vrot.lane.b32.xlu0 %v3249, 36
      %v3887 = vpop.permute.xlu0 %3886
      %3888 = vrot.lane.b32.xlu0 %v3252, 36
      %v3889 = vpop.permute.xlu0 %3888
      %3890 = vrot.lane.b32.xlu0 %v3255, 36
      %v3891 = vpop.permute.xlu0 %3890
      %3892 = vrot.lane.b32.xlu0 %v3283, 36
      %v3893 = vpop.permute.xlu0 %3892
      %3894 = vrot.lane.b32.xlu0 %v3312, 36
      %v3895 = vpop.permute.xlu0 %3894
      %3896 = vrot.lane.b32.xlu0 %v3311, 36
      %v3897 = vpop.permute.xlu0 %3896
      %3907 = vrot.lane.b32.xlu0 %v3243, 42
      %v3908 = vpop.permute.xlu0 %3907
      %3909 = vrot.lane.b32.xlu0 %v3246, 42
      %v3910 = vpop.permute.xlu0 %3909
      %3911 = vrot.lane.b32.xlu0 %v3249, 42
      %v3912 = vpop.permute.xlu0 %3911
      %3913 = vrot.lane.b32.xlu0 %v3252, 42
      %v3914 = vpop.permute.xlu0 %3913
      %3915 = vrot.lane.b32.xlu0 %v3255, 42
      %v3916 = vpop.permute.xlu0 %3915
      %3917 = vrot.lane.b32.xlu0 %v3283, 42
      %v3918 = vpop.permute.xlu0 %3917
      %3919 = vrot.lane.b32.xlu0 %v3311, 42
      %v3920 = vpop.permute.xlu0 %3919
      %3921 = vrot.lane.b32.xlu0 %v3340, 42
      %v3922 = vpop.permute.xlu0 %3921
      %3923 = vrot.lane.b32.xlu0 %v3339, 42
      %v3924 = vpop.permute.xlu0 %3923
      %3934 = vrot.lane.b32.xlu0 %v3246, 48
      %v3935 = vpop.permute.xlu0 %3934
      %3936 = vrot.lane.b32.xlu0 %v3249, 48
      %v3937 = vpop.permute.xlu0 %3936
      %3938 = vrot.lane.b32.xlu0 %v3252, 48
      %v3939 = vpop.permute.xlu0 %3938
      %3940 = vrot.lane.b32.xlu0 %v3255, 48
      %v3941 = vpop.permute.xlu0 %3940
      %3942 = vrot.lane.b32.xlu0 %v3283, 48
      %v3943 = vpop.permute.xlu0 %3942
      %3944 = vrot.lane.b32.xlu0 %v3311, 48
      %v3945 = vpop.permute.xlu0 %3944
      %3946 = vrot.lane.b32.xlu0 %v3339, 48
      %v3947 = vpop.permute.xlu0 %3946
      %3948 = vrot.lane.b32.xlu0 %v3368, 48
      %v3949 = vpop.permute.xlu0 %3948
      %3950 = vrot.lane.b32.xlu0 %v3367, 48
      %v3951 = vpop.permute.xlu0 %3950
      %v3961 = vsel %vm1647, %v3096, %v3725
      %v3962 = vsel %vm1647, %v3098, %v3727
      %v3963 = vsel %vm1647, %v3100, %v3729
      %v3964 = vsel %vm1647, %v3102, %v3731
      %v3965 = vsel %vm1647, %v3104, %v3733
      %v3966 = vsel %vm1647, %v3106, %v3735
      %v3967 = vsel %vm1647, %v3108, %v3737
      %v3968 = vsel %vm1647, %v3109, %v3739
      %v3969 = vsel %vm1647, %v3110, %v3741
      %v3970 = vsel %vm1697, %v3961, %v3752
      %v3971 = vsel %vm1697, %v3962, %v3754
      %v3972 = vsel %vm1697, %v3963, %v3756
      %v3973 = vsel %vm1697, %v3964, %v3758
      %v3974 = vsel %vm1697, %v3965, %v3760
      %v3975 = vsel %vm1697, %v3966, %v3762
      %v3976 = vsel %vm1697, %v3967, %v3764
      %v3977 = vsel %vm1697, %v3968, %v3766
      %v3978 = vsel %vm1697, %v3969, %v3768
      %v3979 = vsel %vm1747, %v3970, %v3779
      %v3980 = vsel %vm1747, %v3971, %v3781
      %v3981 = vsel %vm1747, %v3972, %v3783
      %v3982 = vsel %vm1747, %v3973, %v3785
      %v3983 = vsel %vm1747, %v3974, %v3787
      %v3984 = vsel %vm1747, %v3975, %v3789
      %v3985 = vsel %vm1747, %v3976, %v3791
      %v3986 = vsel %vm1747, %v3977, %v3793
      %v3987 = vsel %vm1747, %v3978, %v3795
      %v3988 = vsel %vm1797, %v3614, %v3806
      %v3989 = vsel %vm1797, %v3979, %v3808
      %v3990 = vsel %vm1797, %v3615, %v3810
      %v3991 = vsel %vm1797, %v3980, %v3812
      %v3992 = vsel %vm1797, %v3616, %v3814
      %v3993 = vsel %vm1797, %v3981, %v3816
      %v3994 = vsel %vm1797, %v3617, %v3818
      %v3995 = vsel %vm1797, %v3982, %v3820
      %v3996 = vsel %vm1797, %v3618, %v3822
      %v3997 = vsel %vm1797, %v3983, %v3824
      %v3998 = vsel %vm1797, %v3619, %v3826
      %v3999 = vsel %vm1797, %v3984, %v3828
      %v4000 = vsel %vm1797, %v3620, %v3830
      %v4001 = vsel %vm1797, %v3985, %v3832
      %v4002 = vsel %vm1797, %v3986, %v3834
      %v4003 = vsel %vm1797, %v3987, %v3836
      %v4004 = vsel %vm1847, %v3988, %v3260
      %v4005 = vsel %vm1847, %v3989, %v3854
      %v4006 = vsel %vm1847, %v3990, %v3262
      %v4007 = vsel %vm1847, %v3991, %v3856
      %v4008 = vsel %vm1847, %v3992, %v3264
      %v4009 = vsel %vm1847, %v3993, %v3858
      %v4010 = vsel %vm1847, %v3994, %v3266
      %v4011 = vsel %vm1847, %v3995, %v3860
      %v4012 = vsel %vm1847, %v3996, %v3268
      %v4013 = vsel %vm1847, %v3997, %v3862
      %v4014 = vsel %vm1847, %v3998, %v3270
      %v4015 = vsel %vm1847, %v3999, %v3864
      %v4016 = vsel %vm1847, %v4000, %v3272
      %v4017 = vsel %vm1847, %v4001, %v3866
      %v4018 = vsel %vm1847, %v4002, %v3868
      %v4019 = vsel %vm1847, %v4003, %v3870
      %v4020 = vsel %vm1897, %v4004, %v3288
      %v4021 = vsel %vm1897, %v4005, %v3881
      %v4022 = vsel %vm1897, %v4006, %v3290
      %v4023 = vsel %vm1897, %v4007, %v3883
      %v4024 = vsel %vm1897, %v4008, %v3292
      %v4025 = vsel %vm1897, %v4009, %v3885
      %v4026 = vsel %vm1897, %v4010, %v3294
      %v4027 = vsel %vm1897, %v4011, %v3887
      %v4028 = vsel %vm1897, %v4012, %v3296
      %v4029 = vsel %vm1897, %v4013, %v3889
      %v4030 = vsel %vm1897, %v4014, %v3298
      %v4031 = vsel %vm1897, %v4015, %v3891
      %v4032 = vsel %vm1897, %v4016, %v3300
      %v4033 = vsel %vm1897, %v4017, %v3893
      %v4034 = vsel %vm1897, %v4018, %v3895
      %v4035 = vsel %vm1897, %v4019, %v3897
      %v4036 = vsel %vm1947, %v4020, %v3316
      %v4037 = vsel %vm1947, %v4021, %v3908
      %v4038 = vsel %vm1947, %v4022, %v3318
      %v4039 = vsel %vm1947, %v4023, %v3910
      %v4040 = vsel %vm1947, %v4024, %v3320
      %v4041 = vsel %vm1947, %v4025, %v3912
      %v4042 = vsel %vm1947, %v4026, %v3322
      %v4043 = vsel %vm1947, %v4027, %v3914
      %v4044 = vsel %vm1947, %v4028, %v3324
      %v4045 = vsel %vm1947, %v4029, %v3916
      %v4046 = vsel %vm1947, %v4030, %v3326
      %v4047 = vsel %vm1947, %v4031, %v3918
      %v4048 = vsel %vm1947, %v4032, %v3328
      %v4049 = vsel %vm1947, %v4033, %v3920
      %v4050 = vsel %vm1947, %v4034, %v3922
      %v4051 = vsel %vm1947, %v4035, %v3924
      %v4052 = vsel %vm2789, %v4036, %v3344
      %v4053 = vsel %vm2789, %v4037, %v3935
      %v4054 = vsel %vm2789, %v4038, %v3346
      %v4055 = vsel %vm2789, %v4039, %v3937
      %v4056 = vsel %vm2789, %v4040, %v3348
      %v4057 = vsel %vm2789, %v4041, %v3939
      %v4058 = vsel %vm2789, %v4042, %v3350
      %v4059 = vsel %vm2789, %v4043, %v3941
      %v4060 = vsel %vm2789, %v4044, %v3352
      %v4061 = vsel %vm2789, %v4045, %v3943
      %v4062 = vsel %vm2789, %v4046, %v3354
      %v4063 = vsel %vm2789, %v4047, %v3945
      %v4064 = vsel %vm2789, %v4048, %v3356
      %v4065 = vsel %vm2789, %v4049, %v3947
      %v4066 = vsel %vm2789, %v4050, %v3949
      %v4067 = vsel %vm2789, %v4051, %v3951
      %v4084 = vrot.slane %v4052, 3
      %v4085 = vrot.slane %v4053, 3
      %v4086 = vsel %vm1489, %v4084, %v4085
      %v4087 = vrot.slane %v4054, 3
      %v4088 = vrot.slane %v4055, 3
      %v4089 = vsel %vm1489, %v4087, %v4088
      %v4090 = vrot.slane %v4056, 3
      %v4091 = vrot.slane %v4057, 3
      %v4092 = vsel %vm1489, %v4090, %v4091
      %v4093 = vrot.slane %v4058, 3
      %v4094 = vrot.slane %v4059, 3
      %v4095 = vsel %vm1489, %v4093, %v4094
      %v4096 = vrot.slane %v4060, 3
      %v4097 = vrot.slane %v4061, 3
      %v4098 = vsel %vm1489, %v4096, %v4097
      %v4099 = vrot.slane %v4062, 3
      %v4100 = vrot.slane %v4063, 3
      %v4101 = vsel %vm1489, %v4099, %v4100
      %v4102 = vrot.slane %v4064, 3
      %v4103 = vrot.slane %v4065, 3
      %v4104 = vsel %vm1489, %v4102, %v4103
      %v4105 = vrot.slane %v4066, 3
      %v4106 = vrot.slane %v4067, 3
      %v4107 = vsel %vm1489, %v4105, %v4106
      %4108 = vrot.lane.b32.xlu0 %v4086, 96
      %v4109 = vpop.permute.xlu0 %4108
      %4110 = vrot.lane.b32.xlu0 %v4089, 96
      %v4111 = vpop.permute.xlu0 %4110
      %4112 = vrot.lane.b32.xlu0 %v4092, 96
      %v4113 = vpop.permute.xlu0 %4112
      %4114 = vrot.lane.b32.xlu0 %v4095, 96
      %v4115 = vpop.permute.xlu0 %4114
      %4116 = vrot.lane.b32.xlu0 %v4098, 96
      %v4117 = vpop.permute.xlu0 %4116
      %4118 = vrot.lane.b32.xlu0 %v4101, 96
      %v4119 = vpop.permute.xlu0 %4118
      %4120 = vrot.lane.b32.xlu0 %v4104, 96
      %v4121 = vpop.permute.xlu0 %4120
      %4122 = vrot.lane.b32.xlu0 %v4107, 96
      %v4123 = vpop.permute.xlu0 %4122
      %vm4132 = vcmask 785408
      %v4133 = vsel %vm4132, %v3716, %v4109
      %v4134 = vsel %vm4132, %v3717, %v4111
      %v4135 = vsel %vm4132, %v3718, %v4113
      %v4136 = vsel %vm4132, %v3719, %v4115
      %v4137 = vsel %vm4132, %v3720, %v4117
      %v4138 = vsel %vm4132, %v3721, %v4119
      %v4139 = vsel %vm4132, %v3722, %v4121
      %v4140 = vsel %vm4132, %v3723, %v4123
      %v4141 = vld [vmem:[%s3] sm:$0xff]
      %v4142 = vld [vmem:[%s3 + $0x8] sm:$0xff]
      %v4143 = vld [vmem:[%s3 + $0x10] sm:$0xff]
      %v4144 = vld [vmem:[%s3 + $0x18] sm:$0xff]
      %v4145 = vld [vmem:[%s3 + $0x20] sm:$0xff]
      %v4146 = vld [vmem:[%s3 + $0x28] sm:$0xff]
      %v4147 = vld [vmem:[%s3 + $0x30] sm:$0xff]
      %v4148 = vld [vmem:[%s3 + $0x38] sm:$0xff]
      %v4149 = vld [vmem:[%s3 + $0x40] sm:$0xff]
      %v4150 = vld [vmem:[%s3 + $0x48] sm:$0xff]
      %v4151 = vld [vmem:[%s3 + $0x50] sm:$0xff]
      %v4152 = vld [vmem:[%s3 + $0x58] sm:$0xff]
      %v4153 = vld [vmem:[%s3 + $0x60] sm:$0xff]
      %v4154 = vld [vmem:[%s3 + $0x68] sm:$0xff]
      %v4155 = vld [vmem:[%s3 + $0x70] sm:$0xff]
      %v4156 = vld [vmem:[%s3 + $0x78] sm:$0xff]
      %v4157 = vld [vmem:[%s3 + $0x80] sm:$0xff]
      %v4158 = vld [vmem:[%s3 + $0x88] sm:$0xff]
      %v4159 = vld [vmem:[%s3 + $0x90] sm:$0x3f]
      %v4160 = vld [vmem:[%s4] sm:$0x1]
      %v4162 = vlaneseq
      %v4163 = vshrl.u32 %v4162, 7
      %v4164 = vsub.s32 0, %v4163
      %v4165 = vrot.slane %v4160, %v4164
      %vm4167 = vcmask 179200
      %v4168 = vsel %vm4167, %v4109, 0
      %v4170 = vsel %vm4167, %v4111, 0
      %v4172 = vsel %vm4167, %v4113, 0
      %v4174 = vsel %vm4167, %v4115, 0
      %v4176 = vsel %vm4167, %v4117, 0
      %v4178 = vsel %vm4167, %v4119, 0
      %v4180 = vsel %vm4167, %v4121, 0
      %v4182 = vsel %vm4167, %v4123, 0
      %v4185 = vsel %vm1048, %v4159, 0
      %4187 = vmatprep.subr.mxu0 0.0
      %4188 = vmatpush1.msra.mxu0 %v4156
      %4189 = vmatprep.subr.mxu0 0.0
      %4190 = vmatpush1.msra.mxu0 %v4155
      %4191 = vmatprep.subr.mxu0 0.0
      %4192 = vmatpush1.msra.mxu0 %v4154
      %4193 = vmatprep.subr.mxu0 0.0
      %4194 = vmatpush1.msra.mxu0 %v4153
      %4195 = vmatprep.subr.mxu0 0.0
      %4196 = vmatpush1.msra.mxu0 %v4152
      %4197 = vmatprep.subr.mxu0 0.0
      %4198 = vmatpush1.msra.mxu0 %v4151
      %4199 = vmatprep.subr.mxu0 0.0
      %4200 = vmatpush1.msra.mxu0 %v4150
      %4201 = vmatprep.subr.mxu0 0.0
      %4202 = vmatpush1.msra.mxu0 %v4149
      %4203 = vmatprep.subr.mxu0 0.0
      %4204 = vmatpush1.msra.mxu0 %v4148
      %4205 = vmatprep.subr.mxu0 0.0
      %4206 = vmatpush1.msra.mxu0 %v4147
      %4207 = vmatprep.subr.mxu0 0.0
      %4208 = vmatpush1.msra.mxu0 %v4146
      %4209 = vmatprep.subr.mxu0 0.0
      %4210 = vmatpush1.msra.mxu0 %v4145
      %4211 = vmatprep.subr.mxu0 0.0
      %4212 = vmatpush1.msra.mxu0 %v4144
      %4213 = vmatprep.subr.mxu0 0.0
      %4214 = vmatpush1.msra.mxu0 %v4143
      %4215 = vmatprep.subr.mxu0 0.0
      %4216 = vmatpush1.msra.mxu0 %v4142
      %4217 = vmatprep.subr.mxu0 0.0
      %4218 = vmatpush1.msra.mxu0 %v4141
      %4219 = vmatprep.subr.mxu0 0.0
      %4220 = vmatpush2.msra.mxu0 0.0
      %4221 = vmatprep.subr.mxu0 0.0
      %4222 = vmatpush2.msra.mxu0 0.0
      %4223 = vmatprep.subr.mxu0 0.0
      %4224 = vmatpush2.msra.mxu0 0.0
      %4225 = vmatprep.subr.mxu0 0.0
      %4226 = vmatpush2.msra.mxu0 0.0
      %4227 = vmatprep.subr.mxu0 0.0
      %4228 = vmatpush2.msra.mxu0 0.0
      %4229 = vmatprep.subr.mxu0 0.0
      %4230 = vmatpush2.msra.mxu0 0.0
      %4231 = vmatprep.subr.mxu0 0.0
      %4232 = vmatpush2.msra.mxu0 0.0
      %4233 = vmatprep.subr.mxu0 0.0
      %4234 = vmatpush2.msra.mxu0 0.0
      %4235 = vmatprep.subr.mxu0 0.0
      %4236 = vmatpush2.msra.mxu0 0.0
      %4237 = vmatprep.subr.mxu0 0.0
      %4238 = vmatpush2.msra.mxu0 0.0
      %4239 = vmatprep.subr.mxu0 0.0
      %4240 = vmatpush2.msra.mxu0 0.0
      %4241 = vmatprep.subr.mxu0 0.0
      %4242 = vmatpush2.msra.mxu0 0.0
      %4243 = vmatprep.subr.mxu0 0.0
      %4244 = vmatpush2.msra.mxu0 0.0
      %4245 = vmatprep.subr.mxu0 0.0
      %4246 = vmatpush2.msra.mxu0 %v4185
      %4247 = vmatprep.subr.mxu0 0.0
      %4248 = vmatpush2.msra.mxu0 %v4158
      %4249 = vmatprep.subr.mxu0 0.0
      %4250 = vmatpush2.msra.mxu0 %v4157
      %4251 = vmatprep.mubr.f32.mxu0 %v4168
      %4252 = vmatmul.mubr.f32.gmra.mxu0 %v4133
      %v4253 = vpop.f32.mrf.mxu0
      %v4254 = vadd.f32 %v4165, %v4253
      %v4255 = vpop.f32.mrf.mxu0
      %4256 = vmatprep.mubr.f32.mxu0 %v4170
      %4257 = vmatmul.mubr.f32.gmra.mxu0 %v4134
      %v4258 = vpop.f32.mrf.mxu0
      %v4259 = vadd.f32 %v4165, %v4258
      %v4260 = vpop.f32.mrf.mxu0
      %4261 = vmatprep.mubr.f32.mxu0 %v4172
      %4262 = vmatmul.mubr.f32.gmra.mxu0 %v4135
      %v4263 = vpop.f32.mrf.mxu0
      %v4264 = vadd.f32 %v4165, %v4263
      %v4265 = vpop.f32.mrf.mxu0
      %4266 = vmatprep.mubr.f32.mxu0 %v4174
      %4267 = vmatmul.mubr.f32.gmra.mxu0 %v4136
      %v4268 = vpop.f32.mrf.mxu0
      %v4269 = vadd.f32 %v4165, %v4268
      %v4270 = vpop.f32.mrf.mxu0
      %4271 = vmatprep.mubr.f32.mxu0 %v4176
      %4272 = vmatmul.mubr.f32.gmra.mxu0 %v4137
      %v4273 = vpop.f32.mrf.mxu0
      %v4274 = vadd.f32 %v4165, %v4273
      %v4275 = vpop.f32.mrf.mxu0
      %4276 = vmatprep.mubr.f32.mxu0 %v4178
      %4277 = vmatmul.mubr.f32.gmra.mxu0 %v4138
      %v4278 = vpop.f32.mrf.mxu0
      %v4279 = vadd.f32 %v4165, %v4278
      %v4280 = vpop.f32.mrf.mxu0
      %4281 = vmatprep.mubr.f32.mxu0 %v4180
      %4282 = vmatmul.mubr.f32.gmra.mxu0 %v4139
      %v4283 = vpop.f32.mrf.mxu0
      %v4284 = vadd.f32 %v4165, %v4283
      %v4285 = vpop.f32.mrf.mxu0
      %4286 = vmatprep.mubr.f32.mxu0 %v4182
      %4287 = vmatmul.mubr.f32.gmra.mxu0 %v4140
      %v4288 = vpop.f32.mrf.mxu0
      %v4289 = vadd.f32 %v4165, %v4288
      %v4290 = vpop.f32.mrf.mxu0
      %4291 = vdwg.mxu0
      %v4292 = vmax.f32 %v4254, 0.0
      %v4293 = vmax.f32 %v4259, 0.0
      %v4294 = vmax.f32 %v4264, 0.0
      %v4295 = vmax.f32 %v4269, 0.0
      %v4296 = vmax.f32 %v4274, 0.0
      %v4297 = vmax.f32 %v4279, 0.0
      %v4298 = vmax.f32 %v4284, 0.0
      %v4299 = vmax.f32 %v4289, 0.0
      %4301 = vrot.lane.b32.xlu0 %v4293, 16
      %v4302 = vpop.permute.xlu0 %4301
      %4305 = vrot.lane.b32.xlu0 %v4294, 32
      %v4306 = vpop.permute.xlu0 %4305
      %4309 = vrot.lane.b32.xlu0 %v4295, 48
      %v4310 = vpop.permute.xlu0 %4309
      %4313 = vrot.lane.b32.xlu0 %v4296, 64
      %v4314 = vpop.permute.xlu0 %4313
      %4317 = vrot.lane.b32.xlu0 %v4297, 80
      %v4318 = vpop.permute.xlu0 %4317
      %4321 = vrot.lane.b32.xlu0 %v4298, 96
      %v4322 = vpop.permute.xlu0 %4321
      %4325 = vrot.lane.b32.xlu0 %v4299, 112
      %v4326 = vpop.permute.xlu0 %4325
      %vm4328 = vcmask 130048
      %v4329 = vsel %vm4328, %v4292, %v4302
      %vm4330 = vcmask 261120
      %v4331 = vsel %vm4330, %v4329, %v4306
      %v4332 = vsel %vm2789, %v4331, %v4310
      %vm4333 = vcmask 523264
      %v4334 = vsel %vm4333, %v4332, %v4314
      %vm4335 = vcmask 654336
      %v4336 = vsel %vm4335, %v4334, %v4318
      %v4337 = vsel %vm4132, %v4336, %v4322
      %vm4338 = vcmask 916480
      %v4339 = vsel %vm4338, %v4337, %v4326
      %4340 = vst [vmem:[%s222] sm:$0xff] %v4339
      %p4341 = scmp.lt.s32.totalorder %s16, 1
      %s4342 = scalar_select %p4341, %s16, 1
      %s4343 = smul.addr %s4342, 8
      %s4344 = scalar_lea.vmem %s5, %s4343
      // Predicated region
      $region41: #{_neuralnet_forward_impl.1} parent=39 // pred_check
        %p4345 = pneg %p144
      $region42: #{_neuralnet_forward_impl.1} parent=39 // pred_check_branch
        %4347 = sbr.rel (%p4345) target = $region44
      $region43: #{_neuralnet_forward_impl.1} parent=39 // pred_region
        _
      $region44: #{_neuralnet_forward_impl.1} parent=39 // pred_fallthru
        _
    $region40: #{_neuralnet_forward_impl.1} parent=5 // pred_fallthru
      _
    %p4348 = scmp.le.s32.totalorder 2, %s11
    // Predicated region
    $region45: #{_neuralnet_forward_impl.1} parent=5 // pred_check
      %p4349 = pneg %p4348
    $region46: #{_neuralnet_forward_impl.1} parent=5 // pred_check_branch
      %4351 = sbr.rel (%p4349) target = $region48
    $region47: #{_neuralnet_forward_impl.1} parent=5 // pred_region
      %s4352 = ssub.s32 %s11, 2
      // Predicated region
      $region49: #{_neuralnet_forward_impl.1} parent=47 // pred_check
        %p4353 = pneg %p150
      $region50: #{_neuralnet_forward_impl.1} parent=47 // pred_check_branch
        %4355 = sbr.rel (%p4353) target = $region52
      $region51: #{_neuralnet_forward_impl.1} parent=47 // pred_region
        %p4356 = scmp.lt.s32.totalorder %s17, 1
        %s4357 = scalar_select %p4356, %s17, 1
        %s4358 = smul.addr %s4357, 8
        %s4359 = scalar_lea.vmem %s5, %s4358
      $region52: #{_neuralnet_forward_impl.1} parent=47 // pred_fallthru
        _
    $region48: #{_neuralnet_forward_impl.1} parent=5 // pred_fallthru
      _
  $region6: #{_neuralnet_forward_impl.1} parent=0 // loop_footer
    %s15 = sadd.s32 1, %s11
  $region7: #{_neuralnet_forward_impl.1} parent=0 // loop_footer_branch
    %10 = sbr.rel target = $region3
  $region8: #{_neuralnet_forward_impl.1} parent=0 // loop_exit
    _

</llo_original>
